<compile_context>
chip_gen: v5e
topology: v5e:2x2
jax: 0.10.0
libtpu: 0.0.40
codegen_flags: <defaults>
</compile_context>

<pallas_src>
import jax
import jax.numpy as jnp
from jax.experimental import pallas as pl
from jax.experimental.pallas import tpu as pltpu

# Small, module-consistent shapes (vocab=10000, w_dim=h_dim=650 in the original).
VOCAB = 256
W_DIM = 32
H_DIM = 32
BATCH = 2
SEQ = 9          # sentence length; T = SEQ - 1 = 8 LSTM steps

LANE = 128       # lane width; gate blocks / hidden dim padded to this
SUB = 8          # f32 sublanes; batch padded to this


def _round_up(x, m):
    return ((x + m - 1) // m) * m


# ---------------------------------------------------------------------------
# Kernel 1: 2-layer LSTM. Single grid step; time recurrence is an unrolled
# fori_loop inside the kernel. Per layer: one fused matmul
#   gates = concat([x_t, h_prev]) @ [Wih; Whh] + b, gate slices 128-aligned.
# ---------------------------------------------------------------------------
def _lstm_kernel(x_ref, w1_ref, b1_ref, w2_ref, b2_ref, h_out_ref):
    T, BP, _ = x_ref.shape
    HP = h_out_ref.shape[-1]

    w1, b1 = w1_ref[...], b1_ref[...]
    w2, b2 = w2_ref[...], b2_ref[...]

    def cell(xh, c, w, b):
        gates = jnp.dot(xh, w, preferred_element_type=jnp.float32) + b
        i = jax.nn.sigmoid(gates[:, 0 * HP:1 * HP])
        f = jax.nn.sigmoid(gates[:, 1 * HP:2 * HP])
        g = jnp.tanh(gates[:, 2 * HP:3 * HP])
        o = jax.nn.sigmoid(gates[:, 3 * HP:4 * HP])
        c_new = f * c + i * g
        return o * jnp.tanh(c_new), c_new

    def step(t, carry):
        h1, c1, h2, c2 = carry
        h1, c1 = cell(jnp.concatenate([x_ref[t], h1], axis=-1), c1, w1, b1)
        # inter-layer dropout is identity in eval mode
        h2, c2 = cell(jnp.concatenate([h1, h2], axis=-1), c2, w2, b2)
        h_out_ref[t] = h2
        return h1, c1, h2, c2

    z = jnp.zeros((BP, HP), jnp.float32)
    jax.lax.fori_loop(0, T, step, (z, z, z, z), unroll=True)


def lstm_forward(x_tbw, w1, b1, w2, b2):
    T, BP, WP = x_tbw.shape
    HP = w2.shape[0] // 2

    def full(shape):
        n = len(shape)
        return pl.BlockSpec(shape, lambda i, _n=n: (0,) * _n)

    return pl.pallas_call(
        _lstm_kernel,
        out_shape=jax.ShapeDtypeStruct((T, BP, HP), jnp.float32),
        grid_spec=pltpu.PrefetchScalarGridSpec(
            num_scalar_prefetch=0,
            grid=(1,),
            in_specs=[
                full((T, BP, WP)),
                full(w1.shape), full(b1.shape),
                full(w2.shape), full(b2.shape),
            ],
            out_specs=full((T, BP, HP)),
        ),
        compiler_params=pltpu.CompilerParams(
            dimension_semantics=("arbitrary",)),
    )(x_tbw, w1, b1, w2, b2)


# ---------------------------------------------------------------------------
# Kernel 2: tied-weight vocab projection + log_softmax + target gather.
# Rows = flattened (T * B_padded) hidden states; grid = (row_tiles, vocab_tiles)
# with online logsumexp across vocab tiles and in-kernel target gather via
# iota==tgt mask. ll_row = logit[tgt] - logsumexp(logits).
# ---------------------------------------------------------------------------
def _ll_kernel(h_ref, e_ref, bv_ref, tgt_ref, ll_ref, m_sc, l_sc, t_sc):
    j = pl.program_id(1)
    TV = e_ref.shape[0]

    @pl.when(j == 0)
    def _():
        m_sc[...] = jnp.full_like(m_sc, -1e30)
        l_sc[...] = jnp.zeros_like(l_sc)
        t_sc[...] = jnp.zeros_like(t_sc)

    # (TR, HP) x (TV, HP) -> (TR, TV), contracting on dim 1 (no E^T materialized)
    logits = jax.lax.dot_general(
        h_ref[...], e_ref[...],
        dimension_numbers=(((1,), (1,)), ((), ())),
        preferred_element_type=jnp.float32) + bv_ref[...]

    m_prev = m_sc[...]
    m_new = jnp.maximum(m_prev, jnp.max(logits, axis=-1, keepdims=True))
    l_sc[...] = (jnp.exp(m_prev - m_new) * l_sc[...]
                 + jnp.sum(jnp.exp(logits - m_new), axis=-1, keepdims=True))
    m_sc[...] = m_new

    # target logit gather for ids inside this vocab tile
    vocab_id = jax.lax.broadcasted_iota(jnp.int32, logits.shape, 1) + j * TV
    hit = vocab_id == tgt_ref[...]
    t_sc[...] += jnp.sum(jnp.where(hit, logits, 0.0), axis=-1, keepdims=True)

    @pl.when(j == pl.num_programs(1) - 1)
    def _():
        ll_ref[...] = t_sc[...] - (m_sc[...] + jnp.log(l_sc[...]))


def ll_forward(h_rows, e_p, bv_p, tgt_rows, *, tr, tv):
    RP, HP = h_rows.shape
    VP = e_p.shape[0]
    return pl.pallas_call(
        _ll_kernel,
        out_shape=jax.ShapeDtypeStruct((RP, 1), jnp.float32),
        grid_spec=pltpu.PrefetchScalarGridSpec(
            num_scalar_prefetch=0,
            grid=(RP // tr, VP // tv),
            in_specs=[
                pl.BlockSpec((tr, HP), lambda i, j: (i, 0)),
                pl.BlockSpec((tv, HP), lambda i, j: (j, 0)),
                pl.BlockSpec((1, tv), lambda i, j: (0, j)),
                pl.BlockSpec((tr, 1), lambda i, j: (i, 0)),
            ],
            out_specs=pl.BlockSpec((tr, 1), lambda i, j: (i, 0)),
            scratch_shapes=[pltpu.VMEM((tr, 1), jnp.float32)] * 3,
        ),
        compiler_params=pltpu.CompilerParams(
            dimension_semantics=("parallel", "arbitrary")),
    )(h_rows, e_p, bv_p, tgt_rows)


# ---------------------------------------------------------------------------
# Parameter preparation (trace-time glue): pad gate blocks / hidden width to
# 128 lanes, fuse [Wih; Whh], pad vocab rows (pad bias = -1e30 so padded rows
# never win the logsumexp).
# ---------------------------------------------------------------------------
def _pad_gate_cols(w, h, hp):
    parts = []
    for k in range(4):
        blk = w[:, k * h:(k + 1) * h]
        parts.append(jnp.pad(blk, ((0, 0), (0, hp - h))))
    return jnp.concatenate(parts, axis=1)


def prepare_params(p, tv=LANE):
    e, bv = p["emb"], p["bv"]
    v, w = e.shape
    h = p["whh1"].shape[0]
    assert w == h, "tied embedding/output weights require w_dim == h_dim"
    wp, hp = _round_up(w, LANE), _round_up(h, LANE)
    vp = _round_up(v, tv)

    e_p = jnp.pad(e, ((0, vp - v), (0, hp - w)))                       # (VP, HP)
    bv_p = jnp.concatenate(
        [bv, jnp.full((vp - v,), -1e30, bv.dtype)])[None, :]           # (1, VP)

    w1 = jnp.concatenate([
        jnp.pad(_pad_gate_cols(p["wih1"], h, hp), ((0, wp - w), (0, 0))),
        jnp.pad(_pad_gate_cols(p["whh1"], h, hp), ((0, hp - h), (0, 0)))],
        axis=0)                                                        # (WP+HP, 4HP)
    w2 = jnp.concatenate([
        jnp.pad(_pad_gate_cols(p["wih2"], h, hp), ((0, hp - h), (0, 0))),
        jnp.pad(_pad_gate_cols(p["whh2"], h, hp), ((0, hp - h), (0, 0)))],
        axis=0)                                                        # (2HP, 4HP)
    b1 = _pad_gate_cols(p["b1"], h, hp)                                # (1, 4HP)
    b2 = _pad_gate_cols(p["b2"], h, hp)
    return dict(e_p=e_p, bv_p=bv_p, w1=w1, b1=b1, w2=w2, b2=b2, hp=hp)


# ---------------------------------------------------------------------------
# Wrapper = RNNLM.forward (eval mode)
# ---------------------------------------------------------------------------
def rnnlm_forward(sent, params, *, tr=64, tv=LANE):
    prep = prepare_params(params, tv)
    hp = prep["hp"]
    b, s = sent.shape
    t = s - 1
    bp = max(SUB, _round_up(b, SUB))

    # embedding lookup (glue), time-major, batch padded to 8 sublanes
    x = jnp.take(prep["e_p"], sent[:, :-1], axis=0)       # (B, T, HP)
    x = jnp.transpose(x, (1, 0, 2))                       # (T, B, HP)
    x = jnp.pad(x, ((0, 0), (0, bp - b), (0, 0)))         # (T, BP, HP)

    h = lstm_forward(x, prep["w1"], prep["b1"], prep["w2"], prep["b2"])  # (T,BP,HP)

    # batched tied projection over all T*BP rows
    r = t * bp
    rp = _round_up(r, tr)
    h_rows = jnp.pad(h.reshape(r, hp), ((0, rp - r), (0, 0)))
    tgt = jnp.pad(jnp.transpose(sent[:, 1:]), ((0, 0), (0, bp - b)))     # (T, BP)
    tgt_rows = jnp.pad(tgt.reshape(r, 1), ((0, rp - r), (0, 0))).astype(jnp.int32)

    ll_rows = ll_forward(h_rows, prep["e_p"], prep["bv_p"], tgt_rows,
                         tr=tr, tv=tv)                                   # (RP, 1)
    ll_tb = ll_rows[:r, 0].reshape(t, bp)[:, :b]                         # (T, B)
    return ll_tb.sum(0)                                                  # (B,)


# ---------------------------------------------------------------------------
# Pure-JAX reference (for correctness check)
# ---------------------------------------------------------------------------
def _lstm_layer_ref(x_btw, wih, whh, bias):
    b = x_btw.shape[0]
    h_dim = whh.shape[0]

    def step(carry, x_t):
        h, c = carry
        gates = x_t @ wih + h @ whh + bias
        i = jax.nn.sigmoid(gates[:, 0 * h_dim:1 * h_dim])
        f = jax.nn.sigmoid(gates[:, 1 * h_dim:2 * h_dim])
        g = jnp.tanh(gates[:, 2 * h_dim:3 * h_dim])
        o = jax.nn.sigmoid(gates[:, 3 * h_dim:4 * h_dim])
        c = f * c + i * g
        h = o * jnp.tanh(c)
        return (h, c), h

    init = (jnp.zeros((b, h_dim)), jnp.zeros((b, h_dim)))
    _, hs = jax.lax.scan(step, init, jnp.transpose(x_btw, (1, 0, 2)))
    return jnp.transpose(hs, (1, 0, 2))


def rnnlm_forward_ref(sent, p):
    emb = jnp.take(p["emb"], sent[:, :-1], axis=0)
    h1 = _lstm_layer_ref(emb, p["wih1"], p["whh1"], p["b1"][0])
    h2 = _lstm_layer_ref(h1, p["wih2"], p["whh2"], p["b2"][0])
    logits = h2 @ p["emb"].T + p["bv"]
    logp = jax.nn.log_softmax(logits, axis=2)
    ll = jnp.take_along_axis(logp, sent[:, 1:, None], axis=2)[:, :, 0]
    return ll.sum(1)


if __name__ == "__main__":
    key = jax.random.PRNGKey(0)
    ks = jax.random.split(key, 12)
    s = 0.1
    params = {
        "emb":  jax.random.normal(ks[0], (VOCAB, W_DIM), jnp.float32) * s,
        "bv":   jax.random.normal(ks[1], (VOCAB,), jnp.float32) * s,
        # layer 1 (input W_DIM -> H_DIM), weights stored transposed, biases fused
        "wih1": jax.random.normal(ks[2], (W_DIM, 4 * H_DIM), jnp.float32) * s,
        "whh1": jax.random.normal(ks[3], (H_DIM, 4 * H_DIM), jnp.float32) * s,
        "b1":   jax.random.normal(ks[4], (1, 4 * H_DIM), jnp.float32) * s,
        # layer 2 (input H_DIM -> H_DIM)
        "wih2": jax.random.normal(ks[5], (H_DIM, 4 * H_DIM), jnp.float32) * s,
        "whh2": jax.random.normal(ks[6], (H_DIM, 4 * H_DIM), jnp.float32) * s,
        "b2":   jax.random.normal(ks[7], (1, 4 * H_DIM), jnp.float32) * s,
    }
    sent = jax.random.randint(ks[8], (BATCH, SEQ), 0, VOCAB, dtype=jnp.int32)

    out = jax.block_until_ready(rnnlm_forward(sent, params))
    ref = jax.block_until_ready(rnnlm_forward_ref(sent, params))
    assert out.shape == (BATCH,)
    assert jnp.allclose(out, ref, rtol=1e-4, atol=5e-4), (out, ref)
    print("KERNEL_OK")
</pallas_src>

<mosaic_0001>
module attributes {stable_mosaic.version = 11 : i64} {
  func.func @_lstm_kernel(%arg0: i32, %arg1: memref<8x8x128xf32, #tpu.memory_space<vmem>>, %arg2: memref<256x512xf32, #tpu.memory_space<vmem>>, %arg3: memref<1x512xf32, #tpu.memory_space<vmem>>, %arg4: memref<256x512xf32, #tpu.memory_space<vmem>>, %arg5: memref<1x512xf32, #tpu.memory_space<vmem>>, %arg6: memref<8x8x128xf32, #tpu.memory_space<vmem>>) attributes {dimension_semantics = [#tpu.dimension_semantics<arbitrary>], iteration_bounds = array<i64: 1>, scalar_prefetch = 0 : i64, scratch_operands = 0 : i64, tpu.core_type = #tpu.core_type<tc>, window_params = [{pipeline_mode = #tpu.pipeline_mode<synchronous>, transform_indices = @transform_0, window_bounds = array<i64: 8, 8, 128>}, {pipeline_mode = #tpu.pipeline_mode<synchronous>, transform_indices = @transform_1, window_bounds = array<i64: 256, 512>}, {pipeline_mode = #tpu.pipeline_mode<synchronous>, transform_indices = @transform_2, window_bounds = array<i64: 1, 512>}, {pipeline_mode = #tpu.pipeline_mode<synchronous>, transform_indices = @transform_3, window_bounds = array<i64: 256, 512>}, {pipeline_mode = #tpu.pipeline_mode<synchronous>, transform_indices = @transform_4, window_bounds = array<i64: 1, 512>}, {pipeline_mode = #tpu.pipeline_mode<synchronous>, transform_indices = @transform_5, window_bounds = array<i64: 8, 8, 128>}]} {
    %c0 = arith.constant 0 : index
    %c0_0 = arith.constant 0 : index
    %0 = vector.load %arg2[%c0, %c0_0] : memref<256x512xf32, #tpu.memory_space<vmem>>, vector<256x512xf32>
    %c0_1 = arith.constant 0 : index
    %c0_2 = arith.constant 0 : index
    %1 = vector.load %arg3[%c0_1, %c0_2] : memref<1x512xf32, #tpu.memory_space<vmem>>, vector<1x512xf32>
    %c0_3 = arith.constant 0 : index
    %c0_4 = arith.constant 0 : index
    %2 = vector.load %arg4[%c0_3, %c0_4] : memref<256x512xf32, #tpu.memory_space<vmem>>, vector<256x512xf32>
    %c0_5 = arith.constant 0 : index
    %c0_6 = arith.constant 0 : index
    %3 = vector.load %arg5[%c0_5, %c0_6] : memref<1x512xf32, #tpu.memory_space<vmem>>, vector<1x512xf32>
    %cst = arith.constant 0.000000e+00 : f32
    %4 = vector.broadcast %cst : f32 to vector<8x128xf32>
    %c0_i32 = arith.constant 0 : i32
    %5 = arith.index_cast %c0_i32 : i32 to index
    %c0_7 = arith.constant 0 : index
    %c0_8 = arith.constant 0 : index
    %6 = vector.load %arg1[%5, %c0_7, %c0_8] : memref<8x8x128xf32, #tpu.memory_space<vmem>>, vector<1x8x128xf32>
    %7 = vector.shape_cast %6 : vector<1x8x128xf32> to vector<8x128xf32>
    %8 = tpu.concatenate %7, %4 in 1 : vector<8x128xf32>, vector<8x128xf32> -> vector<8x256xf32>
    %cst_9 = arith.constant dense<0.000000e+00> : vector<8x512xf32>
    %9 = tpu.matmul %8, %0, %cst_9 {dimension_numbers = #tpu.dot_dimension_numbers<[1], [0], [0], [1], [0, 0, 1, 1], [], []>} : vector<8x256xf32>, vector<256x512xf32>, vector<8x512xf32> -> vector<8x512xf32>
    %10 = vector.broadcast %1 : vector<1x512xf32> to vector<8x512xf32>
    %11 = arith.addf %9, %10 : vector<8x512xf32>
    %12 = vector.extract_strided_slice %11 {offsets = [0, 0], sizes = [8, 128], strides = [1, 1]} : vector<8x512xf32> to vector<8x128xf32>
    %13 = arith.negf %12 : vector<8x128xf32>
    %14 = math.exp %13 : vector<8x128xf32>
    %cst_10 = arith.constant 1.000000e+00 : f32
    %15 = vector.broadcast %cst_10 : f32 to vector<8x128xf32>
    %16 = arith.addf %15, %14 : vector<8x128xf32>
    %17 = arith.divf %15, %16 : vector<8x128xf32>
    %18 = vector.extract_strided_slice %11 {offsets = [0, 128], sizes = [8, 128], strides = [1, 1]} : vector<8x512xf32> to vector<8x128xf32>
    %19 = arith.negf %18 : vector<8x128xf32>
    %20 = math.exp %19 : vector<8x128xf32>
    %cst_11 = arith.constant 1.000000e+00 : f32
    %21 = vector.broadcast %cst_11 : f32 to vector<8x128xf32>
    %22 = arith.addf %21, %20 : vector<8x128xf32>
    %23 = arith.divf %21, %22 : vector<8x128xf32>
    %24 = vector.extract_strided_slice %11 {offsets = [0, 256], sizes = [8, 128], strides = [1, 1]} : vector<8x512xf32> to vector<8x128xf32>
    %25 = math.tanh %24 : vector<8x128xf32>
    %26 = vector.extract_strided_slice %11 {offsets = [0, 384], sizes = [8, 128], strides = [1, 1]} : vector<8x512xf32> to vector<8x128xf32>
    %27 = arith.negf %26 : vector<8x128xf32>
    %28 = math.exp %27 : vector<8x128xf32>
    %cst_12 = arith.constant 1.000000e+00 : f32
    %29 = vector.broadcast %cst_12 : f32 to vector<8x128xf32>
    %30 = arith.addf %29, %28 : vector<8x128xf32>
    %31 = arith.divf %29, %30 : vector<8x128xf32>
    %32 = arith.mulf %23, %4 : vector<8x128xf32>
    %33 = arith.mulf %17, %25 : vector<8x128xf32>
    %34 = arith.addf %32, %33 : vector<8x128xf32>
    %35 = math.tanh %34 : vector<8x128xf32>
    %36 = arith.mulf %31, %35 : vector<8x128xf32>
    %37 = tpu.concatenate %36, %4 in 1 : vector<8x128xf32>, vector<8x128xf32> -> vector<8x256xf32>
    %cst_13 = arith.constant dense<0.000000e+00> : vector<8x512xf32>
    %38 = tpu.matmul %37, %2, %cst_13 {dimension_numbers = #tpu.dot_dimension_numbers<[1], [0], [0], [1], [0, 0, 1, 1], [], []>} : vector<8x256xf32>, vector<256x512xf32>, vector<8x512xf32> -> vector<8x512xf32>
    %39 = vector.broadcast %3 : vector<1x512xf32> to vector<8x512xf32>
    %40 = arith.addf %38, %39 : vector<8x512xf32>
    %41 = vector.extract_strided_slice %40 {offsets = [0, 0], sizes = [8, 128], strides = [1, 1]} : vector<8x512xf32> to vector<8x128xf32>
    %42 = arith.negf %41 : vector<8x128xf32>
    %43 = math.exp %42 : vector<8x128xf32>
    %cst_14 = arith.constant 1.000000e+00 : f32
    %44 = vector.broadcast %cst_14 : f32 to vector<8x128xf32>
    %45 = arith.addf %44, %43 : vector<8x128xf32>
    %46 = arith.divf %44, %45 : vector<8x128xf32>
    %47 = vector.extract_strided_slice %40 {offsets = [0, 128], sizes = [8, 128], strides = [1, 1]} : vector<8x512xf32> to vector<8x128xf32>
    %48 = arith.negf %47 : vector<8x128xf32>
    %49 = math.exp %48 : vector<8x128xf32>
    %cst_15 = arith.constant 1.000000e+00 : f32
    %50 = vector.broadcast %cst_15 : f32 to vector<8x128xf32>
    %51 = arith.addf %50, %49 : vector<8x128xf32>
    %52 = arith.divf %50, %51 : vector<8x128xf32>
    %53 = vector.extract_strided_slice %40 {offsets = [0, 256], sizes = [8, 128], strides = [1, 1]} : vector<8x512xf32> to vector<8x128xf32>
    %54 = math.tanh %53 : vector<8x128xf32>
    %55 = vector.extract_strided_slice %40 {offsets = [0, 384], sizes = [8, 128], strides = [1, 1]} : vector<8x512xf32> to vector<8x128xf32>
    %56 = arith.negf %55 : vector<8x128xf32>
    %57 = math.exp %56 : vector<8x128xf32>
    %cst_16 = arith.constant 1.000000e+00 : f32
    %58 = vector.broadcast %cst_16 : f32 to vector<8x128xf32>
    %59 = arith.addf %58, %57 : vector<8x128xf32>
    %60 = arith.divf %58, %59 : vector<8x128xf32>
    %61 = arith.mulf %52, %4 : vector<8x128xf32>
    %62 = arith.mulf %46, %54 : vector<8x128xf32>
    %63 = arith.addf %61, %62 : vector<8x128xf32>
    %64 = math.tanh %63 : vector<8x128xf32>
    %65 = arith.mulf %60, %64 : vector<8x128xf32>
    %66 = arith.index_cast %c0_i32 : i32 to index
    %c0_17 = arith.constant 0 : index
    %c0_18 = arith.constant 0 : index
    %67 = vector.load %arg6[%66, %c0_17, %c0_18] : memref<8x8x128xf32, #tpu.memory_space<vmem>>, vector<1x8x128xf32>
    %68 = vector.shape_cast %67 : vector<1x8x128xf32> to vector<8x128xf32>
    %69 = vector.shape_cast %65 : vector<8x128xf32> to vector<1x8x128xf32>
    tpu.vector_store %arg6[%66, %c0_17, %c0_18], %69 {strides = array<i32>} : memref<8x8x128xf32, #tpu.memory_space<vmem>>, vector<1x8x128xf32>,
    %c1_i32 = arith.constant 1 : i32
    %70 = arith.index_cast %c1_i32 : i32 to index
    %c0_19 = arith.constant 0 : index
    %c0_20 = arith.constant 0 : index
    %71 = vector.load %arg1[%70, %c0_19, %c0_20] : memref<8x8x128xf32, #tpu.memory_space<vmem>>, vector<1x8x128xf32>
    %72 = vector.shape_cast %71 : vector<1x8x128xf32> to vector<8x128xf32>
    %73 = tpu.concatenate %72, %36 in 1 : vector<8x128xf32>, vector<8x128xf32> -> vector<8x256xf32>
    %cst_21 = arith.constant dense<0.000000e+00> : vector<8x512xf32>
    %74 = tpu.matmul %73, %0, %cst_21 {dimension_numbers = #tpu.dot_dimension_numbers<[1], [0], [0], [1], [0, 0, 1, 1], [], []>} : vector<8x256xf32>, vector<256x512xf32>, vector<8x512xf32> -> vector<8x512xf32>
    %75 = vector.broadcast %1 : vector<1x512xf32> to vector<8x512xf32>
    %76 = arith.addf %74, %75 : vector<8x512xf32>
    %77 = vector.extract_strided_slice %76 {offsets = [0, 0], sizes = [8, 128], strides = [1, 1]} : vector<8x512xf32> to vector<8x128xf32>
    %78 = arith.negf %77 : vector<8x128xf32>
    %79 = math.exp %78 : vector<8x128xf32>
    %cst_22 = arith.constant 1.000000e+00 : f32
    %80 = vector.broadcast %cst_22 : f32 to vector<8x128xf32>
    %81 = arith.addf %80, %79 : vector<8x128xf32>
    %82 = arith.divf %80, %81 : vector<8x128xf32>
    %83 = vector.extract_strided_slice %76 {offsets = [0, 128], sizes = [8, 128], strides = [1, 1]} : vector<8x512xf32> to vector<8x128xf32>
    %84 = arith.negf %83 : vector<8x128xf32>
    %85 = math.exp %84 : vector<8x128xf32>
    %cst_23 = arith.constant 1.000000e+00 : f32
    %86 = vector.broadcast %cst_23 : f32 to vector<8x128xf32>
    %87 = arith.addf %86, %85 : vector<8x128xf32>
    %88 = arith.divf %86, %87 : vector<8x128xf32>
    %89 = vector.extract_strided_slice %76 {offsets = [0, 256], sizes = [8, 128], strides = [1, 1]} : vector<8x512xf32> to vector<8x128xf32>
    %90 = math.tanh %89 : vector<8x128xf32>
    %91 = vector.extract_strided_slice %76 {offsets = [0, 384], sizes = [8, 128], strides = [1, 1]} : vector<8x512xf32> to vector<8x128xf32>
    %92 = arith.negf %91 : vector<8x128xf32>
    %93 = math.exp %92 : vector<8x128xf32>
    %cst_24 = arith.constant 1.000000e+00 : f32
    %94 = vector.broadcast %cst_24 : f32 to vector<8x128xf32>
    %95 = arith.addf %94, %93 : vector<8x128xf32>
    %96 = arith.divf %94, %95 : vector<8x128xf32>
    %97 = arith.mulf %88, %34 : vector<8x128xf32>
    %98 = arith.mulf %82, %90 : vector<8x128xf32>
    %99 = arith.addf %97, %98 : vector<8x128xf32>
    %100 = math.tanh %99 : vector<8x128xf32>
    %101 = arith.mulf %96, %100 : vector<8x128xf32>
    %102 = tpu.concatenate %101, %65 in 1 : vector<8x128xf32>, vector<8x128xf32> -> vector<8x256xf32>
    %cst_25 = arith.constant dense<0.000000e+00> : vector<8x512xf32>
    %103 = tpu.matmul %102, %2, %cst_25 {dimension_numbers = #tpu.dot_dimension_numbers<[1], [0], [0], [1], [0, 0, 1, 1], [], []>} : vector<8x256xf32>, vector<256x512xf32>, vector<8x512xf32> -> vector<8x512xf32>
    %104 = vector.broadcast %3 : vector<1x512xf32> to vector<8x512xf32>
    %105 = arith.addf %103, %104 : vector<8x512xf32>
    %106 = vector.extract_strided_slice %105 {offsets = [0, 0], sizes = [8, 128], strides = [1, 1]} : vector<8x512xf32> to vector<8x128xf32>
    %107 = arith.negf %106 : vector<8x128xf32>
    %108 = math.exp %107 : vector<8x128xf32>
    %cst_26 = arith.constant 1.000000e+00 : f32
    %109 = vector.broadcast %cst_26 : f32 to vector<8x128xf32>
    %110 = arith.addf %109, %108 : vector<8x128xf32>
    %111 = arith.divf %109, %110 : vector<8x128xf32>
    %112 = vector.extract_strided_slice %105 {offsets = [0, 128], sizes = [8, 128], strides = [1, 1]} : vector<8x512xf32> to vector<8x128xf32>
    %113 = arith.negf %112 : vector<8x128xf32>
    %114 = math.exp %113 : vector<8x128xf32>
    %cst_27 = arith.constant 1.000000e+00 : f32
    %115 = vector.broadcast %cst_27 : f32 to vector<8x128xf32>
    %116 = arith.addf %115, %114 : vector<8x128xf32>
    %117 = arith.divf %115, %116 : vector<8x128xf32>
    %118 = vector.extract_strided_slice %105 {offsets = [0, 256], sizes = [8, 128], strides = [1, 1]} : vector<8x512xf32> to vector<8x128xf32>
    %119 = math.tanh %118 : vector<8x128xf32>
    %120 = vector.extract_strided_slice %105 {offsets = [0, 384], sizes = [8, 128], strides = [1, 1]} : vector<8x512xf32> to vector<8x128xf32>
    %121 = arith.negf %120 : vector<8x128xf32>
    %122 = math.exp %121 : vector<8x128xf32>
    %cst_28 = arith.constant 1.000000e+00 : f32
    %123 = vector.broadcast %cst_28 : f32 to vector<8x128xf32>
    %124 = arith.addf %123, %122 : vector<8x128xf32>
    %125 = arith.divf %123, %124 : vector<8x128xf32>
    %126 = arith.mulf %117, %63 : vector<8x128xf32>
    %127 = arith.mulf %111, %119 : vector<8x128xf32>
    %128 = arith.addf %126, %127 : vector<8x128xf32>
    %129 = math.tanh %128 : vector<8x128xf32>
    %130 = arith.mulf %125, %129 : vector<8x128xf32>
    %131 = arith.index_cast %c1_i32 : i32 to index
    %c0_29 = arith.constant 0 : index
    %c0_30 = arith.constant 0 : index
    %132 = vector.load %arg6[%131, %c0_29, %c0_30] : memref<8x8x128xf32, #tpu.memory_space<vmem>>, vector<1x8x128xf32>
    %133 = vector.shape_cast %132 : vector<1x8x128xf32> to vector<8x128xf32>
    %134 = vector.shape_cast %130 : vector<8x128xf32> to vector<1x8x128xf32>
    tpu.vector_store %arg6[%131, %c0_29, %c0_30], %134 {strides = array<i32>} : memref<8x8x128xf32, #tpu.memory_space<vmem>>, vector<1x8x128xf32>,
    %c2_i32 = arith.constant 2 : i32
    %135 = arith.index_cast %c2_i32 : i32 to index
    %c0_31 = arith.constant 0 : index
    %c0_32 = arith.constant 0 : index
    %136 = vector.load %arg1[%135, %c0_31, %c0_32] : memref<8x8x128xf32, #tpu.memory_space<vmem>>, vector<1x8x128xf32>
    %137 = vector.shape_cast %136 : vector<1x8x128xf32> to vector<8x128xf32>
    %138 = tpu.concatenate %137, %101 in 1 : vector<8x128xf32>, vector<8x128xf32> -> vector<8x256xf32>
    %cst_33 = arith.constant dense<0.000000e+00> : vector<8x512xf32>
    %139 = tpu.matmul %138, %0, %cst_33 {dimension_numbers = #tpu.dot_dimension_numbers<[1], [0], [0], [1], [0, 0, 1, 1], [], []>} : vector<8x256xf32>, vector<256x512xf32>, vector<8x512xf32> -> vector<8x512xf32>
    %140 = vector.broadcast %1 : vector<1x512xf32> to vector<8x512xf32>
    %141 = arith.addf %139, %140 : vector<8x512xf32>
    %142 = vector.extract_strided_slice %141 {offsets = [0, 0], sizes = [8, 128], strides = [1, 1]} : vector<8x512xf32> to vector<8x128xf32>
    %143 = arith.negf %142 : vector<8x128xf32>
    %144 = math.exp %143 : vector<8x128xf32>
    %cst_34 = arith.constant 1.000000e+00 : f32
    %145 = vector.broadcast %cst_34 : f32 to vector<8x128xf32>
    %146 = arith.addf %145, %144 : vector<8x128xf32>
    %147 = arith.divf %145, %146 : vector<8x128xf32>
    %148 = vector.extract_strided_slice %141 {offsets = [0, 128], sizes = [8, 128], strides = [1, 1]} : vector<8x512xf32> to vector<8x128xf32>
    %149 = arith.negf %148 : vector<8x128xf32>
    %150 = math.exp %149 : vector<8x128xf32>
    %cst_35 = arith.constant 1.000000e+00 : f32
    %151 = vector.broadcast %cst_35 : f32 to vector<8x128xf32>
    %152 = arith.addf %151, %150 : vector<8x128xf32>
    %153 = arith.divf %151, %152 : vector<8x128xf32>
    %154 = vector.extract_strided_slice %141 {offsets = [0, 256], sizes = [8, 128], strides = [1, 1]} : vector<8x512xf32> to vector<8x128xf32>
    %155 = math.tanh %154 : vector<8x128xf32>
    %156 = vector.extract_strided_slice %141 {offsets = [0, 384], sizes = [8, 128], strides = [1, 1]} : vector<8x512xf32> to vector<8x128xf32>
    %157 = arith.negf %156 : vector<8x128xf32>
    %158 = math.exp %157 : vector<8x128xf32>
    %cst_36 = arith.constant 1.000000e+00 : f32
    %159 = vector.broadcast %cst_36 : f32 to vector<8x128xf32>
    %160 = arith.addf %159, %158 : vector<8x128xf32>
    %161 = arith.divf %159, %160 : vector<8x128xf32>
    %162 = arith.mulf %153, %99 : vector<8x128xf32>
    %163 = arith.mulf %147, %155 : vector<8x128xf32>
    %164 = arith.addf %162, %163 : vector<8x128xf32>
    %165 = math.tanh %164 : vector<8x128xf32>
    %166 = arith.mulf %161, %165 : vector<8x128xf32>
    %167 = tpu.concatenate %166, %130 in 1 : vector<8x128xf32>, vector<8x128xf32> -> vector<8x256xf32>
    %cst_37 = arith.constant dense<0.000000e+00> : vector<8x512xf32>
    %168 = tpu.matmul %167, %2, %cst_37 {dimension_numbers = #tpu.dot_dimension_numbers<[1], [0], [0], [1], [0, 0, 1, 1], [], []>} : vector<8x256xf32>, vector<256x512xf32>, vector<8x512xf32> -> vector<8x512xf32>
    %169 = vector.broadcast %3 : vector<1x512xf32> to vector<8x512xf32>
    %170 = arith.addf %168, %169 : vector<8x512xf32>
    %171 = vector.extract_strided_slice %170 {offsets = [0, 0], sizes = [8, 128], strides = [1, 1]} : vector<8x512xf32> to vector<8x128xf32>
    %172 = arith.negf %171 : vector<8x128xf32>
    %173 = math.exp %172 : vector<8x128xf32>
    %cst_38 = arith.constant 1.000000e+00 : f32
    %174 = vector.broadcast %cst_38 : f32 to vector<8x128xf32>
    %175 = arith.addf %174, %173 : vector<8x128xf32>
    %176 = arith.divf %174, %175 : vector<8x128xf32>
    %177 = vector.extract_strided_slice %170 {offsets = [0, 128], sizes = [8, 128], strides = [1, 1]} : vector<8x512xf32> to vector<8x128xf32>
    %178 = arith.negf %177 : vector<8x128xf32>
    %179 = math.exp %178 : vector<8x128xf32>
    %cst_39 = arith.constant 1.000000e+00 : f32
    %180 = vector.broadcast %cst_39 : f32 to vector<8x128xf32>
    %181 = arith.addf %180, %179 : vector<8x128xf32>
    %182 = arith.divf %180, %181 : vector<8x128xf32>
    %183 = vector.extract_strided_slice %170 {offsets = [0, 256], sizes = [8, 128], strides = [1, 1]} : vector<8x512xf32> to vector<8x128xf32>
    %184 = math.tanh %183 : vector<8x128xf32>
    %185 = vector.extract_strided_slice %170 {offsets = [0, 384], sizes = [8, 128], strides = [1, 1]} : vector<8x512xf32> to vector<8x128xf32>
    %186 = arith.negf %185 : vector<8x128xf32>
    %187 = math.exp %186 : vector<8x128xf32>
    %cst_40 = arith.constant 1.000000e+00 : f32
    %188 = vector.broadcast %cst_40 : f32 to vector<8x128xf32>
    %189 = arith.addf %188, %187 : vector<8x128xf32>
    %190 = arith.divf %188, %189 : vector<8x128xf32>
    %191 = arith.mulf %182, %128 : vector<8x128xf32>
    %192 = arith.mulf %176, %184 : vector<8x128xf32>
    %193 = arith.addf %191, %192 : vector<8x128xf32>
    %194 = math.tanh %193 : vector<8x128xf32>
    %195 = arith.mulf %190, %194 : vector<8x128xf32>
    %196 = arith.index_cast %c2_i32 : i32 to index
    %c0_41 = arith.constant 0 : index
    %c0_42 = arith.constant 0 : index
    %197 = vector.load %arg6[%196, %c0_41, %c0_42] : memref<8x8x128xf32, #tpu.memory_space<vmem>>, vector<1x8x128xf32>
    %198 = vector.shape_cast %197 : vector<1x8x128xf32> to vector<8x128xf32>
    %199 = vector.shape_cast %195 : vector<8x128xf32> to vector<1x8x128xf32>
    tpu.vector_store %arg6[%196, %c0_41, %c0_42], %199 {strides = array<i32>} : memref<8x8x128xf32, #tpu.memory_space<vmem>>, vector<1x8x128xf32>,
    %c3_i32 = arith.constant 3 : i32
    %200 = arith.index_cast %c3_i32 : i32 to index
    %c0_43 = arith.constant 0 : index
    %c0_44 = arith.constant 0 : index
    %201 = vector.load %arg1[%200, %c0_43, %c0_44] : memref<8x8x128xf32, #tpu.memory_space<vmem>>, vector<1x8x128xf32>
    %202 = vector.shape_cast %201 : vector<1x8x128xf32> to vector<8x128xf32>
    %203 = tpu.concatenate %202, %166 in 1 : vector<8x128xf32>, vector<8x128xf32> -> vector<8x256xf32>
    %cst_45 = arith.constant dense<0.000000e+00> : vector<8x512xf32>
    %204 = tpu.matmul %203, %0, %cst_45 {dimension_numbers = #tpu.dot_dimension_numbers<[1], [0], [0], [1], [0, 0, 1, 1], [], []>} : vector<8x256xf32>, vector<256x512xf32>, vector<8x512xf32> -> vector<8x512xf32>
    %205 = vector.broadcast %1 : vector<1x512xf32> to vector<8x512xf32>
    %206 = arith.addf %204, %205 : vector<8x512xf32>
    %207 = vector.extract_strided_slice %206 {offsets = [0, 0], sizes = [8, 128], strides = [1, 1]} : vector<8x512xf32> to vector<8x128xf32>
    %208 = arith.negf %207 : vector<8x128xf32>
    %209 = math.exp %208 : vector<8x128xf32>
    %cst_46 = arith.constant 1.000000e+00 : f32
    %210 = vector.broadcast %cst_46 : f32 to vector<8x128xf32>
    %211 = arith.addf %210, %209 : vector<8x128xf32>
    %212 = arith.divf %210, %211 : vector<8x128xf32>
    %213 = vector.extract_strided_slice %206 {offsets = [0, 128], sizes = [8, 128], strides = [1, 1]} : vector<8x512xf32> to vector<8x128xf32>
    %214 = arith.negf %213 : vector<8x128xf32>
    %215 = math.exp %214 : vector<8x128xf32>
    %cst_47 = arith.constant 1.000000e+00 : f32
    %216 = vector.broadcast %cst_47 : f32 to vector<8x128xf32>
    %217 = arith.addf %216, %215 : vector<8x128xf32>
    %218 = arith.divf %216, %217 : vector<8x128xf32>
    %219 = vector.extract_strided_slice %206 {offsets = [0, 256], sizes = [8, 128], strides = [1, 1]} : vector<8x512xf32> to vector<8x128xf32>
    %220 = math.tanh %219 : vector<8x128xf32>
    %221 = vector.extract_strided_slice %206 {offsets = [0, 384], sizes = [8, 128], strides = [1, 1]} : vector<8x512xf32> to vector<8x128xf32>
    %222 = arith.negf %221 : vector<8x128xf32>
    %223 = math.exp %222 : vector<8x128xf32>
    %cst_48 = arith.constant 1.000000e+00 : f32
    %224 = vector.broadcast %cst_48 : f32 to vector<8x128xf32>
    %225 = arith.addf %224, %223 : vector<8x128xf32>
    %226 = arith.divf %224, %225 : vector<8x128xf32>
    %227 = arith.mulf %218, %164 : vector<8x128xf32>
    %228 = arith.mulf %212, %220 : vector<8x128xf32>
    %229 = arith.addf %227, %228 : vector<8x128xf32>
    %230 = math.tanh %229 : vector<8x128xf32>
    %231 = arith.mulf %226, %230 : vector<8x128xf32>
    %232 = tpu.concatenate %231, %195 in 1 : vector<8x128xf32>, vector<8x128xf32> -> vector<8x256xf32>
    %cst_49 = arith.constant dense<0.000000e+00> : vector<8x512xf32>
    %233 = tpu.matmul %232, %2, %cst_49 {dimension_numbers = #tpu.dot_dimension_numbers<[1], [0], [0], [1], [0, 0, 1, 1], [], []>} : vector<8x256xf32>, vector<256x512xf32>, vector<8x512xf32> -> vector<8x512xf32>
    %234 = vector.broadcast %3 : vector<1x512xf32> to vector<8x512xf32>
    %235 = arith.addf %233, %234 : vector<8x512xf32>
    %236 = vector.extract_strided_slice %235 {offsets = [0, 0], sizes = [8, 128], strides = [1, 1]} : vector<8x512xf32> to vector<8x128xf32>
    %237 = arith.negf %236 : vector<8x128xf32>
    %238 = math.exp %237 : vector<8x128xf32>
    %cst_50 = arith.constant 1.000000e+00 : f32
    %239 = vector.broadcast %cst_50 : f32 to vector<8x128xf32>
    %240 = arith.addf %239, %238 : vector<8x128xf32>
    %241 = arith.divf %239, %240 : vector<8x128xf32>
    %242 = vector.extract_strided_slice %235 {offsets = [0, 128], sizes = [8, 128], strides = [1, 1]} : vector<8x512xf32> to vector<8x128xf32>
    %243 = arith.negf %242 : vector<8x128xf32>
    %244 = math.exp %243 : vector<8x128xf32>
    %cst_51 = arith.constant 1.000000e+00 : f32
    %245 = vector.broadcast %cst_51 : f32 to vector<8x128xf32>
    %246 = arith.addf %245, %244 : vector<8x128xf32>
    %247 = arith.divf %245, %246 : vector<8x128xf32>
    %248 = vector.extract_strided_slice %235 {offsets = [0, 256], sizes = [8, 128], strides = [1, 1]} : vector<8x512xf32> to vector<8x128xf32>
    %249 = math.tanh %248 : vector<8x128xf32>
    %250 = vector.extract_strided_slice %235 {offsets = [0, 384], sizes = [8, 128], strides = [1, 1]} : vector<8x512xf32> to vector<8x128xf32>
    %251 = arith.negf %250 : vector<8x128xf32>
    %252 = math.exp %251 : vector<8x128xf32>
    %cst_52 = arith.constant 1.000000e+00 : f32
    %253 = vector.broadcast %cst_52 : f32 to vector<8x128xf32>
    %254 = arith.addf %253, %252 : vector<8x128xf32>
    %255 = arith.divf %253, %254 : vector<8x128xf32>
    %256 = arith.mulf %247, %193 : vector<8x128xf32>
    %257 = arith.mulf %241, %249 : vector<8x128xf32>
    %258 = arith.addf %256, %257 : vector<8x128xf32>
    %259 = math.tanh %258 : vector<8x128xf32>
    %260 = arith.mulf %255, %259 : vector<8x128xf32>
    %261 = arith.index_cast %c3_i32 : i32 to index
    %c0_53 = arith.constant 0 : index
    %c0_54 = arith.constant 0 : index
    %262 = vector.load %arg6[%261, %c0_53, %c0_54] : memref<8x8x128xf32, #tpu.memory_space<vmem>>, vector<1x8x128xf32>
    %263 = vector.shape_cast %262 : vector<1x8x128xf32> to vector<8x128xf32>
    %264 = vector.shape_cast %260 : vector<8x128xf32> to vector<1x8x128xf32>
    tpu.vector_store %arg6[%261, %c0_53, %c0_54], %264 {strides = array<i32>} : memref<8x8x128xf32, #tpu.memory_space<vmem>>, vector<1x8x128xf32>,
    %c4_i32 = arith.constant 4 : i32
    %265 = arith.index_cast %c4_i32 : i32 to index
    %c0_55 = arith.constant 0 : index
    %c0_56 = arith.constant 0 : index
    %266 = vector.load %arg1[%265, %c0_55, %c0_56] : memref<8x8x128xf32, #tpu.memory_space<vmem>>, vector<1x8x128xf32>
    %267 = vector.shape_cast %266 : vector<1x8x128xf32> to vector<8x128xf32>
    %268 = tpu.concatenate %267, %231 in 1 : vector<8x128xf32>, vector<8x128xf32> -> vector<8x256xf32>
    %cst_57 = arith.constant dense<0.000000e+00> : vector<8x512xf32>
    %269 = tpu.matmul %268, %0, %cst_57 {dimension_numbers = #tpu.dot_dimension_numbers<[1], [0], [0], [1], [0, 0, 1, 1], [], []>} : vector<8x256xf32>, vector<256x512xf32>, vector<8x512xf32> -> vector<8x512xf32>
    %270 = vector.broadcast %1 : vector<1x512xf32> to vector<8x512xf32>
    %271 = arith.addf %269, %270 : vector<8x512xf32>
    %272 = vector.extract_strided_slice %271 {offsets = [0, 0], sizes = [8, 128], strides = [1, 1]} : vector<8x512xf32> to vector<8x128xf32>
    %273 = arith.negf %272 : vector<8x128xf32>
    %274 = math.exp %273 : vector<8x128xf32>
    %cst_58 = arith.constant 1.000000e+00 : f32
    %275 = vector.broadcast %cst_58 : f32 to vector<8x128xf32>
    %276 = arith.addf %275, %274 : vector<8x128xf32>
    %277 = arith.divf %275, %276 : vector<8x128xf32>
    %278 = vector.extract_strided_slice %271 {offsets = [0, 128], sizes = [8, 128], strides = [1, 1]} : vector<8x512xf32> to vector<8x128xf32>
    %279 = arith.negf %278 : vector<8x128xf32>
    %280 = math.exp %279 : vector<8x128xf32>
    %cst_59 = arith.constant 1.000000e+00 : f32
    %281 = vector.broadcast %cst_59 : f32 to vector<8x128xf32>
    %282 = arith.addf %281, %280 : vector<8x128xf32>
    %283 = arith.divf %281, %282 : vector<8x128xf32>
    %284 = vector.extract_strided_slice %271 {offsets = [0, 256], sizes = [8, 128], strides = [1, 1]} : vector<8x512xf32> to vector<8x128xf32>
    %285 = math.tanh %284 : vector<8x128xf32>
    %286 = vector.extract_strided_slice %271 {offsets = [0, 384], sizes = [8, 128], strides = [1, 1]} : vector<8x512xf32> to vector<8x128xf32>
    %287 = arith.negf %286 : vector<8x128xf32>
    %288 = math.exp %287 : vector<8x128xf32>
    %cst_60 = arith.constant 1.000000e+00 : f32
    %289 = vector.broadcast %cst_60 : f32 to vector<8x128xf32>
    %290 = arith.addf %289, %288 : vector<8x128xf32>
    %291 = arith.divf %289, %290 : vector<8x128xf32>
    %292 = arith.mulf %283, %229 : vector<8x128xf32>
    %293 = arith.mulf %277, %285 : vector<8x128xf32>
    %294 = arith.addf %292, %293 : vector<8x128xf32>
    %295 = math.tanh %294 : vector<8x128xf32>
    %296 = arith.mulf %291, %295 : vector<8x128xf32>
    %297 = tpu.concatenate %296, %260 in 1 : vector<8x128xf32>, vector<8x128xf32> -> vector<8x256xf32>
    %cst_61 = arith.constant dense<0.000000e+00> : vector<8x512xf32>
    %298 = tpu.matmul %297, %2, %cst_61 {dimension_numbers = #tpu.dot_dimension_numbers<[1], [0], [0], [1], [0, 0, 1, 1], [], []>} : vector<8x256xf32>, vector<256x512xf32>, vector<8x512xf32> -> vector<8x512xf32>
    %299 = vector.broadcast %3 : vector<1x512xf32> to vector<8x512xf32>
    %300 = arith.addf %298, %299 : vector<8x512xf32>
    %301 = vector.extract_strided_slice %300 {offsets = [0, 0], sizes = [8, 128], strides = [1, 1]} : vector<8x512xf32> to vector<8x128xf32>
    %302 = arith.negf %301 : vector<8x128xf32>
    %303 = math.exp %302 : vector<8x128xf32>
    %cst_62 = arith.constant 1.000000e+00 : f32
    %304 = vector.broadcast %cst_62 : f32 to vector<8x128xf32>
    %305 = arith.addf %304, %303 : vector<8x128xf32>
    %306 = arith.divf %304, %305 : vector<8x128xf32>
    %307 = vector.extract_strided_slice %300 {offsets = [0, 128], sizes = [8, 128], strides = [1, 1]} : vector<8x512xf32> to vector<8x128xf32>
    %308 = arith.negf %307 : vector<8x128xf32>
    %309 = math.exp %308 : vector<8x128xf32>
    %cst_63 = arith.constant 1.000000e+00 : f32
    %310 = vector.broadcast %cst_63 : f32 to vector<8x128xf32>
    %311 = arith.addf %310, %309 : vector<8x128xf32>
    %312 = arith.divf %310, %311 : vector<8x128xf32>
    %313 = vector.extract_strided_slice %300 {offsets = [0, 256], sizes = [8, 128], strides = [1, 1]} : vector<8x512xf32> to vector<8x128xf32>
    %314 = math.tanh %313 : vector<8x128xf32>
    %315 = vector.extract_strided_slice %300 {offsets = [0, 384], sizes = [8, 128], strides = [1, 1]} : vector<8x512xf32> to vector<8x128xf32>
    %316 = arith.negf %315 : vector<8x128xf32>
    %317 = math.exp %316 : vector<8x128xf32>
    %cst_64 = arith.constant 1.000000e+00 : f32
    %318 = vector.broadcast %cst_64 : f32 to vector<8x128xf32>
    %319 = arith.addf %318, %317 : vector<8x128xf32>
    %320 = arith.divf %318, %319 : vector<8x128xf32>
    %321 = arith.mulf %312, %258 : vector<8x128xf32>
    %322 = arith.mulf %306, %314 : vector<8x128xf32>
    %323 = arith.addf %321, %322 : vector<8x128xf32>
    %324 = math.tanh %323 : vector<8x128xf32>
    %325 = arith.mulf %320, %324 : vector<8x128xf32>
    %326 = arith.index_cast %c4_i32 : i32 to index
    %c0_65 = arith.constant 0 : index
    %c0_66 = arith.constant 0 : index
    %327 = vector.load %arg6[%326, %c0_65, %c0_66] : memref<8x8x128xf32, #tpu.memory_space<vmem>>, vector<1x8x128xf32>
    %328 = vector.shape_cast %327 : vector<1x8x128xf32> to vector<8x128xf32>
    %329 = vector.shape_cast %325 : vector<8x128xf32> to vector<1x8x128xf32>
    tpu.vector_store %arg6[%326, %c0_65, %c0_66], %329 {strides = array<i32>} : memref<8x8x128xf32, #tpu.memory_space<vmem>>, vector<1x8x128xf32>,
    %c5_i32 = arith.constant 5 : i32
    %330 = arith.index_cast %c5_i32 : i32 to index
    %c0_67 = arith.constant 0 : index
    %c0_68 = arith.constant 0 : index
    %331 = vector.load %arg1[%330, %c0_67, %c0_68] : memref<8x8x128xf32, #tpu.memory_space<vmem>>, vector<1x8x128xf32>
    %332 = vector.shape_cast %331 : vector<1x8x128xf32> to vector<8x128xf32>
    %333 = tpu.concatenate %332, %296 in 1 : vector<8x128xf32>, vector<8x128xf32> -> vector<8x256xf32>
    %cst_69 = arith.constant dense<0.000000e+00> : vector<8x512xf32>
    %334 = tpu.matmul %333, %0, %cst_69 {dimension_numbers = #tpu.dot_dimension_numbers<[1], [0], [0], [1], [0, 0, 1, 1], [], []>} : vector<8x256xf32>, vector<256x512xf32>, vector<8x512xf32> -> vector<8x512xf32>
    %335 = vector.broadcast %1 : vector<1x512xf32> to vector<8x512xf32>
    %336 = arith.addf %334, %335 : vector<8x512xf32>
    %337 = vector.extract_strided_slice %336 {offsets = [0, 0], sizes = [8, 128], strides = [1, 1]} : vector<8x512xf32> to vector<8x128xf32>
    %338 = arith.negf %337 : vector<8x128xf32>
    %339 = math.exp %338 : vector<8x128xf32>
    %cst_70 = arith.constant 1.000000e+00 : f32
    %340 = vector.broadcast %cst_70 : f32 to vector<8x128xf32>
    %341 = arith.addf %340, %339 : vector<8x128xf32>
    %342 = arith.divf %340, %341 : vector<8x128xf32>
    %343 = vector.extract_strided_slice %336 {offsets = [0, 128], sizes = [8, 128], strides = [1, 1]} : vector<8x512xf32> to vector<8x128xf32>
    %344 = arith.negf %343 : vector<8x128xf32>
    %345 = math.exp %344 : vector<8x128xf32>
    %cst_71 = arith.constant 1.000000e+00 : f32
    %346 = vector.broadcast %cst_71 : f32 to vector<8x128xf32>
    %347 = arith.addf %346, %345 : vector<8x128xf32>
    %348 = arith.divf %346, %347 : vector<8x128xf32>
    %349 = vector.extract_strided_slice %336 {offsets = [0, 256], sizes = [8, 128], strides = [1, 1]} : vector<8x512xf32> to vector<8x128xf32>
    %350 = math.tanh %349 : vector<8x128xf32>
    %351 = vector.extract_strided_slice %336 {offsets = [0, 384], sizes = [8, 128], strides = [1, 1]} : vector<8x512xf32> to vector<8x128xf32>
    %352 = arith.negf %351 : vector<8x128xf32>
    %353 = math.exp %352 : vector<8x128xf32>
    %cst_72 = arith.constant 1.000000e+00 : f32
    %354 = vector.broadcast %cst_72 : f32 to vector<8x128xf32>
    %355 = arith.addf %354, %353 : vector<8x128xf32>
    %356 = arith.divf %354, %355 : vector<8x128xf32>
    %357 = arith.mulf %348, %294 : vector<8x128xf32>
    %358 = arith.mulf %342, %350 : vector<8x128xf32>
    %359 = arith.addf %357, %358 : vector<8x128xf32>
    %360 = math.tanh %359 : vector<8x128xf32>
    %361 = arith.mulf %356, %360 : vector<8x128xf32>
    %362 = tpu.concatenate %361, %325 in 1 : vector<8x128xf32>, vector<8x128xf32> -> vector<8x256xf32>
    %cst_73 = arith.constant dense<0.000000e+00> : vector<8x512xf32>
    %363 = tpu.matmul %362, %2, %cst_73 {dimension_numbers = #tpu.dot_dimension_numbers<[1], [0], [0], [1], [0, 0, 1, 1], [], []>} : vector<8x256xf32>, vector<256x512xf32>, vector<8x512xf32> -> vector<8x512xf32>
    %364 = vector.broadcast %3 : vector<1x512xf32> to vector<8x512xf32>
    %365 = arith.addf %363, %364 : vector<8x512xf32>
    %366 = vector.extract_strided_slice %365 {offsets = [0, 0], sizes = [8, 128], strides = [1, 1]} : vector<8x512xf32> to vector<8x128xf32>
    %367 = arith.negf %366 : vector<8x128xf32>
    %368 = math.exp %367 : vector<8x128xf32>
    %cst_74 = arith.constant 1.000000e+00 : f32
    %369 = vector.broadcast %cst_74 : f32 to vector<8x128xf32>
    %370 = arith.addf %369, %368 : vector<8x128xf32>
    %371 = arith.divf %369, %370 : vector<8x128xf32>
    %372 = vector.extract_strided_slice %365 {offsets = [0, 128], sizes = [8, 128], strides = [1, 1]} : vector<8x512xf32> to vector<8x128xf32>
    %373 = arith.negf %372 : vector<8x128xf32>
    %374 = math.exp %373 : vector<8x128xf32>
    %cst_75 = arith.constant 1.000000e+00 : f32
    %375 = vector.broadcast %cst_75 : f32 to vector<8x128xf32>
    %376 = arith.addf %375, %374 : vector<8x128xf32>
    %377 = arith.divf %375, %376 : vector<8x128xf32>
    %378 = vector.extract_strided_slice %365 {offsets = [0, 256], sizes = [8, 128], strides = [1, 1]} : vector<8x512xf32> to vector<8x128xf32>
    %379 = math.tanh %378 : vector<8x128xf32>
    %380 = vector.extract_strided_slice %365 {offsets = [0, 384], sizes = [8, 128], strides = [1, 1]} : vector<8x512xf32> to vector<8x128xf32>
    %381 = arith.negf %380 : vector<8x128xf32>
    %382 = math.exp %381 : vector<8x128xf32>
    %cst_76 = arith.constant 1.000000e+00 : f32
    %383 = vector.broadcast %cst_76 : f32 to vector<8x128xf32>
    %384 = arith.addf %383, %382 : vector<8x128xf32>
    %385 = arith.divf %383, %384 : vector<8x128xf32>
    %386 = arith.mulf %377, %323 : vector<8x128xf32>
    %387 = arith.mulf %371, %379 : vector<8x128xf32>
    %388 = arith.addf %386, %387 : vector<8x128xf32>
    %389 = math.tanh %388 : vector<8x128xf32>
    %390 = arith.mulf %385, %389 : vector<8x128xf32>
    %391 = arith.index_cast %c5_i32 : i32 to index
    %c0_77 = arith.constant 0 : index
    %c0_78 = arith.constant 0 : index
    %392 = vector.load %arg6[%391, %c0_77, %c0_78] : memref<8x8x128xf32, #tpu.memory_space<vmem>>, vector<1x8x128xf32>
    %393 = vector.shape_cast %392 : vector<1x8x128xf32> to vector<8x128xf32>
    %394 = vector.shape_cast %390 : vector<8x128xf32> to vector<1x8x128xf32>
    tpu.vector_store %arg6[%391, %c0_77, %c0_78], %394 {strides = array<i32>} : memref<8x8x128xf32, #tpu.memory_space<vmem>>, vector<1x8x128xf32>,
    %c6_i32 = arith.constant 6 : i32
    %395 = arith.index_cast %c6_i32 : i32 to index
    %c0_79 = arith.constant 0 : index
    %c0_80 = arith.constant 0 : index
    %396 = vector.load %arg1[%395, %c0_79, %c0_80] : memref<8x8x128xf32, #tpu.memory_space<vmem>>, vector<1x8x128xf32>
    %397 = vector.shape_cast %396 : vector<1x8x128xf32> to vector<8x128xf32>
    %398 = tpu.concatenate %397, %361 in 1 : vector<8x128xf32>, vector<8x128xf32> -> vector<8x256xf32>
    %cst_81 = arith.constant dense<0.000000e+00> : vector<8x512xf32>
    %399 = tpu.matmul %398, %0, %cst_81 {dimension_numbers = #tpu.dot_dimension_numbers<[1], [0], [0], [1], [0, 0, 1, 1], [], []>} : vector<8x256xf32>, vector<256x512xf32>, vector<8x512xf32> -> vector<8x512xf32>
    %400 = vector.broadcast %1 : vector<1x512xf32> to vector<8x512xf32>
    %401 = arith.addf %399, %400 : vector<8x512xf32>
    %402 = vector.extract_strided_slice %401 {offsets = [0, 0], sizes = [8, 128], strides = [1, 1]} : vector<8x512xf32> to vector<8x128xf32>
    %403 = arith.negf %402 : vector<8x128xf32>
    %404 = math.exp %403 : vector<8x128xf32>
    %cst_82 = arith.constant 1.000000e+00 : f32
    %405 = vector.broadcast %cst_82 : f32 to vector<8x128xf32>
    %406 = arith.addf %405, %404 : vector<8x128xf32>
    %407 = arith.divf %405, %406 : vector<8x128xf32>
    %408 = vector.extract_strided_slice %401 {offsets = [0, 128], sizes = [8, 128], strides = [1, 1]} : vector<8x512xf32> to vector<8x128xf32>
    %409 = arith.negf %408 : vector<8x128xf32>
    %410 = math.exp %409 : vector<8x128xf32>
    %cst_83 = arith.constant 1.000000e+00 : f32
    %411 = vector.broadcast %cst_83 : f32 to vector<8x128xf32>
    %412 = arith.addf %411, %410 : vector<8x128xf32>
    %413 = arith.divf %411, %412 : vector<8x128xf32>
    %414 = vector.extract_strided_slice %401 {offsets = [0, 256], sizes = [8, 128], strides = [1, 1]} : vector<8x512xf32> to vector<8x128xf32>
    %415 = math.tanh %414 : vector<8x128xf32>
    %416 = vector.extract_strided_slice %401 {offsets = [0, 384], sizes = [8, 128], strides = [1, 1]} : vector<8x512xf32> to vector<8x128xf32>
    %417 = arith.negf %416 : vector<8x128xf32>
    %418 = math.exp %417 : vector<8x128xf32>
    %cst_84 = arith.constant 1.000000e+00 : f32
    %419 = vector.broadcast %cst_84 : f32 to vector<8x128xf32>
    %420 = arith.addf %419, %418 : vector<8x128xf32>
    %421 = arith.divf %419, %420 : vector<8x128xf32>
    %422 = arith.mulf %413, %359 : vector<8x128xf32>
    %423 = arith.mulf %407, %415 : vector<8x128xf32>
    %424 = arith.addf %422, %423 : vector<8x128xf32>
    %425 = math.tanh %424 : vector<8x128xf32>
    %426 = arith.mulf %421, %425 : vector<8x128xf32>
    %427 = tpu.concatenate %426, %390 in 1 : vector<8x128xf32>, vector<8x128xf32> -> vector<8x256xf32>
    %cst_85 = arith.constant dense<0.000000e+00> : vector<8x512xf32>
    %428 = tpu.matmul %427, %2, %cst_85 {dimension_numbers = #tpu.dot_dimension_numbers<[1], [0], [0], [1], [0, 0, 1, 1], [], []>} : vector<8x256xf32>, vector<256x512xf32>, vector<8x512xf32> -> vector<8x512xf32>
    %429 = vector.broadcast %3 : vector<1x512xf32> to vector<8x512xf32>
    %430 = arith.addf %428, %429 : vector<8x512xf32>
    %431 = vector.extract_strided_slice %430 {offsets = [0, 0], sizes = [8, 128], strides = [1, 1]} : vector<8x512xf32> to vector<8x128xf32>
    %432 = arith.negf %431 : vector<8x128xf32>
    %433 = math.exp %432 : vector<8x128xf32>
    %cst_86 = arith.constant 1.000000e+00 : f32
    %434 = vector.broadcast %cst_86 : f32 to vector<8x128xf32>
    %435 = arith.addf %434, %433 : vector<8x128xf32>
    %436 = arith.divf %434, %435 : vector<8x128xf32>
    %437 = vector.extract_strided_slice %430 {offsets = [0, 128], sizes = [8, 128], strides = [1, 1]} : vector<8x512xf32> to vector<8x128xf32>
    %438 = arith.negf %437 : vector<8x128xf32>
    %439 = math.exp %438 : vector<8x128xf32>
    %cst_87 = arith.constant 1.000000e+00 : f32
    %440 = vector.broadcast %cst_87 : f32 to vector<8x128xf32>
    %441 = arith.addf %440, %439 : vector<8x128xf32>
    %442 = arith.divf %440, %441 : vector<8x128xf32>
    %443 = vector.extract_strided_slice %430 {offsets = [0, 256], sizes = [8, 128], strides = [1, 1]} : vector<8x512xf32> to vector<8x128xf32>
    %444 = math.tanh %443 : vector<8x128xf32>
    %445 = vector.extract_strided_slice %430 {offsets = [0, 384], sizes = [8, 128], strides = [1, 1]} : vector<8x512xf32> to vector<8x128xf32>
    %446 = arith.negf %445 : vector<8x128xf32>
    %447 = math.exp %446 : vector<8x128xf32>
    %cst_88 = arith.constant 1.000000e+00 : f32
    %448 = vector.broadcast %cst_88 : f32 to vector<8x128xf32>
    %449 = arith.addf %448, %447 : vector<8x128xf32>
    %450 = arith.divf %448, %449 : vector<8x128xf32>
    %451 = arith.mulf %442, %388 : vector<8x128xf32>
    %452 = arith.mulf %436, %444 : vector<8x128xf32>
    %453 = arith.addf %451, %452 : vector<8x128xf32>
    %454 = math.tanh %453 : vector<8x128xf32>
    %455 = arith.mulf %450, %454 : vector<8x128xf32>
    %456 = arith.index_cast %c6_i32 : i32 to index
    %c0_89 = arith.constant 0 : index
    %c0_90 = arith.constant 0 : index
    %457 = vector.load %arg6[%456, %c0_89, %c0_90] : memref<8x8x128xf32, #tpu.memory_space<vmem>>, vector<1x8x128xf32>
    %458 = vector.shape_cast %457 : vector<1x8x128xf32> to vector<8x128xf32>
    %459 = vector.shape_cast %455 : vector<8x128xf32> to vector<1x8x128xf32>
    tpu.vector_store %arg6[%456, %c0_89, %c0_90], %459 {strides = array<i32>} : memref<8x8x128xf32, #tpu.memory_space<vmem>>, vector<1x8x128xf32>,
    %c7_i32 = arith.constant 7 : i32
    %460 = arith.index_cast %c7_i32 : i32 to index
    %c0_91 = arith.constant 0 : index
    %c0_92 = arith.constant 0 : index
    %461 = vector.load %arg1[%460, %c0_91, %c0_92] : memref<8x8x128xf32, #tpu.memory_space<vmem>>, vector<1x8x128xf32>
    %462 = vector.shape_cast %461 : vector<1x8x128xf32> to vector<8x128xf32>
    %463 = tpu.concatenate %462, %426 in 1 : vector<8x128xf32>, vector<8x128xf32> -> vector<8x256xf32>
    %cst_93 = arith.constant dense<0.000000e+00> : vector<8x512xf32>
    %464 = tpu.matmul %463, %0, %cst_93 {dimension_numbers = #tpu.dot_dimension_numbers<[1], [0], [0], [1], [0, 0, 1, 1], [], []>} : vector<8x256xf32>, vector<256x512xf32>, vector<8x512xf32> -> vector<8x512xf32>
    %465 = vector.broadcast %1 : vector<1x512xf32> to vector<8x512xf32>
    %466 = arith.addf %464, %465 : vector<8x512xf32>
    %467 = vector.extract_strided_slice %466 {offsets = [0, 0], sizes = [8, 128], strides = [1, 1]} : vector<8x512xf32> to vector<8x128xf32>
    %468 = arith.negf %467 : vector<8x128xf32>
    %469 = math.exp %468 : vector<8x128xf32>
    %cst_94 = arith.constant 1.000000e+00 : f32
    %470 = vector.broadcast %cst_94 : f32 to vector<8x128xf32>
    %471 = arith.addf %470, %469 : vector<8x128xf32>
    %472 = arith.divf %470, %471 : vector<8x128xf32>
    %473 = vector.extract_strided_slice %466 {offsets = [0, 128], sizes = [8, 128], strides = [1, 1]} : vector<8x512xf32> to vector<8x128xf32>
    %474 = arith.negf %473 : vector<8x128xf32>
    %475 = math.exp %474 : vector<8x128xf32>
    %cst_95 = arith.constant 1.000000e+00 : f32
    %476 = vector.broadcast %cst_95 : f32 to vector<8x128xf32>
    %477 = arith.addf %476, %475 : vector<8x128xf32>
    %478 = arith.divf %476, %477 : vector<8x128xf32>
    %479 = vector.extract_strided_slice %466 {offsets = [0, 256], sizes = [8, 128], strides = [1, 1]} : vector<8x512xf32> to vector<8x128xf32>
    %480 = math.tanh %479 : vector<8x128xf32>
    %481 = vector.extract_strided_slice %466 {offsets = [0, 384], sizes = [8, 128], strides = [1, 1]} : vector<8x512xf32> to vector<8x128xf32>
    %482 = arith.negf %481 : vector<8x128xf32>
    %483 = math.exp %482 : vector<8x128xf32>
    %cst_96 = arith.constant 1.000000e+00 : f32
    %484 = vector.broadcast %cst_96 : f32 to vector<8x128xf32>
    %485 = arith.addf %484, %483 : vector<8x128xf32>
    %486 = arith.divf %484, %485 : vector<8x128xf32>
    %487 = arith.mulf %478, %424 : vector<8x128xf32>
    %488 = arith.mulf %472, %480 : vector<8x128xf32>
    %489 = arith.addf %487, %488 : vector<8x128xf32>
    %490 = math.tanh %489 : vector<8x128xf32>
    %491 = arith.mulf %486, %490 : vector<8x128xf32>
    %492 = tpu.concatenate %491, %455 in 1 : vector<8x128xf32>, vector<8x128xf32> -> vector<8x256xf32>
    %cst_97 = arith.constant dense<0.000000e+00> : vector<8x512xf32>
    %493 = tpu.matmul %492, %2, %cst_97 {dimension_numbers = #tpu.dot_dimension_numbers<[1], [0], [0], [1], [0, 0, 1, 1], [], []>} : vector<8x256xf32>, vector<256x512xf32>, vector<8x512xf32> -> vector<8x512xf32>
    %494 = vector.broadcast %3 : vector<1x512xf32> to vector<8x512xf32>
    %495 = arith.addf %493, %494 : vector<8x512xf32>
    %496 = vector.extract_strided_slice %495 {offsets = [0, 0], sizes = [8, 128], strides = [1, 1]} : vector<8x512xf32> to vector<8x128xf32>
    %497 = arith.negf %496 : vector<8x128xf32>
    %498 = math.exp %497 : vector<8x128xf32>
    %cst_98 = arith.constant 1.000000e+00 : f32
    %499 = vector.broadcast %cst_98 : f32 to vector<8x128xf32>
    %500 = arith.addf %499, %498 : vector<8x128xf32>
    %501 = arith.divf %499, %500 : vector<8x128xf32>
    %502 = vector.extract_strided_slice %495 {offsets = [0, 128], sizes = [8, 128], strides = [1, 1]} : vector<8x512xf32> to vector<8x128xf32>
    %503 = arith.negf %502 : vector<8x128xf32>
    %504 = math.exp %503 : vector<8x128xf32>
    %cst_99 = arith.constant 1.000000e+00 : f32
    %505 = vector.broadcast %cst_99 : f32 to vector<8x128xf32>
    %506 = arith.addf %505, %504 : vector<8x128xf32>
    %507 = arith.divf %505, %506 : vector<8x128xf32>
    %508 = vector.extract_strided_slice %495 {offsets = [0, 256], sizes = [8, 128], strides = [1, 1]} : vector<8x512xf32> to vector<8x128xf32>
    %509 = math.tanh %508 : vector<8x128xf32>
    %510 = vector.extract_strided_slice %495 {offsets = [0, 384], sizes = [8, 128], strides = [1, 1]} : vector<8x512xf32> to vector<8x128xf32>
    %511 = arith.negf %510 : vector<8x128xf32>
    %512 = math.exp %511 : vector<8x128xf32>
    %cst_100 = arith.constant 1.000000e+00 : f32
    %513 = vector.broadcast %cst_100 : f32 to vector<8x128xf32>
    %514 = arith.addf %513, %512 : vector<8x128xf32>
    %515 = arith.divf %513, %514 : vector<8x128xf32>
    %516 = arith.mulf %507, %453 : vector<8x128xf32>
    %517 = arith.mulf %501, %509 : vector<8x128xf32>
    %518 = arith.addf %516, %517 : vector<8x128xf32>
    %519 = math.tanh %518 : vector<8x128xf32>
    %520 = arith.mulf %515, %519 : vector<8x128xf32>
    %521 = arith.index_cast %c7_i32 : i32 to index
    %c0_101 = arith.constant 0 : index
    %c0_102 = arith.constant 0 : index
    %522 = vector.load %arg6[%521, %c0_101, %c0_102] : memref<8x8x128xf32, #tpu.memory_space<vmem>>, vector<1x8x128xf32>
    %523 = vector.shape_cast %522 : vector<1x8x128xf32> to vector<8x128xf32>
    %524 = vector.shape_cast %520 : vector<8x128xf32> to vector<1x8x128xf32>
    tpu.vector_store %arg6[%521, %c0_101, %c0_102], %524 {strides = array<i32>} : memref<8x8x128xf32, #tpu.memory_space<vmem>>, vector<1x8x128xf32>,
    %c8_i32 = arith.constant 8 : i32
    return
  }
  func.func @transform_0(%arg0: i32) -> (i32, i32, i32) {
    %c0_i32 = arith.constant 0 : i32
    %c0_i32_0 = arith.constant 0 : i32
    %c0_i32_1 = arith.constant 0 : i32
    %c0_i32_2 = arith.constant 0 : i32
    return %c0_i32, %c0_i32_0, %c0_i32_1 : i32, i32, i32
  }
  func.func @transform_1(%arg0: i32) -> (i32, i32) {
    %c0_i32 = arith.constant 0 : i32
    %c0_i32_0 = arith.constant 0 : i32
    %c0_i32_1 = arith.constant 0 : i32
    return %c0_i32, %c0_i32_0 : i32, i32
  }
  func.func @transform_2(%arg0: i32) -> (i32, i32) {
    %c0_i32 = arith.constant 0 : i32
    %c0_i32_0 = arith.constant 0 : i32
    %c0_i32_1 = arith.constant 0 : i32
    return %c0_i32, %c0_i32_0 : i32, i32
  }
  func.func @transform_3(%arg0: i32) -> (i32, i32) {
    %c0_i32 = arith.constant 0 : i32
    %c0_i32_0 = arith.constant 0 : i32
    %c0_i32_1 = arith.constant 0 : i32
    return %c0_i32, %c0_i32_0 : i32, i32
  }
  func.func @transform_4(%arg0: i32) -> (i32, i32) {
    %c0_i32 = arith.constant 0 : i32
    %c0_i32_0 = arith.constant 0 : i32
    %c0_i32_1 = arith.constant 0 : i32
    return %c0_i32, %c0_i32_0 : i32, i32
  }
  func.func @transform_5(%arg0: i32) -> (i32, i32, i32) {
    %c0_i32 = arith.constant 0 : i32
    %c0_i32_0 = arith.constant 0 : i32
    %c0_i32_1 = arith.constant 0 : i32
    %c0_i32_2 = arith.constant 0 : i32
    return %c0_i32, %c0_i32_0, %c0_i32_1 : i32, i32, i32
  }
}

</mosaic_0001>

<llo_original>
// kernel: tpu_custom_call.1
$region0: #{tpu_custom_call.1}
  #allocation0 [shape = 'u32[]', space=smem, size = 0x4, offset = 0x4, fixed_abs, tag = 'smem constant byte address 0x4 - core index']
  #allocation1 [shape = 'u32[72,128]{1,0:T(1,128)}', space=vmem, size = 0x9000, scoped, tag = 'internal scratch']
  %s0 = inlined_call_operand.hbm [shape: f32[8,8,128], index: 0, kind: input, shape index: {}]
  %s1 = inlined_call_operand.hbm [shape: f32[256,512], index: 1, kind: input, shape index: {}]
  %s2 = inlined_call_operand.hbm [shape: f32[1,512], index: 2, kind: input, shape index: {}]
  %s3 = inlined_call_operand.hbm [shape: f32[256,512], index: 3, kind: input, shape index: {}]
  %s4 = inlined_call_operand.hbm [shape: f32[1,512], index: 4, kind: input, shape index: {}]
  %s5 = inlined_call_operand.hbm [shape: f32[8,8,128], index: 5, kind: output, shape index: {}]
  %s6 = sld [smem:[#allocation0]]
  $region50: #{tpu_custom_call.1} parent=0
    _
  %s8 = ssub.s32 1, %s6
  %s9 = scalar_select 0, %s8, %s6
  $region1: #{tpu_custom_call.1} parent=0
    #allocation2 [shape = 'u8[32768]{0}', space=vmem, size = 0x8000, scoped, tag = 'input window, operand 0, single buffered']
    #allocation3 [shape = 's32[1]{0}', space=sflag, size = 0x4, scoped, tag = 'scoped memory for tpu_custom_call.1']
    #allocation4 [shape = 's32[1]{0}', space=sflag, size = 0x4, scoped, tag = 'scoped memory for tpu_custom_call.1']
    #allocation5 [shape = 'u8[524288]{0}', space=vmem, size = 0x80000, scoped, tag = 'input window, operand 1, single buffered']
    #allocation6 [shape = 's32[1]{0}', space=sflag, size = 0x4, scoped, tag = 'scoped memory for tpu_custom_call.1']
    #allocation7 [shape = 'u8[2048]{0}', space=vmem, size = 0x800, scoped, tag = 'input window, operand 2, single buffered']
    #allocation8 [shape = 'u8[524288]{0}', space=vmem, size = 0x80000, scoped, tag = 'input window, operand 3, single buffered']
    #allocation9 [shape = 's32[1]{0}', space=sflag, size = 0x4, scoped, tag = 'scoped memory for tpu_custom_call.1']
    #allocation10 [shape = 'u8[2048]{0}', space=vmem, size = 0x800, scoped, tag = 'input window, operand 4, single buffered']
    #allocation11 [shape = 'u8[32768]{0}', space=vmem, size = 0x8000, scoped, tag = 'output window, operand 0, single buffered']
    %10 = vsyncpa [#allocation3], 0
    %11 = vsyncpa [#allocation6], 0
    %12 = vsyncpa [#allocation9], 0
    %13 = vsyncpa [#allocation4], 0
    // Predicated region
    $region2: #{tpu_custom_call.1} parent=1 // pred_check
      _
    $region3: #{tpu_custom_call.1} parent=1 // pred_check_branch
      %15 = sbr.rel (0) target = $region5
    $region4: #{tpu_custom_call.1} parent=1 // pred_region
      %17 = vsyncadd [#allocation3], 0
      %s18 = sshll.u32 %s0, 4
      %s19 = int_to_ptr.hbm [resolvable:$true] %s18
      %s20 = sshll.u32 [#allocation2], 4
      %s21 = int_to_ptr.vmem [resolvable:$true] %s20
      %26 = dma.hbm_to_vmem [thread:$0]  %s19, 1024, %s21, [#allocation3], 128, 128, 8
    $region5: #{tpu_custom_call.1} parent=1 // pred_fallthru
      _
    // Predicated region
    $region6: #{tpu_custom_call.1} parent=1 // pred_check
      _
    $region7: #{tpu_custom_call.1} parent=1 // pred_check_branch
      %28 = sbr.rel (0) target = $region9
    $region8: #{tpu_custom_call.1} parent=1 // pred_region
      %30 = vsyncadd [#allocation6], 0
      %s31 = sshll.u32 %s1, 4
      %s32 = int_to_ptr.hbm [resolvable:$true] %s31
      %s33 = sshll.u32 [#allocation5], 4
      %s34 = int_to_ptr.vmem [resolvable:$true] %s33
      %39 = dma.hbm_to_vmem [thread:$0]  %s32, 16384, %s34, [#allocation6], 512, 512, 32
    $region9: #{tpu_custom_call.1} parent=1 // pred_fallthru
      _
    // Predicated region
    $region10: #{tpu_custom_call.1} parent=1 // pred_check
      _
    $region11: #{tpu_custom_call.1} parent=1 // pred_check_branch
      %41 = sbr.rel (0) target = $region13
    $region12: #{tpu_custom_call.1} parent=1 // pred_region
      %43 = vsyncadd [#allocation6], 0
      %s45 = sshll.u32 %s2, 4
      %s46 = int_to_ptr.hbm [resolvable:$true] %s45
      %s47 = sshll.u32 [#allocation7], 4
      %s48 = int_to_ptr.vmem [resolvable:$true] %s47
      %50 = dma.hbm_to_vmem [thread:$0]  %s46, 64, %s48, [#allocation6]
    $region13: #{tpu_custom_call.1} parent=1 // pred_fallthru
      _
    // Predicated region
    $region14: #{tpu_custom_call.1} parent=1 // pred_check
      _
    $region15: #{tpu_custom_call.1} parent=1 // pred_check_branch
      %52 = sbr.rel (0) target = $region17
    $region16: #{tpu_custom_call.1} parent=1 // pred_region
      %54 = vsyncadd [#allocation9], 0
      %s55 = sshll.u32 %s3, 4
      %s56 = int_to_ptr.hbm [resolvable:$true] %s55
      %s57 = sshll.u32 [#allocation8], 4
      %s58 = int_to_ptr.vmem [resolvable:$true] %s57
      %63 = dma.hbm_to_vmem [thread:$0]  %s56, 16384, %s58, [#allocation9], 512, 512, 32
    $region17: #{tpu_custom_call.1} parent=1 // pred_fallthru
      _
    // Predicated region
    $region18: #{tpu_custom_call.1} parent=1 // pred_check
      _
    $region19: #{tpu_custom_call.1} parent=1 // pred_check_branch
      %65 = sbr.rel (0) target = $region21
    $region20: #{tpu_custom_call.1} parent=1 // pred_region
      %67 = vsyncadd [#allocation9], 0
      %s69 = sshll.u32 %s4, 4
      %s70 = int_to_ptr.hbm [resolvable:$true] %s69
      %s71 = sshll.u32 [#allocation10], 4
      %s72 = int_to_ptr.vmem [resolvable:$true] %s71
      %74 = dma.hbm_to_vmem [thread:$0]  %s70, 64, %s72, [#allocation9]
    $region21: #{tpu_custom_call.1} parent=1 // pred_fallthru
      _
    // Predicated region
    $region22: #{tpu_custom_call.1} parent=1 // pred_check
      _
    $region23: #{tpu_custom_call.1} parent=1 // pred_check_branch
      %76 = sbr.rel (0) target = $region25
    $region24: #{tpu_custom_call.1} parent=1 // pred_region
      %78 = dma.done [#allocation3], 1024
    $region25: #{tpu_custom_call.1} parent=1 // pred_fallthru
      _
    // Predicated region
    $region26: #{tpu_custom_call.1} parent=1 // pred_check
      _
    $region27: #{tpu_custom_call.1} parent=1 // pred_check_branch
      %80 = sbr.rel (0) target = $region29
    $region28: #{tpu_custom_call.1} parent=1 // pred_region
      %82 = dma.done [#allocation6], 16384
    $region29: #{tpu_custom_call.1} parent=1 // pred_fallthru
      _
    // Predicated region
    $region30: #{tpu_custom_call.1} parent=1 // pred_check
      _
    $region31: #{tpu_custom_call.1} parent=1 // pred_check_branch
      %84 = sbr.rel (0) target = $region33
    $region32: #{tpu_custom_call.1} parent=1 // pred_region
      %86 = dma.done [#allocation6], 64
    $region33: #{tpu_custom_call.1} parent=1 // pred_fallthru
      _
    // Predicated region
    $region34: #{tpu_custom_call.1} parent=1 // pred_check
      _
    $region35: #{tpu_custom_call.1} parent=1 // pred_check_branch
      %88 = sbr.rel (0) target = $region37
    $region36: #{tpu_custom_call.1} parent=1 // pred_region
      %90 = dma.done [#allocation9], 16384
    $region37: #{tpu_custom_call.1} parent=1 // pred_fallthru
      _
    // Predicated region
    $region38: #{tpu_custom_call.1} parent=1 // pred_check
      _
    $region39: #{tpu_custom_call.1} parent=1 // pred_check_branch
      %92 = sbr.rel (0) target = $region41
    $region40: #{tpu_custom_call.1} parent=1 // pred_region
      %94 = dma.done [#allocation9], 64
    $region41: #{tpu_custom_call.1} parent=1 // pred_fallthru
      _
    %v95 = vld [vmem:[#allocation5] sm:$0xff]
    %v96 = vld [vmem:[#allocation5 + $0x8] sm:$0xff]
    %v97 = vld [vmem:[#allocation5 + $0x10] sm:$0xff]
    %v98 = vld [vmem:[#allocation5 + $0x18] sm:$0xff]
    %v99 = vld [vmem:[#allocation5 + $0x20] sm:$0xff]
    %v100 = vld [vmem:[#allocation5 + $0x28] sm:$0xff]
    %v101 = vld [vmem:[#allocation5 + $0x30] sm:$0xff]
    %v102 = vld [vmem:[#allocation5 + $0x38] sm:$0xff]
    %v103 = vld [vmem:[#allocation5 + $0x40] sm:$0xff]
    %v104 = vld [vmem:[#allocation5 + $0x48] sm:$0xff]
    %v105 = vld [vmem:[#allocation5 + $0x50] sm:$0xff]
    %v106 = vld [vmem:[#allocation5 + $0x58] sm:$0xff]
    %v107 = vld [vmem:[#allocation5 + $0x60] sm:$0xff]
    %v108 = vld [vmem:[#allocation5 + $0x68] sm:$0xff]
    %v109 = vld [vmem:[#allocation5 + $0x70] sm:$0xff]
    %v110 = vld [vmem:[#allocation5 + $0x78] sm:$0xff]
    %v111 = vld [vmem:[#allocation5 + $0x80] sm:$0xff]
    %v112 = vld [vmem:[#allocation5 + $0x88] sm:$0xff]
    %v113 = vld [vmem:[#allocation5 + $0x90] sm:$0xff]
    %v114 = vld [vmem:[#allocation5 + $0x98] sm:$0xff]
    %v115 = vld [vmem:[#allocation5 + $0xa0] sm:$0xff]
    %v116 = vld [vmem:[#allocation5 + $0xa8] sm:$0xff]
    %v117 = vld [vmem:[#allocation5 + $0xb0] sm:$0xff]
    %v118 = vld [vmem:[#allocation5 + $0xb8] sm:$0xff]
    %v119 = vld [vmem:[#allocation5 + $0xc0] sm:$0xff]
    %v120 = vld [vmem:[#allocation5 + $0xc8] sm:$0xff]
    %v121 = vld [vmem:[#allocation5 + $0xd0] sm:$0xff]
    %v122 = vld [vmem:[#allocation5 + $0xd8] sm:$0xff]
    %v123 = vld [vmem:[#allocation5 + $0xe0] sm:$0xff]
    %v124 = vld [vmem:[#allocation5 + $0xe8] sm:$0xff]
    %v125 = vld [vmem:[#allocation5 + $0xf0] sm:$0xff]
    %v126 = vld [vmem:[#allocation5 + $0xf8] sm:$0xff]
    %v127 = vld [vmem:[#allocation5 + $0x100] sm:$0xff]
    %v128 = vld [vmem:[#allocation5 + $0x108] sm:$0xff]
    %v129 = vld [vmem:[#allocation5 + $0x110] sm:$0xff]
    %v130 = vld [vmem:[#allocation5 + $0x118] sm:$0xff]
    %v131 = vld [vmem:[#allocation5 + $0x120] sm:$0xff]
    %v132 = vld [vmem:[#allocation5 + $0x128] sm:$0xff]
    %v133 = vld [vmem:[#allocation5 + $0x130] sm:$0xff]
    %v134 = vld [vmem:[#allocation5 + $0x138] sm:$0xff]
    %v135 = vld [vmem:[#allocation5 + $0x140] sm:$0xff]
    %v136 = vld [vmem:[#allocation5 + $0x148] sm:$0xff]
    %v137 = vld [vmem:[#allocation5 + $0x150] sm:$0xff]
    %v138 = vld [vmem:[#allocation5 + $0x158] sm:$0xff]
    %v139 = vld [vmem:[#allocation5 + $0x160] sm:$0xff]
    %v140 = vld [vmem:[#allocation5 + $0x168] sm:$0xff]
    %v141 = vld [vmem:[#allocation5 + $0x170] sm:$0xff]
    %v142 = vld [vmem:[#allocation5 + $0x178] sm:$0xff]
    %v143 = vld [vmem:[#allocation5 + $0x180] sm:$0xff]
    %v144 = vld [vmem:[#allocation5 + $0x188] sm:$0xff]
    %v145 = vld [vmem:[#allocation5 + $0x190] sm:$0xff]
    %v146 = vld [vmem:[#allocation5 + $0x198] sm:$0xff]
    %v147 = vld [vmem:[#allocation5 + $0x1a0] sm:$0xff]
    %v148 = vld [vmem:[#allocation5 + $0x1a8] sm:$0xff]
    %v149 = vld [vmem:[#allocation5 + $0x1b0] sm:$0xff]
    %v150 = vld [vmem:[#allocation5 + $0x1b8] sm:$0xff]
    %v151 = vld [vmem:[#allocation5 + $0x1c0] sm:$0xff]
    %v152 = vld [vmem:[#allocation5 + $0x1c8] sm:$0xff]
    %v153 = vld [vmem:[#allocation5 + $0x1d0] sm:$0xff]
    %v154 = vld [vmem:[#allocation5 + $0x1d8] sm:$0xff]
    %v155 = vld [vmem:[#allocation5 + $0x1e0] sm:$0xff]
    %v156 = vld [vmem:[#allocation5 + $0x1e8] sm:$0xff]
    %v157 = vld [vmem:[#allocation5 + $0x1f0] sm:$0xff]
    %v158 = vld [vmem:[#allocation5 + $0x1f8] sm:$0xff]
    %v159 = vld [vmem:[#allocation5 + $0x200] sm:$0xff]
    %v160 = vld [vmem:[#allocation5 + $0x208] sm:$0xff]
    %v161 = vld [vmem:[#allocation5 + $0x210] sm:$0xff]
    %v162 = vld [vmem:[#allocation5 + $0x218] sm:$0xff]
    %v163 = vld [vmem:[#allocation5 + $0x220] sm:$0xff]
    %v164 = vld [vmem:[#allocation5 + $0x228] sm:$0xff]
    %v165 = vld [vmem:[#allocation5 + $0x230] sm:$0xff]
    %v166 = vld [vmem:[#allocation5 + $0x238] sm:$0xff]
    %v167 = vld [vmem:[#allocation5 + $0x240] sm:$0xff]
    %v168 = vld [vmem:[#allocation5 + $0x248] sm:$0xff]
    %v169 = vld [vmem:[#allocation5 + $0x250] sm:$0xff]
    %v170 = vld [vmem:[#allocation5 + $0x258] sm:$0xff]
    %v171 = vld [vmem:[#allocation5 + $0x260] sm:$0xff]
    %v172 = vld [vmem:[#allocation5 + $0x268] sm:$0xff]
    %v173 = vld [vmem:[#allocation5 + $0x270] sm:$0xff]
    %v174 = vld [vmem:[#allocation5 + $0x278] sm:$0xff]
    %v175 = vld [vmem:[#allocation5 + $0x280] sm:$0xff]
    %v176 = vld [vmem:[#allocation5 + $0x288] sm:$0xff]
    %v177 = vld [vmem:[#allocation5 + $0x290] sm:$0xff]
    %v178 = vld [vmem:[#allocation5 + $0x298] sm:$0xff]
    %v179 = vld [vmem:[#allocation5 + $0x2a0] sm:$0xff]
    %v180 = vld [vmem:[#allocation5 + $0x2a8] sm:$0xff]
    %v181 = vld [vmem:[#allocation5 + $0x2b0] sm:$0xff]
    %v182 = vld [vmem:[#allocation5 + $0x2b8] sm:$0xff]
    %v183 = vld [vmem:[#allocation5 + $0x2c0] sm:$0xff]
    %v184 = vld [vmem:[#allocation5 + $0x2c8] sm:$0xff]
    %v185 = vld [vmem:[#allocation5 + $0x2d0] sm:$0xff]
    %v186 = vld [vmem:[#allocation5 + $0x2d8] sm:$0xff]
    %v187 = vld [vmem:[#allocation5 + $0x2e0] sm:$0xff]
    %v188 = vld [vmem:[#allocation5 + $0x2e8] sm:$0xff]
    %v189 = vld [vmem:[#allocation5 + $0x2f0] sm:$0xff]
    %v190 = vld [vmem:[#allocation5 + $0x2f8] sm:$0xff]
    %v191 = vld [vmem:[#allocation5 + $0x300] sm:$0xff]
    %v192 = vld [vmem:[#allocation5 + $0x308] sm:$0xff]
    %v193 = vld [vmem:[#allocation5 + $0x310] sm:$0xff]
    %v194 = vld [vmem:[#allocation5 + $0x318] sm:$0xff]
    %v195 = vld [vmem:[#allocation5 + $0x320] sm:$0xff]
    %v196 = vld [vmem:[#allocation5 + $0x328] sm:$0xff]
    %v197 = vld [vmem:[#allocation5 + $0x330] sm:$0xff]
    %v198 = vld [vmem:[#allocation5 + $0x338] sm:$0xff]
    %v199 = vld [vmem:[#allocation5 + $0x340] sm:$0xff]
    %v200 = vld [vmem:[#allocation5 + $0x348] sm:$0xff]
    %v201 = vld [vmem:[#allocation5 + $0x350] sm:$0xff]
    %v202 = vld [vmem:[#allocation5 + $0x358] sm:$0xff]
    %v203 = vld [vmem:[#allocation5 + $0x360] sm:$0xff]
    %v204 = vld [vmem:[#allocation5 + $0x368] sm:$0xff]
    %v205 = vld [vmem:[#allocation5 + $0x370] sm:$0xff]
    %v206 = vld [vmem:[#allocation5 + $0x378] sm:$0xff]
    %v207 = vld [vmem:[#allocation5 + $0x380] sm:$0xff]
    %v208 = vld [vmem:[#allocation5 + $0x388] sm:$0xff]
    %v209 = vld [vmem:[#allocation5 + $0x390] sm:$0xff]
    %v210 = vld [vmem:[#allocation5 + $0x398] sm:$0xff]
    %v211 = vld [vmem:[#allocation5 + $0x3a0] sm:$0xff]
    %v212 = vld [vmem:[#allocation5 + $0x3a8] sm:$0xff]
    %v213 = vld [vmem:[#allocation5 + $0x3b0] sm:$0xff]
    %v214 = vld [vmem:[#allocation5 + $0x3b8] sm:$0xff]
    %v215 = vld [vmem:[#allocation5 + $0x3c0] sm:$0xff]
    %v216 = vld [vmem:[#allocation5 + $0x3c8] sm:$0xff]
    %v217 = vld [vmem:[#allocation5 + $0x3d0] sm:$0xff]
    %v218 = vld [vmem:[#allocation5 + $0x3d8] sm:$0xff]
    %v219 = vld [vmem:[#allocation5 + $0x3e0] sm:$0xff]
    %v220 = vld [vmem:[#allocation5 + $0x3e8] sm:$0xff]
    %v221 = vld [vmem:[#allocation5 + $0x3f0] sm:$0xff]
    %v222 = vld [vmem:[#allocation5 + $0x3f8] sm:$0xff]
    %v223 = vld [vmem:[#allocation7] sm:$0xf]
    %v224 = vld [vmem:[#allocation8] sm:$0xff]
    %v225 = vld [vmem:[#allocation8 + $0x8] sm:$0xff]
    %v226 = vld [vmem:[#allocation8 + $0x10] sm:$0xff]
    %v227 = vld [vmem:[#allocation8 + $0x18] sm:$0xff]
    %v228 = vld [vmem:[#allocation8 + $0x20] sm:$0xff]
    %v229 = vld [vmem:[#allocation8 + $0x28] sm:$0xff]
    %v230 = vld [vmem:[#allocation8 + $0x30] sm:$0xff]
    %v231 = vld [vmem:[#allocation8 + $0x38] sm:$0xff]
    %v232 = vld [vmem:[#allocation8 + $0x40] sm:$0xff]
    %v233 = vld [vmem:[#allocation8 + $0x48] sm:$0xff]
    %v234 = vld [vmem:[#allocation8 + $0x50] sm:$0xff]
    %v235 = vld [vmem:[#allocation8 + $0x58] sm:$0xff]
    %v236 = vld [vmem:[#allocation8 + $0x60] sm:$0xff]
    %v237 = vld [vmem:[#allocation8 + $0x68] sm:$0xff]
    %v238 = vld [vmem:[#allocation8 + $0x70] sm:$0xff]
    %v239 = vld [vmem:[#allocation8 + $0x78] sm:$0xff]
    %v240 = vld [vmem:[#allocation8 + $0x80] sm:$0xff]
    %v241 = vld [vmem:[#allocation8 + $0x88] sm:$0xff]
    %v242 = vld [vmem:[#allocation8 + $0x90] sm:$0xff]
    %v243 = vld [vmem:[#allocation8 + $0x98] sm:$0xff]
    %v244 = vld [vmem:[#allocation8 + $0xa0] sm:$0xff]
    %v245 = vld [vmem:[#allocation8 + $0xa8] sm:$0xff]
    %v246 = vld [vmem:[#allocation8 + $0xb0] sm:$0xff]
    %v247 = vld [vmem:[#allocation8 + $0xb8] sm:$0xff]
    %v248 = vld [vmem:[#allocation8 + $0xc0] sm:$0xff]
    %v249 = vld [vmem:[#allocation8 + $0xc8] sm:$0xff]
    %v250 = vld [vmem:[#allocation8 + $0xd0] sm:$0xff]
    %v251 = vld [vmem:[#allocation8 + $0xd8] sm:$0xff]
    %v252 = vld [vmem:[#allocation8 + $0xe0] sm:$0xff]
    %v253 = vld [vmem:[#allocation8 + $0xe8] sm:$0xff]
    %v254 = vld [vmem:[#allocation8 + $0xf0] sm:$0xff]
    %v255 = vld [vmem:[#allocation8 + $0xf8] sm:$0xff]
    %v256 = vld [vmem:[#allocation8 + $0x100] sm:$0xff]
    %v257 = vld [vmem:[#allocation8 + $0x108] sm:$0xff]
    %v258 = vld [vmem:[#allocation8 + $0x110] sm:$0xff]
    %v259 = vld [vmem:[#allocation8 + $0x118] sm:$0xff]
    %v260 = vld [vmem:[#allocation8 + $0x120] sm:$0xff]
    %v261 = vld [vmem:[#allocation8 + $0x128] sm:$0xff]
    %v262 = vld [vmem:[#allocation8 + $0x130] sm:$0xff]
    %v263 = vld [vmem:[#allocation8 + $0x138] sm:$0xff]
    %v264 = vld [vmem:[#allocation8 + $0x140] sm:$0xff]
    %v265 = vld [vmem:[#allocation8 + $0x148] sm:$0xff]
    %v266 = vld [vmem:[#allocation8 + $0x150] sm:$0xff]
    %v267 = vld [vmem:[#allocation8 + $0x158] sm:$0xff]
    %v268 = vld [vmem:[#allocation8 + $0x160] sm:$0xff]
    %v269 = vld [vmem:[#allocation8 + $0x168] sm:$0xff]
    %v270 = vld [vmem:[#allocation8 + $0x170] sm:$0xff]
    %v271 = vld [vmem:[#allocation8 + $0x178] sm:$0xff]
    %v272 = vld [vmem:[#allocation8 + $0x180] sm:$0xff]
    %v273 = vld [vmem:[#allocation8 + $0x188] sm:$0xff]
    %v274 = vld [vmem:[#allocation8 + $0x190] sm:$0xff]
    %v275 = vld [vmem:[#allocation8 + $0x198] sm:$0xff]
    %v276 = vld [vmem:[#allocation8 + $0x1a0] sm:$0xff]
    %v277 = vld [vmem:[#allocation8 + $0x1a8] sm:$0xff]
    %v278 = vld [vmem:[#allocation8 + $0x1b0] sm:$0xff]
    %v279 = vld [vmem:[#allocation8 + $0x1b8] sm:$0xff]
    %v280 = vld [vmem:[#allocation8 + $0x1c0] sm:$0xff]
    %v281 = vld [vmem:[#allocation8 + $0x1c8] sm:$0xff]
    %v282 = vld [vmem:[#allocation8 + $0x1d0] sm:$0xff]
    %v283 = vld [vmem:[#allocation8 + $0x1d8] sm:$0xff]
    %v284 = vld [vmem:[#allocation8 + $0x1e0] sm:$0xff]
    %v285 = vld [vmem:[#allocation8 + $0x1e8] sm:$0xff]
    %v286 = vld [vmem:[#allocation8 + $0x1f0] sm:$0xff]
    %v287 = vld [vmem:[#allocation8 + $0x1f8] sm:$0xff]
    %v288 = vld [vmem:[#allocation8 + $0x200] sm:$0xff]
    %v289 = vld [vmem:[#allocation8 + $0x208] sm:$0xff]
    %v290 = vld [vmem:[#allocation8 + $0x210] sm:$0xff]
    %v291 = vld [vmem:[#allocation8 + $0x218] sm:$0xff]
    %v292 = vld [vmem:[#allocation8 + $0x220] sm:$0xff]
    %v293 = vld [vmem:[#allocation8 + $0x228] sm:$0xff]
    %v294 = vld [vmem:[#allocation8 + $0x230] sm:$0xff]
    %v295 = vld [vmem:[#allocation8 + $0x238] sm:$0xff]
    %v296 = vld [vmem:[#allocation8 + $0x240] sm:$0xff]
    %v297 = vld [vmem:[#allocation8 + $0x248] sm:$0xff]
    %v298 = vld [vmem:[#allocation8 + $0x250] sm:$0xff]
    %v299 = vld [vmem:[#allocation8 + $0x258] sm:$0xff]
    %v300 = vld [vmem:[#allocation8 + $0x260] sm:$0xff]
    %v301 = vld [vmem:[#allocation8 + $0x268] sm:$0xff]
    %v302 = vld [vmem:[#allocation8 + $0x270] sm:$0xff]
    %v303 = vld [vmem:[#allocation8 + $0x278] sm:$0xff]
    %v304 = vld [vmem:[#allocation8 + $0x280] sm:$0xff]
    %v305 = vld [vmem:[#allocation8 + $0x288] sm:$0xff]
    %v306 = vld [vmem:[#allocation8 + $0x290] sm:$0xff]
    %v307 = vld [vmem:[#allocation8 + $0x298] sm:$0xff]
    %v308 = vld [vmem:[#allocation8 + $0x2a0] sm:$0xff]
    %v309 = vld [vmem:[#allocation8 + $0x2a8] sm:$0xff]
    %v310 = vld [vmem:[#allocation8 + $0x2b0] sm:$0xff]
    %v311 = vld [vmem:[#allocation8 + $0x2b8] sm:$0xff]
    %v312 = vld [vmem:[#allocation8 + $0x2c0] sm:$0xff]
    %v313 = vld [vmem:[#allocation8 + $0x2c8] sm:$0xff]
    %v314 = vld [vmem:[#allocation8 + $0x2d0] sm:$0xff]
    %v315 = vld [vmem:[#allocation8 + $0x2d8] sm:$0xff]
    %v316 = vld [vmem:[#allocation8 + $0x2e0] sm:$0xff]
    %v317 = vld [vmem:[#allocation8 + $0x2e8] sm:$0xff]
    %v318 = vld [vmem:[#allocation8 + $0x2f0] sm:$0xff]
    %v319 = vld [vmem:[#allocation8 + $0x2f8] sm:$0xff]
    %v320 = vld [vmem:[#allocation8 + $0x300] sm:$0xff]
    %v321 = vld [vmem:[#allocation8 + $0x308] sm:$0xff]
    %v322 = vld [vmem:[#allocation8 + $0x310] sm:$0xff]
    %v323 = vld [vmem:[#allocation8 + $0x318] sm:$0xff]
    %v324 = vld [vmem:[#allocation8 + $0x320] sm:$0xff]
    %v325 = vld [vmem:[#allocation8 + $0x328] sm:$0xff]
    %v326 = vld [vmem:[#allocation8 + $0x330] sm:$0xff]
    %v327 = vld [vmem:[#allocation8 + $0x338] sm:$0xff]
    %v328 = vld [vmem:[#allocation8 + $0x340] sm:$0xff]
    %v329 = vld [vmem:[#allocation8 + $0x348] sm:$0xff]
    %v330 = vld [vmem:[#allocation8 + $0x350] sm:$0xff]
    %v331 = vld [vmem:[#allocation8 + $0x358] sm:$0xff]
    %v332 = vld [vmem:[#allocation8 + $0x360] sm:$0xff]
    %v333 = vld [vmem:[#allocation8 + $0x368] sm:$0xff]
    %v334 = vld [vmem:[#allocation8 + $0x370] sm:$0xff]
    %v335 = vld [vmem:[#allocation8 + $0x378] sm:$0xff]
    %v336 = vld [vmem:[#allocation8 + $0x380] sm:$0xff]
    %v337 = vld [vmem:[#allocation8 + $0x388] sm:$0xff]
    %v338 = vld [vmem:[#allocation8 + $0x390] sm:$0xff]
    %v339 = vld [vmem:[#allocation8 + $0x398] sm:$0xff]
    %v340 = vld [vmem:[#allocation8 + $0x3a0] sm:$0xff]
    %v341 = vld [vmem:[#allocation8 + $0x3a8] sm:$0xff]
    %v342 = vld [vmem:[#allocation8 + $0x3b0] sm:$0xff]
    %v343 = vld [vmem:[#allocation8 + $0x3b8] sm:$0xff]
    %v344 = vld [vmem:[#allocation8 + $0x3c0] sm:$0xff]
    %v345 = vld [vmem:[#allocation8 + $0x3c8] sm:$0xff]
    %v346 = vld [vmem:[#allocation8 + $0x3d0] sm:$0xff]
    %v347 = vld [vmem:[#allocation8 + $0x3d8] sm:$0xff]
    %v348 = vld [vmem:[#allocation8 + $0x3e0] sm:$0xff]
    %v349 = vld [vmem:[#allocation8 + $0x3e8] sm:$0xff]
    %v350 = vld [vmem:[#allocation8 + $0x3f0] sm:$0xff]
    %v351 = vld [vmem:[#allocation8 + $0x3f8] sm:$0xff]
    %v352 = vld [vmem:[#allocation10] sm:$0xf]
    %v353 = vld [vmem:[#allocation2] sm:$0xff]
    %v355 = vperm.slane %v223, 0
    %v356 = vperm.slane %v223, 1
    %v357 = vperm.slane %v223, 2
    %v358 = vperm.slane %v223, 3
    %363 = vmatpush.msra.mxu0 %v155
    %364 = vmatpush.msra.mxu0 %v151
    %365 = vmatpush.msra.mxu0 %v147
    %366 = vmatpush.msra.mxu0 %v143
    %367 = vmatpush.msra.mxu0 %v139
    %368 = vmatpush.msra.mxu0 %v135
    %369 = vmatpush.msra.mxu0 %v131
    %370 = vmatpush.msra.mxu0 %v127
    %371 = vmatpush.msra.mxu0 %v123
    %372 = vmatpush.msra.mxu0 %v119
    %373 = vmatpush.msra.mxu0 %v115
    %374 = vmatpush.msra.mxu0 %v111
    %375 = vmatpush.msra.mxu0 %v107
    %376 = vmatpush.msra.mxu0 %v103
    %377 = vmatpush.msra.mxu0 %v99
    %378 = vmatpush.msra.mxu0 %v95
    %379 = vmatmul.f32.gmra.mxu0 %v353
    %v380 = vpop.f32.mrf.mxu0
    %v381 = vadd.f32 %v355, %v380
    %382 = vdwg.mxu0
    %383 = vmatpush.msra.mxu0 %v219
    %384 = vmatpush.msra.mxu0 %v215
    %385 = vmatpush.msra.mxu0 %v211
    %386 = vmatpush.msra.mxu0 %v207
    %387 = vmatpush.msra.mxu0 %v203
    %388 = vmatpush.msra.mxu0 %v199
    %389 = vmatpush.msra.mxu0 %v195
    %390 = vmatpush.msra.mxu0 %v191
    %391 = vmatpush.msra.mxu0 %v187
    %392 = vmatpush.msra.mxu0 %v183
    %393 = vmatpush.msra.mxu0 %v179
    %394 = vmatpush.msra.mxu0 %v175
    %395 = vmatpush.msra.mxu0 %v171
    %396 = vmatpush.msra.mxu0 %v167
    %397 = vmatpush.msra.mxu0 %v163
    %398 = vmatpush.msra.mxu0 %v159
    %399 = vmatmul.f32.gmra.mxu0 0.0
    %v400 = vpop.f32.mrf.mxu0
    %v401 = vadd.f32 %v381, %v400
    %402 = vdwg.mxu0
    %403 = vmatpush.msra.mxu0 %v156
    %404 = vmatpush.msra.mxu0 %v152
    %405 = vmatpush.msra.mxu0 %v148
    %406 = vmatpush.msra.mxu0 %v144
    %407 = vmatpush.msra.mxu0 %v140
    %408 = vmatpush.msra.mxu0 %v136
    %409 = vmatpush.msra.mxu0 %v132
    %410 = vmatpush.msra.mxu0 %v128
    %411 = vmatpush.msra.mxu0 %v124
    %412 = vmatpush.msra.mxu0 %v120
    %413 = vmatpush.msra.mxu0 %v116
    %414 = vmatpush.msra.mxu0 %v112
    %415 = vmatpush.msra.mxu0 %v108
    %416 = vmatpush.msra.mxu0 %v104
    %417 = vmatpush.msra.mxu0 %v100
    %418 = vmatpush.msra.mxu0 %v96
    %419 = vmatmul.f32.gmra.mxu0 %v353
    %v420 = vpop.f32.mrf.mxu0
    %v421 = vadd.f32 %v356, %v420
    %422 = vdwg.mxu0
    %423 = vmatpush.msra.mxu0 %v220
    %424 = vmatpush.msra.mxu0 %v216
    %425 = vmatpush.msra.mxu0 %v212
    %426 = vmatpush.msra.mxu0 %v208
    %427 = vmatpush.msra.mxu0 %v204
    %428 = vmatpush.msra.mxu0 %v200
    %429 = vmatpush.msra.mxu0 %v196
    %430 = vmatpush.msra.mxu0 %v192
    %431 = vmatpush.msra.mxu0 %v188
    %432 = vmatpush.msra.mxu0 %v184
    %433 = vmatpush.msra.mxu0 %v180
    %434 = vmatpush.msra.mxu0 %v176
    %435 = vmatpush.msra.mxu0 %v172
    %436 = vmatpush.msra.mxu0 %v168
    %437 = vmatpush.msra.mxu0 %v164
    %438 = vmatpush.msra.mxu0 %v160
    %439 = vmatmul.f32.gmra.mxu0 0.0
    %v440 = vpop.f32.mrf.mxu0
    %v441 = vadd.f32 %v421, %v440
    %442 = vdwg.mxu0
    %443 = vmatpush.msra.mxu0 %v157
    %444 = vmatpush.msra.mxu0 %v153
    %445 = vmatpush.msra.mxu0 %v149
    %446 = vmatpush.msra.mxu0 %v145
    %447 = vmatpush.msra.mxu0 %v141
    %448 = vmatpush.msra.mxu0 %v137
    %449 = vmatpush.msra.mxu0 %v133
    %450 = vmatpush.msra.mxu0 %v129
    %451 = vmatpush.msra.mxu0 %v125
    %452 = vmatpush.msra.mxu0 %v121
    %453 = vmatpush.msra.mxu0 %v117
    %454 = vmatpush.msra.mxu0 %v113
    %455 = vmatpush.msra.mxu0 %v109
    %456 = vmatpush.msra.mxu0 %v105
    %457 = vmatpush.msra.mxu0 %v101
    %458 = vmatpush.msra.mxu0 %v97
    %459 = vmatmul.f32.gmra.mxu0 %v353
    %v460 = vpop.f32.mrf.mxu0
    %v461 = vadd.f32 %v357, %v460
    %462 = vdwg.mxu0
    %463 = vmatpush.msra.mxu0 %v221
    %464 = vmatpush.msra.mxu0 %v217
    %465 = vmatpush.msra.mxu0 %v213
    %466 = vmatpush.msra.mxu0 %v209
    %467 = vmatpush.msra.mxu0 %v205
    %468 = vmatpush.msra.mxu0 %v201
    %469 = vmatpush.msra.mxu0 %v197
    %470 = vmatpush.msra.mxu0 %v193
    %471 = vmatpush.msra.mxu0 %v189
    %472 = vmatpush.msra.mxu0 %v185
    %473 = vmatpush.msra.mxu0 %v181
    %474 = vmatpush.msra.mxu0 %v177
    %475 = vmatpush.msra.mxu0 %v173
    %476 = vmatpush.msra.mxu0 %v169
    %477 = vmatpush.msra.mxu0 %v165
    %478 = vmatpush.msra.mxu0 %v161
    %479 = vmatmul.f32.gmra.mxu0 0.0
    %v480 = vpop.f32.mrf.mxu0
    %v481 = vadd.f32 %v461, %v480
    %482 = vdwg.mxu0
    %483 = vmatpush.msra.mxu0 %v158
    %484 = vmatpush.msra.mxu0 %v154
    %485 = vmatpush.msra.mxu0 %v150
    %486 = vmatpush.msra.mxu0 %v146
    %487 = vmatpush.msra.mxu0 %v142
    %488 = vmatpush.msra.mxu0 %v138
    %489 = vmatpush.msra.mxu0 %v134
    %490 = vmatpush.msra.mxu0 %v130
    %491 = vmatpush.msra.mxu0 %v126
    %492 = vmatpush.msra.mxu0 %v122
    %493 = vmatpush.msra.mxu0 %v118
    %494 = vmatpush.msra.mxu0 %v114
    %495 = vmatpush.msra.mxu0 %v110
    %496 = vmatpush.msra.mxu0 %v106
    %497 = vmatpush.msra.mxu0 %v102
    %498 = vmatpush.msra.mxu0 %v98
    %499 = vmatmul.f32.gmra.mxu0 %v353
    %v500 = vpop.f32.mrf.mxu0
    %v501 = vadd.f32 %v358, %v500
    %502 = vdwg.mxu0
    %503 = vmatpush.msra.mxu0 %v222
    %504 = vmatpush.msra.mxu0 %v218
    %505 = vmatpush.msra.mxu0 %v214
    %506 = vmatpush.msra.mxu0 %v210
    %507 = vmatpush.msra.mxu0 %v206
    %508 = vmatpush.msra.mxu0 %v202
    %509 = vmatpush.msra.mxu0 %v198
    %510 = vmatpush.msra.mxu0 %v194
    %511 = vmatpush.msra.mxu0 %v190
    %512 = vmatpush.msra.mxu0 %v186
    %513 = vmatpush.msra.mxu0 %v182
    %514 = vmatpush.msra.mxu0 %v178
    %515 = vmatpush.msra.mxu0 %v174
    %516 = vmatpush.msra.mxu0 %v170
    %517 = vmatpush.msra.mxu0 %v166
    %518 = vmatpush.msra.mxu0 %v162
    %519 = vmatmul.f32.gmra.mxu0 0.0
    %v520 = vpop.f32.mrf.mxu0
    %v521 = vadd.f32 %v501, %v520
    %522 = vdwg.mxu0
    %v523 = vxor.u32 %v401, 2147483648
    %v524 = vmul.f32 %v523, 1.442695
    %v525 = vpow.pop %v524
    %v526 = vadd.f32 %v525, 1.0
    %v527 = vrcp.pop %v526
    %v528 = vmul.f32 %v526, %v527
    %v529 = vsub.f32 1.0, %v528
    %v530 = vmul.f32 %v527, %v529
    %v531 = vadd.f32 %v527, %v530
    %vm532 = vweird.f32 %v526
    %vm533 = vweird.f32 %v527
    %vm534 = vmor %vm532, %vm533
    %v535 = vsel %vm534, %v527, %v531
    %v536 = vand.u32 2147483647, %v526
    %vm537 = vcmp.eq.f32.partialorder %v536, 8.507059e+37
    %v538 = vand.u32 %v526, 2147483648
    %v539 = vor.u32 1.1754944e-38, %v538
    %v540 = vsel %vm537, %v539, %v535
    %v541 = vmul.f32 1.0, %v540
    %v542 = vxor.u32 %v441, 2147483648
    %v543 = vmul.f32 %v542, 1.442695
    %v544 = vpow.pop %v543
    %v545 = vadd.f32 %v544, 1.0
    %v546 = vrcp.pop %v545
    %v547 = vmul.f32 %v545, %v546
    %v548 = vsub.f32 1.0, %v547
    %v549 = vmul.f32 %v546, %v548
    %v550 = vadd.f32 %v546, %v549
    %vm551 = vweird.f32 %v545
    %vm552 = vweird.f32 %v546
    %vm553 = vmor %vm551, %vm552
    %v554 = vsel %vm553, %v546, %v550
    %v555 = vand.u32 2147483647, %v545
    %vm556 = vcmp.eq.f32.partialorder %v555, 8.507059e+37
    %v557 = vand.u32 %v545, 2147483648
    %v558 = vor.u32 1.1754944e-38, %v557
    %v559 = vsel %vm556, %v558, %v554
    %v560 = vmul.f32 1.0, %v559
    %v561 = vtanh.pop %v481
    %v562 = vxor.u32 %v521, 2147483648
    %v563 = vmul.f32 %v562, 1.442695
    %v564 = vpow.pop %v563
    %v565 = vadd.f32 %v564, 1.0
    %v566 = vrcp.pop %v565
    %v567 = vmul.f32 %v565, %v566
    %v568 = vsub.f32 1.0, %v567
    %v569 = vmul.f32 %v566, %v568
    %v570 = vadd.f32 %v566, %v569
    %vm571 = vweird.f32 %v565
    %vm572 = vweird.f32 %v566
    %vm573 = vmor %vm571, %vm572
    %v574 = vsel %vm573, %v566, %v570
    %v575 = vand.u32 2147483647, %v565
    %vm576 = vcmp.eq.f32.partialorder %v575, 8.507059e+37
    %v577 = vand.u32 %v565, 2147483648
    %v578 = vor.u32 1.1754944e-38, %v577
    %v579 = vsel %vm576, %v578, %v574
    %v580 = vmul.f32 1.0, %v579
    %v581 = vmul.f32 %v560, 0.0
    %v582 = vmul.f32 %v541, %v561
    %v583 = vadd.f32 %v581, %v582
    %v584 = vtanh.pop %v583
    %v585 = vmul.f32 %v580, %v584
    %v587 = vperm.slane %v352, 0
    %v588 = vperm.slane %v352, 1
    %v589 = vperm.slane %v352, 2
    %v590 = vperm.slane %v352, 3
    %595 = vmatpush.msra.mxu0 %v284
    %596 = vmatpush.msra.mxu0 %v280
    %597 = vmatpush.msra.mxu0 %v276
    %598 = vmatpush.msra.mxu0 %v272
    %599 = vmatpush.msra.mxu0 %v268
    %600 = vmatpush.msra.mxu0 %v264
    %601 = vmatpush.msra.mxu0 %v260
    %602 = vmatpush.msra.mxu0 %v256
    %603 = vmatpush.msra.mxu0 %v252
    %604 = vmatpush.msra.mxu0 %v248
    %605 = vmatpush.msra.mxu0 %v244
    %606 = vmatpush.msra.mxu0 %v240
    %607 = vmatpush.msra.mxu0 %v236
    %608 = vmatpush.msra.mxu0 %v232
    %609 = vmatpush.msra.mxu0 %v228
    %610 = vmatpush.msra.mxu0 %v224
    %611 = vmatmul.f32.gmra.mxu0 %v585
    %v612 = vpop.f32.mrf.mxu0
    %v613 = vadd.f32 %v587, %v612
    %614 = vdwg.mxu0
    %615 = vmatpush.msra.mxu0 %v348
    %616 = vmatpush.msra.mxu0 %v344
    %617 = vmatpush.msra.mxu0 %v340
    %618 = vmatpush.msra.mxu0 %v336
    %619 = vmatpush.msra.mxu0 %v332
    %620 = vmatpush.msra.mxu0 %v328
    %621 = vmatpush.msra.mxu0 %v324
    %622 = vmatpush.msra.mxu0 %v320
    %623 = vmatpush.msra.mxu0 %v316
    %624 = vmatpush.msra.mxu0 %v312
    %625 = vmatpush.msra.mxu0 %v308
    %626 = vmatpush.msra.mxu0 %v304
    %627 = vmatpush.msra.mxu0 %v300
    %628 = vmatpush.msra.mxu0 %v296
    %629 = vmatpush.msra.mxu0 %v292
    %630 = vmatpush.msra.mxu0 %v288
    %631 = vmatmul.f32.gmra.mxu0 0.0
    %v632 = vpop.f32.mrf.mxu0
    %v633 = vadd.f32 %v613, %v632
    %634 = vdwg.mxu0
    %635 = vmatpush.msra.mxu0 %v285
    %636 = vmatpush.msra.mxu0 %v281
    %637 = vmatpush.msra.mxu0 %v277
    %638 = vmatpush.msra.mxu0 %v273
    %639 = vmatpush.msra.mxu0 %v269
    %640 = vmatpush.msra.mxu0 %v265
    %641 = vmatpush.msra.mxu0 %v261
    %642 = vmatpush.msra.mxu0 %v257
    %643 = vmatpush.msra.mxu0 %v253
    %644 = vmatpush.msra.mxu0 %v249
    %645 = vmatpush.msra.mxu0 %v245
    %646 = vmatpush.msra.mxu0 %v241
    %647 = vmatpush.msra.mxu0 %v237
    %648 = vmatpush.msra.mxu0 %v233
    %649 = vmatpush.msra.mxu0 %v229
    %650 = vmatpush.msra.mxu0 %v225
    %651 = vmatmul.f32.gmra.mxu0 %v585
    %v652 = vpop.f32.mrf.mxu0
    %v653 = vadd.f32 %v588, %v652
    %654 = vdwg.mxu0
    %655 = vmatpush.msra.mxu0 %v349
    %656 = vmatpush.msra.mxu0 %v345
    %657 = vmatpush.msra.mxu0 %v341
    %658 = vmatpush.msra.mxu0 %v337
    %659 = vmatpush.msra.mxu0 %v333
    %660 = vmatpush.msra.mxu0 %v329
    %661 = vmatpush.msra.mxu0 %v325
    %662 = vmatpush.msra.mxu0 %v321
    %663 = vmatpush.msra.mxu0 %v317
    %664 = vmatpush.msra.mxu0 %v313
    %665 = vmatpush.msra.mxu0 %v309
    %666 = vmatpush.msra.mxu0 %v305
    %667 = vmatpush.msra.mxu0 %v301
    %668 = vmatpush.msra.mxu0 %v297
    %669 = vmatpush.msra.mxu0 %v293
    %670 = vmatpush.msra.mxu0 %v289
    %671 = vmatmul.f32.gmra.mxu0 0.0
    %v672 = vpop.f32.mrf.mxu0
    %v673 = vadd.f32 %v653, %v672
    %674 = vdwg.mxu0
    %675 = vmatpush.msra.mxu0 %v286
    %676 = vmatpush.msra.mxu0 %v282
    %677 = vmatpush.msra.mxu0 %v278
    %678 = vmatpush.msra.mxu0 %v274
    %679 = vmatpush.msra.mxu0 %v270
    %680 = vmatpush.msra.mxu0 %v266
    %681 = vmatpush.msra.mxu0 %v262
    %682 = vmatpush.msra.mxu0 %v258
    %683 = vmatpush.msra.mxu0 %v254
    %684 = vmatpush.msra.mxu0 %v250
    %685 = vmatpush.msra.mxu0 %v246
    %686 = vmatpush.msra.mxu0 %v242
    %687 = vmatpush.msra.mxu0 %v238
    %688 = vmatpush.msra.mxu0 %v234
    %689 = vmatpush.msra.mxu0 %v230
    %690 = vmatpush.msra.mxu0 %v226
    %691 = vmatmul.f32.gmra.mxu0 %v585
    %v692 = vpop.f32.mrf.mxu0
    %v693 = vadd.f32 %v589, %v692
    %694 = vdwg.mxu0
    %695 = vmatpush.msra.mxu0 %v350
    %696 = vmatpush.msra.mxu0 %v346
    %697 = vmatpush.msra.mxu0 %v342
    %698 = vmatpush.msra.mxu0 %v338
    %699 = vmatpush.msra.mxu0 %v334
    %700 = vmatpush.msra.mxu0 %v330
    %701 = vmatpush.msra.mxu0 %v326
    %702 = vmatpush.msra.mxu0 %v322
    %703 = vmatpush.msra.mxu0 %v318
    %704 = vmatpush.msra.mxu0 %v314
    %705 = vmatpush.msra.mxu0 %v310
    %706 = vmatpush.msra.mxu0 %v306
    %707 = vmatpush.msra.mxu0 %v302
    %708 = vmatpush.msra.mxu0 %v298
    %709 = vmatpush.msra.mxu0 %v294
    %710 = vmatpush.msra.mxu0 %v290
    %711 = vmatmul.f32.gmra.mxu0 0.0
    %v712 = vpop.f32.mrf.mxu0
    %v713 = vadd.f32 %v693, %v712
    %714 = vdwg.mxu0
    %715 = vmatpush.msra.mxu0 %v287
    %716 = vmatpush.msra.mxu0 %v283
    %717 = vmatpush.msra.mxu0 %v279
    %718 = vmatpush.msra.mxu0 %v275
    %719 = vmatpush.msra.mxu0 %v271
    %720 = vmatpush.msra.mxu0 %v267
    %721 = vmatpush.msra.mxu0 %v263
    %722 = vmatpush.msra.mxu0 %v259
    %723 = vmatpush.msra.mxu0 %v255
    %724 = vmatpush.msra.mxu0 %v251
    %725 = vmatpush.msra.mxu0 %v247
    %726 = vmatpush.msra.mxu0 %v243
    %727 = vmatpush.msra.mxu0 %v239
    %728 = vmatpush.msra.mxu0 %v235
    %729 = vmatpush.msra.mxu0 %v231
    %730 = vmatpush.msra.mxu0 %v227
    %731 = vmatmul.f32.gmra.mxu0 %v585
    %v732 = vpop.f32.mrf.mxu0
    %v733 = vadd.f32 %v590, %v732
    %734 = vdwg.mxu0
    %735 = vmatpush.msra.mxu0 %v351
    %736 = vmatpush.msra.mxu0 %v347
    %737 = vmatpush.msra.mxu0 %v343
    %738 = vmatpush.msra.mxu0 %v339
    %739 = vmatpush.msra.mxu0 %v335
    %740 = vmatpush.msra.mxu0 %v331
    %741 = vmatpush.msra.mxu0 %v327
    %742 = vmatpush.msra.mxu0 %v323
    %743 = vmatpush.msra.mxu0 %v319
    %744 = vmatpush.msra.mxu0 %v315
    %745 = vmatpush.msra.mxu0 %v311
    %746 = vmatpush.msra.mxu0 %v307
    %747 = vmatpush.msra.mxu0 %v303
    %748 = vmatpush.msra.mxu0 %v299
    %749 = vmatpush.msra.mxu0 %v295
    %750 = vmatpush.msra.mxu0 %v291
    %751 = vmatmul.f32.gmra.mxu0 0.0
    %v752 = vpop.f32.mrf.mxu0
    %v753 = vadd.f32 %v733, %v752
    %754 = vdwg.mxu0
    %v755 = vxor.u32 %v633, 2147483648
    %v756 = vmul.f32 %v755, 1.442695
    %v757 = vpow.pop %v756
    %v758 = vadd.f32 %v757, 1.0
    %v759 = vrcp.pop %v758
    %v760 = vmul.f32 %v758, %v759
    %v761 = vsub.f32 1.0, %v760
    %v762 = vmul.f32 %v759, %v761
    %v763 = vadd.f32 %v759, %v762
    %vm764 = vweird.f32 %v758
    %vm765 = vweird.f32 %v759
    %vm766 = vmor %vm764, %vm765
    %v767 = vsel %vm766, %v759, %v763
    %v768 = vand.u32 2147483647, %v758
    %vm769 = vcmp.eq.f32.partialorder %v768, 8.507059e+37
    %v770 = vand.u32 %v758, 2147483648
    %v771 = vor.u32 1.1754944e-38, %v770
    %v772 = vsel %vm769, %v771, %v767
    %v773 = vmul.f32 1.0, %v772
    %v774 = vxor.u32 %v673, 2147483648
    %v775 = vmul.f32 %v774, 1.442695
    %v776 = vpow.pop %v775
    %v777 = vadd.f32 %v776, 1.0
    %v778 = vrcp.pop %v777
    %v779 = vmul.f32 %v777, %v778
    %v780 = vsub.f32 1.0, %v779
    %v781 = vmul.f32 %v778, %v780
    %v782 = vadd.f32 %v778, %v781
    %vm783 = vweird.f32 %v777
    %vm784 = vweird.f32 %v778
    %vm785 = vmor %vm783, %vm784
    %v786 = vsel %vm785, %v778, %v782
    %v787 = vand.u32 2147483647, %v777
    %vm788 = vcmp.eq.f32.partialorder %v787, 8.507059e+37
    %v789 = vand.u32 %v777, 2147483648
    %v790 = vor.u32 1.1754944e-38, %v789
    %v791 = vsel %vm788, %v790, %v786
    %v792 = vmul.f32 1.0, %v791
    %v793 = vtanh.pop %v713
    %v794 = vxor.u32 %v753, 2147483648
    %v795 = vmul.f32 %v794, 1.442695
    %v796 = vpow.pop %v795
    %v797 = vadd.f32 %v796, 1.0
    %v798 = vrcp.pop %v797
    %v799 = vmul.f32 %v797, %v798
    %v800 = vsub.f32 1.0, %v799
    %v801 = vmul.f32 %v798, %v800
    %v802 = vadd.f32 %v798, %v801
    %vm803 = vweird.f32 %v797
    %vm804 = vweird.f32 %v798
    %vm805 = vmor %vm803, %vm804
    %v806 = vsel %vm805, %v798, %v802
    %v807 = vand.u32 2147483647, %v797
    %vm808 = vcmp.eq.f32.partialorder %v807, 8.507059e+37
    %v809 = vand.u32 %v797, 2147483648
    %v810 = vor.u32 1.1754944e-38, %v809
    %v811 = vsel %vm808, %v810, %v806
    %v812 = vmul.f32 1.0, %v811
    %v813 = vmul.f32 %v792, 0.0
    %v814 = vmul.f32 %v773, %v793
    %v815 = vadd.f32 %v813, %v814
    %v816 = vtanh.pop %v815
    %v817 = vmul.f32 %v812, %v816
    %818 = vst [vmem:[#allocation11] sm:$0xff] %v817
    %s819 = scalar_lea.vmem [#allocation2], 8
    %v820 = vld [vmem:[%s819] sm:$0xff]
    %821 = vmatpush.msra.mxu0 %v155
    %822 = vmatpush.msra.mxu0 %v151
    %823 = vmatpush.msra.mxu0 %v147
    %824 = vmatpush.msra.mxu0 %v143
    %825 = vmatpush.msra.mxu0 %v139
    %826 = vmatpush.msra.mxu0 %v135
    %827 = vmatpush.msra.mxu0 %v131
    %828 = vmatpush.msra.mxu0 %v127
    %829 = vmatpush.msra.mxu0 %v123
    %830 = vmatpush.msra.mxu0 %v119
    %831 = vmatpush.msra.mxu0 %v115
    %832 = vmatpush.msra.mxu0 %v111
    %833 = vmatpush.msra.mxu0 %v107
    %834 = vmatpush.msra.mxu0 %v103
    %835 = vmatpush.msra.mxu0 %v99
    %836 = vmatpush.msra.mxu0 %v95
    %837 = vmatmul.f32.gmra.mxu0 %v820
    %v838 = vpop.f32.mrf.mxu0
    %v839 = vadd.f32 %v355, %v838
    %840 = vdwg.mxu0
    %841 = vmatpush.msra.mxu0 %v219
    %842 = vmatpush.msra.mxu0 %v215
    %843 = vmatpush.msra.mxu0 %v211
    %844 = vmatpush.msra.mxu0 %v207
    %845 = vmatpush.msra.mxu0 %v203
    %846 = vmatpush.msra.mxu0 %v199
    %847 = vmatpush.msra.mxu0 %v195
    %848 = vmatpush.msra.mxu0 %v191
    %849 = vmatpush.msra.mxu0 %v187
    %850 = vmatpush.msra.mxu0 %v183
    %851 = vmatpush.msra.mxu0 %v179
    %852 = vmatpush.msra.mxu0 %v175
    %853 = vmatpush.msra.mxu0 %v171
    %854 = vmatpush.msra.mxu0 %v167
    %855 = vmatpush.msra.mxu0 %v163
    %856 = vmatpush.msra.mxu0 %v159
    %857 = vmatmul.f32.gmra.mxu0 %v585
    %v858 = vpop.f32.mrf.mxu0
    %v859 = vadd.f32 %v839, %v858
    %860 = vdwg.mxu0
    %861 = vmatpush.msra.mxu0 %v156
    %862 = vmatpush.msra.mxu0 %v152
    %863 = vmatpush.msra.mxu0 %v148
    %864 = vmatpush.msra.mxu0 %v144
    %865 = vmatpush.msra.mxu0 %v140
    %866 = vmatpush.msra.mxu0 %v136
    %867 = vmatpush.msra.mxu0 %v132
    %868 = vmatpush.msra.mxu0 %v128
    %869 = vmatpush.msra.mxu0 %v124
    %870 = vmatpush.msra.mxu0 %v120
    %871 = vmatpush.msra.mxu0 %v116
    %872 = vmatpush.msra.mxu0 %v112
    %873 = vmatpush.msra.mxu0 %v108
    %874 = vmatpush.msra.mxu0 %v104
    %875 = vmatpush.msra.mxu0 %v100
    %876 = vmatpush.msra.mxu0 %v96
    %877 = vmatmul.f32.gmra.mxu0 %v820
    %v878 = vpop.f32.mrf.mxu0
    %v879 = vadd.f32 %v356, %v878
    %880 = vdwg.mxu0
    %881 = vmatpush.msra.mxu0 %v220
    %882 = vmatpush.msra.mxu0 %v216
    %883 = vmatpush.msra.mxu0 %v212
    %884 = vmatpush.msra.mxu0 %v208
    %885 = vmatpush.msra.mxu0 %v204
    %886 = vmatpush.msra.mxu0 %v200
    %887 = vmatpush.msra.mxu0 %v196
    %888 = vmatpush.msra.mxu0 %v192
    %889 = vmatpush.msra.mxu0 %v188
    %890 = vmatpush.msra.mxu0 %v184
    %891 = vmatpush.msra.mxu0 %v180
    %892 = vmatpush.msra.mxu0 %v176
    %893 = vmatpush.msra.mxu0 %v172
    %894 = vmatpush.msra.mxu0 %v168
    %895 = vmatpush.msra.mxu0 %v164
    %896 = vmatpush.msra.mxu0 %v160
    %897 = vmatmul.f32.gmra.mxu0 %v585
    %v898 = vpop.f32.mrf.mxu0
    %v899 = vadd.f32 %v879, %v898
    %900 = vdwg.mxu0
    %901 = vmatpush.msra.mxu0 %v157
    %902 = vmatpush.msra.mxu0 %v153
    %903 = vmatpush.msra.mxu0 %v149
    %904 = vmatpush.msra.mxu0 %v145
    %905 = vmatpush.msra.mxu0 %v141
    %906 = vmatpush.msra.mxu0 %v137
    %907 = vmatpush.msra.mxu0 %v133
    %908 = vmatpush.msra.mxu0 %v129
    %909 = vmatpush.msra.mxu0 %v125
    %910 = vmatpush.msra.mxu0 %v121
    %911 = vmatpush.msra.mxu0 %v117
    %912 = vmatpush.msra.mxu0 %v113
    %913 = vmatpush.msra.mxu0 %v109
    %914 = vmatpush.msra.mxu0 %v105
    %915 = vmatpush.msra.mxu0 %v101
    %916 = vmatpush.msra.mxu0 %v97
    %917 = vmatmul.f32.gmra.mxu0 %v820
    %v918 = vpop.f32.mrf.mxu0
    %v919 = vadd.f32 %v357, %v918
    %920 = vdwg.mxu0
    %921 = vmatpush.msra.mxu0 %v221
    %922 = vmatpush.msra.mxu0 %v217
    %923 = vmatpush.msra.mxu0 %v213
    %924 = vmatpush.msra.mxu0 %v209
    %925 = vmatpush.msra.mxu0 %v205
    %926 = vmatpush.msra.mxu0 %v201
    %927 = vmatpush.msra.mxu0 %v197
    %928 = vmatpush.msra.mxu0 %v193
    %929 = vmatpush.msra.mxu0 %v189
    %930 = vmatpush.msra.mxu0 %v185
    %931 = vmatpush.msra.mxu0 %v181
    %932 = vmatpush.msra.mxu0 %v177
    %933 = vmatpush.msra.mxu0 %v173
    %934 = vmatpush.msra.mxu0 %v169
    %935 = vmatpush.msra.mxu0 %v165
    %936 = vmatpush.msra.mxu0 %v161
    %937 = vmatmul.f32.gmra.mxu0 %v585
    %v938 = vpop.f32.mrf.mxu0
    %v939 = vadd.f32 %v919, %v938
    %940 = vdwg.mxu0
    %941 = vmatpush.msra.mxu0 %v158
    %942 = vmatpush.msra.mxu0 %v154
    %943 = vmatpush.msra.mxu0 %v150
    %944 = vmatpush.msra.mxu0 %v146
    %945 = vmatpush.msra.mxu0 %v142
    %946 = vmatpush.msra.mxu0 %v138
    %947 = vmatpush.msra.mxu0 %v134
    %948 = vmatpush.msra.mxu0 %v130
    %949 = vmatpush.msra.mxu0 %v126
    %950 = vmatpush.msra.mxu0 %v122
    %951 = vmatpush.msra.mxu0 %v118
    %952 = vmatpush.msra.mxu0 %v114
    %953 = vmatpush.msra.mxu0 %v110
    %954 = vmatpush.msra.mxu0 %v106
    %955 = vmatpush.msra.mxu0 %v102
    %956 = vmatpush.msra.mxu0 %v98
    %957 = vmatmul.f32.gmra.mxu0 %v820
    %v958 = vpop.f32.mrf.mxu0
    %v959 = vadd.f32 %v358, %v958
    %960 = vdwg.mxu0
    %961 = vmatpush.msra.mxu0 %v222
    %962 = vmatpush.msra.mxu0 %v218
    %963 = vmatpush.msra.mxu0 %v214
    %964 = vmatpush.msra.mxu0 %v210
    %965 = vmatpush.msra.mxu0 %v206
    %966 = vmatpush.msra.mxu0 %v202
    %967 = vmatpush.msra.mxu0 %v198
    %968 = vmatpush.msra.mxu0 %v194
    %969 = vmatpush.msra.mxu0 %v190
    %970 = vmatpush.msra.mxu0 %v186
    %971 = vmatpush.msra.mxu0 %v182
    %972 = vmatpush.msra.mxu0 %v178
    %973 = vmatpush.msra.mxu0 %v174
    %974 = vmatpush.msra.mxu0 %v170
    %975 = vmatpush.msra.mxu0 %v166
    %976 = vmatpush.msra.mxu0 %v162
    %977 = vmatmul.f32.gmra.mxu0 %v585
    %v978 = vpop.f32.mrf.mxu0
    %v979 = vadd.f32 %v959, %v978
    %980 = vdwg.mxu0
    %v981 = vxor.u32 %v859, 2147483648
    %v982 = vmul.f32 %v981, 1.442695
    %v983 = vpow.pop %v982
    %v984 = vadd.f32 %v983, 1.0
    %v985 = vrcp.pop %v984
    %v986 = vmul.f32 %v984, %v985
    %v987 = vsub.f32 1.0, %v986
    %v988 = vmul.f32 %v985, %v987
    %v989 = vadd.f32 %v985, %v988
    %vm990 = vweird.f32 %v984
    %vm991 = vweird.f32 %v985
    %vm992 = vmor %vm990, %vm991
    %v993 = vsel %vm992, %v985, %v989
    %v994 = vand.u32 2147483647, %v984
    %vm995 = vcmp.eq.f32.partialorder %v994, 8.507059e+37
    %v996 = vand.u32 %v984, 2147483648
    %v997 = vor.u32 1.1754944e-38, %v996
    %v998 = vsel %vm995, %v997, %v993
    %v999 = vmul.f32 1.0, %v998
    %v1000 = vxor.u32 %v899, 2147483648
    %v1001 = vmul.f32 %v1000, 1.442695
    %v1002 = vpow.pop %v1001
    %v1003 = vadd.f32 %v1002, 1.0
    %v1004 = vrcp.pop %v1003
    %v1005 = vmul.f32 %v1003, %v1004
    %v1006 = vsub.f32 1.0, %v1005
    %v1007 = vmul.f32 %v1004, %v1006
    %v1008 = vadd.f32 %v1004, %v1007
    %vm1009 = vweird.f32 %v1003
    %vm1010 = vweird.f32 %v1004
    %vm1011 = vmor %vm1009, %vm1010
    %v1012 = vsel %vm1011, %v1004, %v1008
    %v1013 = vand.u32 2147483647, %v1003
    %vm1014 = vcmp.eq.f32.partialorder %v1013, 8.507059e+37
    %v1015 = vand.u32 %v1003, 2147483648
    %v1016 = vor.u32 1.1754944e-38, %v1015
    %v1017 = vsel %vm1014, %v1016, %v1012
    %v1018 = vmul.f32 1.0, %v1017
    %v1019 = vtanh.pop %v939
    %v1020 = vxor.u32 %v979, 2147483648
    %v1021 = vmul.f32 %v1020, 1.442695
    %v1022 = vpow.pop %v1021
    %v1023 = vadd.f32 %v1022, 1.0
    %v1024 = vrcp.pop %v1023
    %v1025 = vmul.f32 %v1023, %v1024
    %v1026 = vsub.f32 1.0, %v1025
    %v1027 = vmul.f32 %v1024, %v1026
    %v1028 = vadd.f32 %v1024, %v1027
    %vm1029 = vweird.f32 %v1023
    %vm1030 = vweird.f32 %v1024
    %vm1031 = vmor %vm1029, %vm1030
    %v1032 = vsel %vm1031, %v1024, %v1028
    %v1033 = vand.u32 2147483647, %v1023
    %vm1034 = vcmp.eq.f32.partialorder %v1033, 8.507059e+37
    %v1035 = vand.u32 %v1023, 2147483648
    %v1036 = vor.u32 1.1754944e-38, %v1035
    %v1037 = vsel %vm1034, %v1036, %v1032
    %v1038 = vmul.f32 1.0, %v1037
    %v1039 = vmul.f32 %v1018, %v583
    %v1040 = vmul.f32 %v999, %v1019
    %v1041 = vadd.f32 %v1039, %v1040
    %v1042 = vtanh.pop %v1041
    %v1043 = vmul.f32 %v1038, %v1042
    %1044 = vmatpush.msra.mxu0 %v284
    %1045 = vmatpush.msra.mxu0 %v280
    %1046 = vmatpush.msra.mxu0 %v276
    %1047 = vmatpush.msra.mxu0 %v272
    %1048 = vmatpush.msra.mxu0 %v268
    %1049 = vmatpush.msra.mxu0 %v264
    %1050 = vmatpush.msra.mxu0 %v260
    %1051 = vmatpush.msra.mxu0 %v256
    %1052 = vmatpush.msra.mxu0 %v252
    %1053 = vmatpush.msra.mxu0 %v248
    %1054 = vmatpush.msra.mxu0 %v244
    %1055 = vmatpush.msra.mxu0 %v240
    %1056 = vmatpush.msra.mxu0 %v236
    %1057 = vmatpush.msra.mxu0 %v232
    %1058 = vmatpush.msra.mxu0 %v228
    %1059 = vmatpush.msra.mxu0 %v224
    %1060 = vmatmul.f32.gmra.mxu0 %v1043
    %v1061 = vpop.f32.mrf.mxu0
    %v1062 = vadd.f32 %v587, %v1061
    %1063 = vdwg.mxu0
    %1064 = vmatpush.msra.mxu0 %v348
    %1065 = vmatpush.msra.mxu0 %v344
    %1066 = vmatpush.msra.mxu0 %v340
    %1067 = vmatpush.msra.mxu0 %v336
    %1068 = vmatpush.msra.mxu0 %v332
    %1069 = vmatpush.msra.mxu0 %v328
    %1070 = vmatpush.msra.mxu0 %v324
    %1071 = vmatpush.msra.mxu0 %v320
    %1072 = vmatpush.msra.mxu0 %v316
    %1073 = vmatpush.msra.mxu0 %v312
    %1074 = vmatpush.msra.mxu0 %v308
    %1075 = vmatpush.msra.mxu0 %v304
    %1076 = vmatpush.msra.mxu0 %v300
    %1077 = vmatpush.msra.mxu0 %v296
    %1078 = vmatpush.msra.mxu0 %v292
    %1079 = vmatpush.msra.mxu0 %v288
    %1080 = vmatmul.f32.gmra.mxu0 %v817
    %v1081 = vpop.f32.mrf.mxu0
    %v1082 = vadd.f32 %v1062, %v1081
    %1083 = vdwg.mxu0
    %1084 = vmatpush.msra.mxu0 %v285
    %1085 = vmatpush.msra.mxu0 %v281
    %1086 = vmatpush.msra.mxu0 %v277
    %1087 = vmatpush.msra.mxu0 %v273
    %1088 = vmatpush.msra.mxu0 %v269
    %1089 = vmatpush.msra.mxu0 %v265
    %1090 = vmatpush.msra.mxu0 %v261
    %1091 = vmatpush.msra.mxu0 %v257
    %1092 = vmatpush.msra.mxu0 %v253
    %1093 = vmatpush.msra.mxu0 %v249
    %1094 = vmatpush.msra.mxu0 %v245
    %1095 = vmatpush.msra.mxu0 %v241
    %1096 = vmatpush.msra.mxu0 %v237
    %1097 = vmatpush.msra.mxu0 %v233
    %1098 = vmatpush.msra.mxu0 %v229
    %1099 = vmatpush.msra.mxu0 %v225
    %1100 = vmatmul.f32.gmra.mxu0 %v1043
    %v1101 = vpop.f32.mrf.mxu0
    %v1102 = vadd.f32 %v588, %v1101
    %1103 = vdwg.mxu0
    %1104 = vmatpush.msra.mxu0 %v349
    %1105 = vmatpush.msra.mxu0 %v345
    %1106 = vmatpush.msra.mxu0 %v341
    %1107 = vmatpush.msra.mxu0 %v337
    %1108 = vmatpush.msra.mxu0 %v333
    %1109 = vmatpush.msra.mxu0 %v329
    %1110 = vmatpush.msra.mxu0 %v325
    %1111 = vmatpush.msra.mxu0 %v321
    %1112 = vmatpush.msra.mxu0 %v317
    %1113 = vmatpush.msra.mxu0 %v313
    %1114 = vmatpush.msra.mxu0 %v309
    %1115 = vmatpush.msra.mxu0 %v305
    %1116 = vmatpush.msra.mxu0 %v301
    %1117 = vmatpush.msra.mxu0 %v297
    %1118 = vmatpush.msra.mxu0 %v293
    %1119 = vmatpush.msra.mxu0 %v289
    %1120 = vmatmul.f32.gmra.mxu0 %v817
    %v1121 = vpop.f32.mrf.mxu0
    %v1122 = vadd.f32 %v1102, %v1121
    %1123 = vdwg.mxu0
    %1124 = vmatpush.msra.mxu0 %v286
    %1125 = vmatpush.msra.mxu0 %v282
    %1126 = vmatpush.msra.mxu0 %v278
    %1127 = vmatpush.msra.mxu0 %v274
    %1128 = vmatpush.msra.mxu0 %v270
    %1129 = vmatpush.msra.mxu0 %v266
    %1130 = vmatpush.msra.mxu0 %v262
    %1131 = vmatpush.msra.mxu0 %v258
    %1132 = vmatpush.msra.mxu0 %v254
    %1133 = vmatpush.msra.mxu0 %v250
    %1134 = vmatpush.msra.mxu0 %v246
    %1135 = vmatpush.msra.mxu0 %v242
    %1136 = vmatpush.msra.mxu0 %v238
    %1137 = vmatpush.msra.mxu0 %v234
    %1138 = vmatpush.msra.mxu0 %v230
    %1139 = vmatpush.msra.mxu0 %v226
    %1140 = vmatmul.f32.gmra.mxu0 %v1043
    %v1141 = vpop.f32.mrf.mxu0
    %v1142 = vadd.f32 %v589, %v1141
    %1143 = vdwg.mxu0
    %1144 = vmatpush.msra.mxu0 %v350
    %1145 = vmatpush.msra.mxu0 %v346
    %1146 = vmatpush.msra.mxu0 %v342
    %1147 = vmatpush.msra.mxu0 %v338
    %1148 = vmatpush.msra.mxu0 %v334
    %1149 = vmatpush.msra.mxu0 %v330
    %1150 = vmatpush.msra.mxu0 %v326
    %1151 = vmatpush.msra.mxu0 %v322
    %1152 = vmatpush.msra.mxu0 %v318
    %1153 = vmatpush.msra.mxu0 %v314
    %1154 = vmatpush.msra.mxu0 %v310
    %1155 = vmatpush.msra.mxu0 %v306
    %1156 = vmatpush.msra.mxu0 %v302
    %1157 = vmatpush.msra.mxu0 %v298
    %1158 = vmatpush.msra.mxu0 %v294
    %1159 = vmatpush.msra.mxu0 %v290
    %1160 = vmatmul.f32.gmra.mxu0 %v817
    %v1161 = vpop.f32.mrf.mxu0
    %v1162 = vadd.f32 %v1142, %v1161
    %1163 = vdwg.mxu0
    %1164 = vmatpush.msra.mxu0 %v287
    %1165 = vmatpush.msra.mxu0 %v283
    %1166 = vmatpush.msra.mxu0 %v279
    %1167 = vmatpush.msra.mxu0 %v275
    %1168 = vmatpush.msra.mxu0 %v271
    %1169 = vmatpush.msra.mxu0 %v267
    %1170 = vmatpush.msra.mxu0 %v263
    %1171 = vmatpush.msra.mxu0 %v259
    %1172 = vmatpush.msra.mxu0 %v255
    %1173 = vmatpush.msra.mxu0 %v251
    %1174 = vmatpush.msra.mxu0 %v247
    %1175 = vmatpush.msra.mxu0 %v243
    %1176 = vmatpush.msra.mxu0 %v239
    %1177 = vmatpush.msra.mxu0 %v235
    %1178 = vmatpush.msra.mxu0 %v231
    %1179 = vmatpush.msra.mxu0 %v227
    %1180 = vmatmul.f32.gmra.mxu0 %v1043
    %v1181 = vpop.f32.mrf.mxu0
    %v1182 = vadd.f32 %v590, %v1181
    %1183 = vdwg.mxu0
    %1184 = vmatpush.msra.mxu0 %v351
    %1185 = vmatpush.msra.mxu0 %v347
    %1186 = vmatpush.msra.mxu0 %v343
    %1187 = vmatpush.msra.mxu0 %v339
    %1188 = vmatpush.msra.mxu0 %v335
    %1189 = vmatpush.msra.mxu0 %v331
    %1190 = vmatpush.msra.mxu0 %v327
    %1191 = vmatpush.msra.mxu0 %v323
    %1192 = vmatpush.msra.mxu0 %v319
    %1193 = vmatpush.msra.mxu0 %v315
    %1194 = vmatpush.msra.mxu0 %v311
    %1195 = vmatpush.msra.mxu0 %v307
    %1196 = vmatpush.msra.mxu0 %v303
    %1197 = vmatpush.msra.mxu0 %v299
    %1198 = vmatpush.msra.mxu0 %v295
    %1199 = vmatpush.msra.mxu0 %v291
    %1200 = vmatmul.f32.gmra.mxu0 %v817
    %v1201 = vpop.f32.mrf.mxu0
    %v1202 = vadd.f32 %v1182, %v1201
    %1203 = vdwg.mxu0
    %v1204 = vxor.u32 %v1082, 2147483648
    %v1205 = vmul.f32 %v1204, 1.442695
    %v1206 = vpow.pop %v1205
    %v1207 = vadd.f32 %v1206, 1.0
    %v1208 = vrcp.pop %v1207
    %v1209 = vmul.f32 %v1207, %v1208
    %v1210 = vsub.f32 1.0, %v1209
    %v1211 = vmul.f32 %v1208, %v1210
    %v1212 = vadd.f32 %v1208, %v1211
    %vm1213 = vweird.f32 %v1207
    %vm1214 = vweird.f32 %v1208
    %vm1215 = vmor %vm1213, %vm1214
    %v1216 = vsel %vm1215, %v1208, %v1212
    %v1217 = vand.u32 2147483647, %v1207
    %vm1218 = vcmp.eq.f32.partialorder %v1217, 8.507059e+37
    %v1219 = vand.u32 %v1207, 2147483648
    %v1220 = vor.u32 1.1754944e-38, %v1219
    %v1221 = vsel %vm1218, %v1220, %v1216
    %v1222 = vmul.f32 1.0, %v1221
    %v1223 = vxor.u32 %v1122, 2147483648
    %v1224 = vmul.f32 %v1223, 1.442695
    %v1225 = vpow.pop %v1224
    %v1226 = vadd.f32 %v1225, 1.0
    %v1227 = vrcp.pop %v1226
    %v1228 = vmul.f32 %v1226, %v1227
    %v1229 = vsub.f32 1.0, %v1228
    %v1230 = vmul.f32 %v1227, %v1229
    %v1231 = vadd.f32 %v1227, %v1230
    %vm1232 = vweird.f32 %v1226
    %vm1233 = vweird.f32 %v1227
    %vm1234 = vmor %vm1232, %vm1233
    %v1235 = vsel %vm1234, %v1227, %v1231
    %v1236 = vand.u32 2147483647, %v1226
    %vm1237 = vcmp.eq.f32.partialorder %v1236, 8.507059e+37
    %v1238 = vand.u32 %v1226, 2147483648
    %v1239 = vor.u32 1.1754944e-38, %v1238
    %v1240 = vsel %vm1237, %v1239, %v1235
    %v1241 = vmul.f32 1.0, %v1240
    %v1242 = vtanh.pop %v1162
    %v1243 = vxor.u32 %v1202, 2147483648
    %v1244 = vmul.f32 %v1243, 1.442695
    %v1245 = vpow.pop %v1244
    %v1246 = vadd.f32 %v1245, 1.0
    %v1247 = vrcp.pop %v1246
    %v1248 = vmul.f32 %v1246, %v1247
    %v1249 = vsub.f32 1.0, %v1248
    %v1250 = vmul.f32 %v1247, %v1249
    %v1251 = vadd.f32 %v1247, %v1250
    %vm1252 = vweird.f32 %v1246
    %vm1253 = vweird.f32 %v1247
    %vm1254 = vmor %vm1252, %vm1253
    %v1255 = vsel %vm1254, %v1247, %v1251
    %v1256 = vand.u32 2147483647, %v1246
    %vm1257 = vcmp.eq.f32.partialorder %v1256, 8.507059e+37
    %v1258 = vand.u32 %v1246, 2147483648
    %v1259 = vor.u32 1.1754944e-38, %v1258
    %v1260 = vsel %vm1257, %v1259, %v1255
    %v1261 = vmul.f32 1.0, %v1260
    %v1262 = vmul.f32 %v1241, %v815
    %v1263 = vmul.f32 %v1222, %v1242
    %v1264 = vadd.f32 %v1262, %v1263
    %v1265 = vtanh.pop %v1264
    %v1266 = vmul.f32 %v1261, %v1265
    %s1267 = scalar_lea.vmem [#allocation11], 8
    %1268 = vst [vmem:[%s1267] sm:$0xff] %v1266
    %s1269 = scalar_lea.vmem [#allocation2], 16
    %v1270 = vld [vmem:[%s1269] sm:$0xff]
    %1271 = vmatpush.msra.mxu0 %v155
    %1272 = vmatpush.msra.mxu0 %v151
    %1273 = vmatpush.msra.mxu0 %v147
    %1274 = vmatpush.msra.mxu0 %v143
    %1275 = vmatpush.msra.mxu0 %v139
    %1276 = vmatpush.msra.mxu0 %v135
    %1277 = vmatpush.msra.mxu0 %v131
    %1278 = vmatpush.msra.mxu0 %v127
    %1279 = vmatpush.msra.mxu0 %v123
    %1280 = vmatpush.msra.mxu0 %v119
    %1281 = vmatpush.msra.mxu0 %v115
    %1282 = vmatpush.msra.mxu0 %v111
    %1283 = vmatpush.msra.mxu0 %v107
    %1284 = vmatpush.msra.mxu0 %v103
    %1285 = vmatpush.msra.mxu0 %v99
    %1286 = vmatpush.msra.mxu0 %v95
    %1287 = vmatmul.f32.gmra.mxu0 %v1270
    %v1288 = vpop.f32.mrf.mxu0
    %v1289 = vadd.f32 %v355, %v1288
    %1290 = vdwg.mxu0
    %1291 = vmatpush.msra.mxu0 %v219
    %1292 = vmatpush.msra.mxu0 %v215
    %1293 = vmatpush.msra.mxu0 %v211
    %1294 = vmatpush.msra.mxu0 %v207
    %1295 = vmatpush.msra.mxu0 %v203
    %1296 = vmatpush.msra.mxu0 %v199
    %1297 = vmatpush.msra.mxu0 %v195
    %1298 = vmatpush.msra.mxu0 %v191
    %1299 = vmatpush.msra.mxu0 %v187
    %1300 = vmatpush.msra.mxu0 %v183
    %1301 = vmatpush.msra.mxu0 %v179
    %1302 = vmatpush.msra.mxu0 %v175
    %1303 = vmatpush.msra.mxu0 %v171
    %1304 = vmatpush.msra.mxu0 %v167
    %1305 = vmatpush.msra.mxu0 %v163
    %1306 = vmatpush.msra.mxu0 %v159
    %1307 = vmatmul.f32.gmra.mxu0 %v1043
    %v1308 = vpop.f32.mrf.mxu0
    %v1309 = vadd.f32 %v1289, %v1308
    %1310 = vdwg.mxu0
    %1311 = vmatpush.msra.mxu0 %v156
    %1312 = vmatpush.msra.mxu0 %v152
    %1313 = vmatpush.msra.mxu0 %v148
    %1314 = vmatpush.msra.mxu0 %v144
    %1315 = vmatpush.msra.mxu0 %v140
    %1316 = vmatpush.msra.mxu0 %v136
    %1317 = vmatpush.msra.mxu0 %v132
    %1318 = vmatpush.msra.mxu0 %v128
    %1319 = vmatpush.msra.mxu0 %v124
    %1320 = vmatpush.msra.mxu0 %v120
    %1321 = vmatpush.msra.mxu0 %v116
    %1322 = vmatpush.msra.mxu0 %v112
    %1323 = vmatpush.msra.mxu0 %v108
    %1324 = vmatpush.msra.mxu0 %v104
    %1325 = vmatpush.msra.mxu0 %v100
    %1326 = vmatpush.msra.mxu0 %v96
    %1327 = vmatmul.f32.gmra.mxu0 %v1270
    %v1328 = vpop.f32.mrf.mxu0
    %v1329 = vadd.f32 %v356, %v1328
    %1330 = vdwg.mxu0
    %1331 = vmatpush.msra.mxu0 %v220
    %1332 = vmatpush.msra.mxu0 %v216
    %1333 = vmatpush.msra.mxu0 %v212
    %1334 = vmatpush.msra.mxu0 %v208
    %1335 = vmatpush.msra.mxu0 %v204
    %1336 = vmatpush.msra.mxu0 %v200
    %1337 = vmatpush.msra.mxu0 %v196
    %1338 = vmatpush.msra.mxu0 %v192
    %1339 = vmatpush.msra.mxu0 %v188
    %1340 = vmatpush.msra.mxu0 %v184
    %1341 = vmatpush.msra.mxu0 %v180
    %1342 = vmatpush.msra.mxu0 %v176
    %1343 = vmatpush.msra.mxu0 %v172
    %1344 = vmatpush.msra.mxu0 %v168
    %1345 = vmatpush.msra.mxu0 %v164
    %1346 = vmatpush.msra.mxu0 %v160
    %1347 = vmatmul.f32.gmra.mxu0 %v1043
    %v1348 = vpop.f32.mrf.mxu0
    %v1349 = vadd.f32 %v1329, %v1348
    %1350 = vdwg.mxu0
    %1351 = vmatpush.msra.mxu0 %v157
    %1352 = vmatpush.msra.mxu0 %v153
    %1353 = vmatpush.msra.mxu0 %v149
    %1354 = vmatpush.msra.mxu0 %v145
    %1355 = vmatpush.msra.mxu0 %v141
    %1356 = vmatpush.msra.mxu0 %v137
    %1357 = vmatpush.msra.mxu0 %v133
    %1358 = vmatpush.msra.mxu0 %v129
    %1359 = vmatpush.msra.mxu0 %v125
    %1360 = vmatpush.msra.mxu0 %v121
    %1361 = vmatpush.msra.mxu0 %v117
    %1362 = vmatpush.msra.mxu0 %v113
    %1363 = vmatpush.msra.mxu0 %v109
    %1364 = vmatpush.msra.mxu0 %v105
    %1365 = vmatpush.msra.mxu0 %v101
    %1366 = vmatpush.msra.mxu0 %v97
    %1367 = vmatmul.f32.gmra.mxu0 %v1270
    %v1368 = vpop.f32.mrf.mxu0
    %v1369 = vadd.f32 %v357, %v1368
    %1370 = vdwg.mxu0
    %1371 = vmatpush.msra.mxu0 %v221
    %1372 = vmatpush.msra.mxu0 %v217
    %1373 = vmatpush.msra.mxu0 %v213
    %1374 = vmatpush.msra.mxu0 %v209
    %1375 = vmatpush.msra.mxu0 %v205
    %1376 = vmatpush.msra.mxu0 %v201
    %1377 = vmatpush.msra.mxu0 %v197
    %1378 = vmatpush.msra.mxu0 %v193
    %1379 = vmatpush.msra.mxu0 %v189
    %1380 = vmatpush.msra.mxu0 %v185
    %1381 = vmatpush.msra.mxu0 %v181
    %1382 = vmatpush.msra.mxu0 %v177
    %1383 = vmatpush.msra.mxu0 %v173
    %1384 = vmatpush.msra.mxu0 %v169
    %1385 = vmatpush.msra.mxu0 %v165
    %1386 = vmatpush.msra.mxu0 %v161
    %1387 = vmatmul.f32.gmra.mxu0 %v1043
    %v1388 = vpop.f32.mrf.mxu0
    %v1389 = vadd.f32 %v1369, %v1388
    %1390 = vdwg.mxu0
    %1391 = vmatpush.msra.mxu0 %v158
    %1392 = vmatpush.msra.mxu0 %v154
    %1393 = vmatpush.msra.mxu0 %v150
    %1394 = vmatpush.msra.mxu0 %v146
    %1395 = vmatpush.msra.mxu0 %v142
    %1396 = vmatpush.msra.mxu0 %v138
    %1397 = vmatpush.msra.mxu0 %v134
    %1398 = vmatpush.msra.mxu0 %v130
    %1399 = vmatpush.msra.mxu0 %v126
    %1400 = vmatpush.msra.mxu0 %v122
    %1401 = vmatpush.msra.mxu0 %v118
    %1402 = vmatpush.msra.mxu0 %v114
    %1403 = vmatpush.msra.mxu0 %v110
    %1404 = vmatpush.msra.mxu0 %v106
    %1405 = vmatpush.msra.mxu0 %v102
    %1406 = vmatpush.msra.mxu0 %v98
    %1407 = vmatmul.f32.gmra.mxu0 %v1270
    %v1408 = vpop.f32.mrf.mxu0
    %v1409 = vadd.f32 %v358, %v1408
    %1410 = vdwg.mxu0
    %1411 = vmatpush.msra.mxu0 %v222
    %1412 = vmatpush.msra.mxu0 %v218
    %1413 = vmatpush.msra.mxu0 %v214
    %1414 = vmatpush.msra.mxu0 %v210
    %1415 = vmatpush.msra.mxu0 %v206
    %1416 = vmatpush.msra.mxu0 %v202
    %1417 = vmatpush.msra.mxu0 %v198
    %1418 = vmatpush.msra.mxu0 %v194
    %1419 = vmatpush.msra.mxu0 %v190
    %1420 = vmatpush.msra.mxu0 %v186
    %1421 = vmatpush.msra.mxu0 %v182
    %1422 = vmatpush.msra.mxu0 %v178
    %1423 = vmatpush.msra.mxu0 %v174
    %1424 = vmatpush.msra.mxu0 %v170
    %1425 = vmatpush.msra.mxu0 %v166
    %1426 = vmatpush.msra.mxu0 %v162
    %1427 = vmatmul.f32.gmra.mxu0 %v1043
    %v1428 = vpop.f32.mrf.mxu0
    %v1429 = vadd.f32 %v1409, %v1428
    %1430 = vdwg.mxu0
    %v1431 = vxor.u32 %v1309, 2147483648
    %v1432 = vmul.f32 %v1431, 1.442695
    %v1433 = vpow.pop %v1432
    %v1434 = vadd.f32 %v1433, 1.0
    %v1435 = vrcp.pop %v1434
    %v1436 = vmul.f32 %v1434, %v1435
    %v1437 = vsub.f32 1.0, %v1436
    %v1438 = vmul.f32 %v1435, %v1437
    %v1439 = vadd.f32 %v1435, %v1438
    %vm1440 = vweird.f32 %v1434
    %vm1441 = vweird.f32 %v1435
    %vm1442 = vmor %vm1440, %vm1441
    %v1443 = vsel %vm1442, %v1435, %v1439
    %v1444 = vand.u32 2147483647, %v1434
    %vm1445 = vcmp.eq.f32.partialorder %v1444, 8.507059e+37
    %v1446 = vand.u32 %v1434, 2147483648
    %v1447 = vor.u32 1.1754944e-38, %v1446
    %v1448 = vsel %vm1445, %v1447, %v1443
    %v1449 = vmul.f32 1.0, %v1448
    %v1450 = vxor.u32 %v1349, 2147483648
    %v1451 = vmul.f32 %v1450, 1.442695
    %v1452 = vpow.pop %v1451
    %v1453 = vadd.f32 %v1452, 1.0
    %v1454 = vrcp.pop %v1453
    %v1455 = vmul.f32 %v1453, %v1454
    %v1456 = vsub.f32 1.0, %v1455
    %v1457 = vmul.f32 %v1454, %v1456
    %v1458 = vadd.f32 %v1454, %v1457
    %vm1459 = vweird.f32 %v1453
    %vm1460 = vweird.f32 %v1454
    %vm1461 = vmor %vm1459, %vm1460
    %v1462 = vsel %vm1461, %v1454, %v1458
    %v1463 = vand.u32 2147483647, %v1453
    %vm1464 = vcmp.eq.f32.partialorder %v1463, 8.507059e+37
    %v1465 = vand.u32 %v1453, 2147483648
    %v1466 = vor.u32 1.1754944e-38, %v1465
    %v1467 = vsel %vm1464, %v1466, %v1462
    %v1468 = vmul.f32 1.0, %v1467
    %v1469 = vtanh.pop %v1389
    %v1470 = vxor.u32 %v1429, 2147483648
    %v1471 = vmul.f32 %v1470, 1.442695
    %v1472 = vpow.pop %v1471
    %v1473 = vadd.f32 %v1472, 1.0
    %v1474 = vrcp.pop %v1473
    %v1475 = vmul.f32 %v1473, %v1474
    %v1476 = vsub.f32 1.0, %v1475
    %v1477 = vmul.f32 %v1474, %v1476
    %v1478 = vadd.f32 %v1474, %v1477
    %vm1479 = vweird.f32 %v1473
    %vm1480 = vweird.f32 %v1474
    %vm1481 = vmor %vm1479, %vm1480
    %v1482 = vsel %vm1481, %v1474, %v1478
    %v1483 = vand.u32 2147483647, %v1473
    %vm1484 = vcmp.eq.f32.partialorder %v1483, 8.507059e+37
    %v1485 = vand.u32 %v1473, 2147483648
    %v1486 = vor.u32 1.1754944e-38, %v1485
    %v1487 = vsel %vm1484, %v1486, %v1482
    %v1488 = vmul.f32 1.0, %v1487
    %v1489 = vmul.f32 %v1468, %v1041
    %v1490 = vmul.f32 %v1449, %v1469
    %v1491 = vadd.f32 %v1489, %v1490
    %v1492 = vtanh.pop %v1491
    %v1493 = vmul.f32 %v1488, %v1492
    %1494 = vmatpush.msra.mxu0 %v284
    %1495 = vmatpush.msra.mxu0 %v280
    %1496 = vmatpush.msra.mxu0 %v276
    %1497 = vmatpush.msra.mxu0 %v272
    %1498 = vmatpush.msra.mxu0 %v268
    %1499 = vmatpush.msra.mxu0 %v264
    %1500 = vmatpush.msra.mxu0 %v260
    %1501 = vmatpush.msra.mxu0 %v256
    %1502 = vmatpush.msra.mxu0 %v252
    %1503 = vmatpush.msra.mxu0 %v248
    %1504 = vmatpush.msra.mxu0 %v244
    %1505 = vmatpush.msra.mxu0 %v240
    %1506 = vmatpush.msra.mxu0 %v236
    %1507 = vmatpush.msra.mxu0 %v232
    %1508 = vmatpush.msra.mxu0 %v228
    %1509 = vmatpush.msra.mxu0 %v224
    %1510 = vmatmul.f32.gmra.mxu0 %v1493
    %v1511 = vpop.f32.mrf.mxu0
    %v1512 = vadd.f32 %v587, %v1511
    %1513 = vdwg.mxu0
    %1514 = vmatpush.msra.mxu0 %v348
    %1515 = vmatpush.msra.mxu0 %v344
    %1516 = vmatpush.msra.mxu0 %v340
    %1517 = vmatpush.msra.mxu0 %v336
    %1518 = vmatpush.msra.mxu0 %v332
    %1519 = vmatpush.msra.mxu0 %v328
    %1520 = vmatpush.msra.mxu0 %v324
    %1521 = vmatpush.msra.mxu0 %v320
    %1522 = vmatpush.msra.mxu0 %v316
    %1523 = vmatpush.msra.mxu0 %v312
    %1524 = vmatpush.msra.mxu0 %v308
    %1525 = vmatpush.msra.mxu0 %v304
    %1526 = vmatpush.msra.mxu0 %v300
    %1527 = vmatpush.msra.mxu0 %v296
    %1528 = vmatpush.msra.mxu0 %v292
    %1529 = vmatpush.msra.mxu0 %v288
    %1530 = vmatmul.f32.gmra.mxu0 %v1266
    %v1531 = vpop.f32.mrf.mxu0
    %v1532 = vadd.f32 %v1512, %v1531
    %1533 = vdwg.mxu0
    %1534 = vmatpush.msra.mxu0 %v285
    %1535 = vmatpush.msra.mxu0 %v281
    %1536 = vmatpush.msra.mxu0 %v277
    %1537 = vmatpush.msra.mxu0 %v273
    %1538 = vmatpush.msra.mxu0 %v269
    %1539 = vmatpush.msra.mxu0 %v265
    %1540 = vmatpush.msra.mxu0 %v261
    %1541 = vmatpush.msra.mxu0 %v257
    %1542 = vmatpush.msra.mxu0 %v253
    %1543 = vmatpush.msra.mxu0 %v249
    %1544 = vmatpush.msra.mxu0 %v245
    %1545 = vmatpush.msra.mxu0 %v241
    %1546 = vmatpush.msra.mxu0 %v237
    %1547 = vmatpush.msra.mxu0 %v233
    %1548 = vmatpush.msra.mxu0 %v229
    %1549 = vmatpush.msra.mxu0 %v225
    %1550 = vmatmul.f32.gmra.mxu0 %v1493
    %v1551 = vpop.f32.mrf.mxu0
    %v1552 = vadd.f32 %v588, %v1551
    %1553 = vdwg.mxu0
    %1554 = vmatpush.msra.mxu0 %v349
    %1555 = vmatpush.msra.mxu0 %v345
    %1556 = vmatpush.msra.mxu0 %v341
    %1557 = vmatpush.msra.mxu0 %v337
    %1558 = vmatpush.msra.mxu0 %v333
    %1559 = vmatpush.msra.mxu0 %v329
    %1560 = vmatpush.msra.mxu0 %v325
    %1561 = vmatpush.msra.mxu0 %v321
    %1562 = vmatpush.msra.mxu0 %v317
    %1563 = vmatpush.msra.mxu0 %v313
    %1564 = vmatpush.msra.mxu0 %v309
    %1565 = vmatpush.msra.mxu0 %v305
    %1566 = vmatpush.msra.mxu0 %v301
    %1567 = vmatpush.msra.mxu0 %v297
    %1568 = vmatpush.msra.mxu0 %v293
    %1569 = vmatpush.msra.mxu0 %v289
    %1570 = vmatmul.f32.gmra.mxu0 %v1266
    %v1571 = vpop.f32.mrf.mxu0
    %v1572 = vadd.f32 %v1552, %v1571
    %1573 = vdwg.mxu0
    %1574 = vmatpush.msra.mxu0 %v286
    %1575 = vmatpush.msra.mxu0 %v282
    %1576 = vmatpush.msra.mxu0 %v278
    %1577 = vmatpush.msra.mxu0 %v274
    %1578 = vmatpush.msra.mxu0 %v270
    %1579 = vmatpush.msra.mxu0 %v266
    %1580 = vmatpush.msra.mxu0 %v262
    %1581 = vmatpush.msra.mxu0 %v258
    %1582 = vmatpush.msra.mxu0 %v254
    %1583 = vmatpush.msra.mxu0 %v250
    %1584 = vmatpush.msra.mxu0 %v246
    %1585 = vmatpush.msra.mxu0 %v242
    %1586 = vmatpush.msra.mxu0 %v238
    %1587 = vmatpush.msra.mxu0 %v234
    %1588 = vmatpush.msra.mxu0 %v230
    %1589 = vmatpush.msra.mxu0 %v226
    %1590 = vmatmul.f32.gmra.mxu0 %v1493
    %v1591 = vpop.f32.mrf.mxu0
    %v1592 = vadd.f32 %v589, %v1591
    %1593 = vdwg.mxu0
    %1594 = vmatpush.msra.mxu0 %v350
    %1595 = vmatpush.msra.mxu0 %v346
    %1596 = vmatpush.msra.mxu0 %v342
    %1597 = vmatpush.msra.mxu0 %v338
    %1598 = vmatpush.msra.mxu0 %v334
    %1599 = vmatpush.msra.mxu0 %v330
    %1600 = vmatpush.msra.mxu0 %v326
    %1601 = vmatpush.msra.mxu0 %v322
    %1602 = vmatpush.msra.mxu0 %v318
    %1603 = vmatpush.msra.mxu0 %v314
    %1604 = vmatpush.msra.mxu0 %v310
    %1605 = vmatpush.msra.mxu0 %v306
    %1606 = vmatpush.msra.mxu0 %v302
    %1607 = vmatpush.msra.mxu0 %v298
    %1608 = vmatpush.msra.mxu0 %v294
    %1609 = vmatpush.msra.mxu0 %v290
    %1610 = vmatmul.f32.gmra.mxu0 %v1266
    %v1611 = vpop.f32.mrf.mxu0
    %v1612 = vadd.f32 %v1592, %v1611
    %1613 = vdwg.mxu0
    %1614 = vmatpush.msra.mxu0 %v287
    %1615 = vmatpush.msra.mxu0 %v283
    %1616 = vmatpush.msra.mxu0 %v279
    %1617 = vmatpush.msra.mxu0 %v275
    %1618 = vmatpush.msra.mxu0 %v271
    %1619 = vmatpush.msra.mxu0 %v267
    %1620 = vmatpush.msra.mxu0 %v263
    %1621 = vmatpush.msra.mxu0 %v259
    %1622 = vmatpush.msra.mxu0 %v255
    %1623 = vmatpush.msra.mxu0 %v251
    %1624 = vmatpush.msra.mxu0 %v247
    %1625 = vmatpush.msra.mxu0 %v243
    %1626 = vmatpush.msra.mxu0 %v239
    %1627 = vmatpush.msra.mxu0 %v235
    %1628 = vmatpush.msra.mxu0 %v231
    %1629 = vmatpush.msra.mxu0 %v227
    %1630 = vmatmul.f32.gmra.mxu0 %v1493
    %v1631 = vpop.f32.mrf.mxu0
    %v1632 = vadd.f32 %v590, %v1631
    %1633 = vdwg.mxu0
    %1634 = vmatpush.msra.mxu0 %v351
    %1635 = vmatpush.msra.mxu0 %v347
    %1636 = vmatpush.msra.mxu0 %v343
    %1637 = vmatpush.msra.mxu0 %v339
    %1638 = vmatpush.msra.mxu0 %v335
    %1639 = vmatpush.msra.mxu0 %v331
    %1640 = vmatpush.msra.mxu0 %v327
    %1641 = vmatpush.msra.mxu0 %v323
    %1642 = vmatpush.msra.mxu0 %v319
    %1643 = vmatpush.msra.mxu0 %v315
    %1644 = vmatpush.msra.mxu0 %v311
    %1645 = vmatpush.msra.mxu0 %v307
    %1646 = vmatpush.msra.mxu0 %v303
    %1647 = vmatpush.msra.mxu0 %v299
    %1648 = vmatpush.msra.mxu0 %v295
    %1649 = vmatpush.msra.mxu0 %v291
    %1650 = vmatmul.f32.gmra.mxu0 %v1266
    %v1651 = vpop.f32.mrf.mxu0
    %v1652 = vadd.f32 %v1632, %v1651
    %1653 = vdwg.mxu0
    %v1654 = vxor.u32 %v1532, 2147483648
    %v1655 = vmul.f32 %v1654, 1.442695
    %v1656 = vpow.pop %v1655
    %v1657 = vadd.f32 %v1656, 1.0
    %v1658 = vrcp.pop %v1657
    %v1659 = vmul.f32 %v1657, %v1658
    %v1660 = vsub.f32 1.0, %v1659
    %v1661 = vmul.f32 %v1658, %v1660
    %v1662 = vadd.f32 %v1658, %v1661
    %vm1663 = vweird.f32 %v1657
    %vm1664 = vweird.f32 %v1658
    %vm1665 = vmor %vm1663, %vm1664
    %v1666 = vsel %vm1665, %v1658, %v1662
    %v1667 = vand.u32 2147483647, %v1657
    %vm1668 = vcmp.eq.f32.partialorder %v1667, 8.507059e+37
    %v1669 = vand.u32 %v1657, 2147483648
    %v1670 = vor.u32 1.1754944e-38, %v1669
    %v1671 = vsel %vm1668, %v1670, %v1666
    %v1672 = vmul.f32 1.0, %v1671
    %v1673 = vxor.u32 %v1572, 2147483648
    %v1674 = vmul.f32 %v1673, 1.442695
    %v1675 = vpow.pop %v1674
    %v1676 = vadd.f32 %v1675, 1.0
    %v1677 = vrcp.pop %v1676
    %v1678 = vmul.f32 %v1676, %v1677
    %v1679 = vsub.f32 1.0, %v1678
    %v1680 = vmul.f32 %v1677, %v1679
    %v1681 = vadd.f32 %v1677, %v1680
    %vm1682 = vweird.f32 %v1676
    %vm1683 = vweird.f32 %v1677
    %vm1684 = vmor %vm1682, %vm1683
    %v1685 = vsel %vm1684, %v1677, %v1681
    %v1686 = vand.u32 2147483647, %v1676
    %vm1687 = vcmp.eq.f32.partialorder %v1686, 8.507059e+37
    %v1688 = vand.u32 %v1676, 2147483648
    %v1689 = vor.u32 1.1754944e-38, %v1688
    %v1690 = vsel %vm1687, %v1689, %v1685
    %v1691 = vmul.f32 1.0, %v1690
    %v1692 = vtanh.pop %v1612
    %v1693 = vxor.u32 %v1652, 2147483648
    %v1694 = vmul.f32 %v1693, 1.442695
    %v1695 = vpow.pop %v1694
    %v1696 = vadd.f32 %v1695, 1.0
    %v1697 = vrcp.pop %v1696
    %v1698 = vmul.f32 %v1696, %v1697
    %v1699 = vsub.f32 1.0, %v1698
    %v1700 = vmul.f32 %v1697, %v1699
    %v1701 = vadd.f32 %v1697, %v1700
    %vm1702 = vweird.f32 %v1696
    %vm1703 = vweird.f32 %v1697
    %vm1704 = vmor %vm1702, %vm1703
    %v1705 = vsel %vm1704, %v1697, %v1701
    %v1706 = vand.u32 2147483647, %v1696
    %vm1707 = vcmp.eq.f32.partialorder %v1706, 8.507059e+37
    %v1708 = vand.u32 %v1696, 2147483648
    %v1709 = vor.u32 1.1754944e-38, %v1708
    %v1710 = vsel %vm1707, %v1709, %v1705
    %v1711 = vmul.f32 1.0, %v1710
    %v1712 = vmul.f32 %v1691, %v1264
    %v1713 = vmul.f32 %v1672, %v1692
    %v1714 = vadd.f32 %v1712, %v1713
    %v1715 = vtanh.pop %v1714
    %v1716 = vmul.f32 %v1711, %v1715
    %s1717 = scalar_lea.vmem [#allocation11], 16
    %1718 = vst [vmem:[%s1717] sm:$0xff] %v1716
    %s1719 = scalar_lea.vmem [#allocation2], 24
    %v1720 = vld [vmem:[%s1719] sm:$0xff]
    %1721 = vmatpush.msra.mxu0 %v155
    %1722 = vmatpush.msra.mxu0 %v151
    %1723 = vmatpush.msra.mxu0 %v147
    %1724 = vmatpush.msra.mxu0 %v143
    %1725 = vmatpush.msra.mxu0 %v139
    %1726 = vmatpush.msra.mxu0 %v135
    %1727 = vmatpush.msra.mxu0 %v131
    %1728 = vmatpush.msra.mxu0 %v127
    %1729 = vmatpush.msra.mxu0 %v123
    %1730 = vmatpush.msra.mxu0 %v119
    %1731 = vmatpush.msra.mxu0 %v115
    %1732 = vmatpush.msra.mxu0 %v111
    %1733 = vmatpush.msra.mxu0 %v107
    %1734 = vmatpush.msra.mxu0 %v103
    %1735 = vmatpush.msra.mxu0 %v99
    %1736 = vmatpush.msra.mxu0 %v95
    %1737 = vmatmul.f32.gmra.mxu0 %v1720
    %v1738 = vpop.f32.mrf.mxu0
    %v1739 = vadd.f32 %v355, %v1738
    %1740 = vdwg.mxu0
    %1741 = vmatpush.msra.mxu0 %v219
    %1742 = vmatpush.msra.mxu0 %v215
    %1743 = vmatpush.msra.mxu0 %v211
    %1744 = vmatpush.msra.mxu0 %v207
    %1745 = vmatpush.msra.mxu0 %v203
    %1746 = vmatpush.msra.mxu0 %v199
    %1747 = vmatpush.msra.mxu0 %v195
    %1748 = vmatpush.msra.mxu0 %v191
    %1749 = vmatpush.msra.mxu0 %v187
    %1750 = vmatpush.msra.mxu0 %v183
    %1751 = vmatpush.msra.mxu0 %v179
    %1752 = vmatpush.msra.mxu0 %v175
    %1753 = vmatpush.msra.mxu0 %v171
    %1754 = vmatpush.msra.mxu0 %v167
    %1755 = vmatpush.msra.mxu0 %v163
    %1756 = vmatpush.msra.mxu0 %v159
    %1757 = vmatmul.f32.gmra.mxu0 %v1493
    %v1758 = vpop.f32.mrf.mxu0
    %v1759 = vadd.f32 %v1739, %v1758
    %1760 = vdwg.mxu0
    %1761 = vmatpush.msra.mxu0 %v156
    %1762 = vmatpush.msra.mxu0 %v152
    %1763 = vmatpush.msra.mxu0 %v148
    %1764 = vmatpush.msra.mxu0 %v144
    %1765 = vmatpush.msra.mxu0 %v140
    %1766 = vmatpush.msra.mxu0 %v136
    %1767 = vmatpush.msra.mxu0 %v132
    %1768 = vmatpush.msra.mxu0 %v128
    %1769 = vmatpush.msra.mxu0 %v124
    %1770 = vmatpush.msra.mxu0 %v120
    %1771 = vmatpush.msra.mxu0 %v116
    %1772 = vmatpush.msra.mxu0 %v112
    %1773 = vmatpush.msra.mxu0 %v108
    %1774 = vmatpush.msra.mxu0 %v104
    %1775 = vmatpush.msra.mxu0 %v100
    %1776 = vmatpush.msra.mxu0 %v96
    %1777 = vmatmul.f32.gmra.mxu0 %v1720
    %v1778 = vpop.f32.mrf.mxu0
    %v1779 = vadd.f32 %v356, %v1778
    %1780 = vdwg.mxu0
    %1781 = vmatpush.msra.mxu0 %v220
    %1782 = vmatpush.msra.mxu0 %v216
    %1783 = vmatpush.msra.mxu0 %v212
    %1784 = vmatpush.msra.mxu0 %v208
    %1785 = vmatpush.msra.mxu0 %v204
    %1786 = vmatpush.msra.mxu0 %v200
    %1787 = vmatpush.msra.mxu0 %v196
    %1788 = vmatpush.msra.mxu0 %v192
    %1789 = vmatpush.msra.mxu0 %v188
    %1790 = vmatpush.msra.mxu0 %v184
    %1791 = vmatpush.msra.mxu0 %v180
    %1792 = vmatpush.msra.mxu0 %v176
    %1793 = vmatpush.msra.mxu0 %v172
    %1794 = vmatpush.msra.mxu0 %v168
    %1795 = vmatpush.msra.mxu0 %v164
    %1796 = vmatpush.msra.mxu0 %v160
    %1797 = vmatmul.f32.gmra.mxu0 %v1493
    %v1798 = vpop.f32.mrf.mxu0
    %v1799 = vadd.f32 %v1779, %v1798
    %1800 = vdwg.mxu0
    %1801 = vmatpush.msra.mxu0 %v157
    %1802 = vmatpush.msra.mxu0 %v153
    %1803 = vmatpush.msra.mxu0 %v149
    %1804 = vmatpush.msra.mxu0 %v145
    %1805 = vmatpush.msra.mxu0 %v141
    %1806 = vmatpush.msra.mxu0 %v137
    %1807 = vmatpush.msra.mxu0 %v133
    %1808 = vmatpush.msra.mxu0 %v129
    %1809 = vmatpush.msra.mxu0 %v125
    %1810 = vmatpush.msra.mxu0 %v121
    %1811 = vmatpush.msra.mxu0 %v117
    %1812 = vmatpush.msra.mxu0 %v113
    %1813 = vmatpush.msra.mxu0 %v109
    %1814 = vmatpush.msra.mxu0 %v105
    %1815 = vmatpush.msra.mxu0 %v101
    %1816 = vmatpush.msra.mxu0 %v97
    %1817 = vmatmul.f32.gmra.mxu0 %v1720
    %v1818 = vpop.f32.mrf.mxu0
    %v1819 = vadd.f32 %v357, %v1818
    %1820 = vdwg.mxu0
    %1821 = vmatpush.msra.mxu0 %v221
    %1822 = vmatpush.msra.mxu0 %v217
    %1823 = vmatpush.msra.mxu0 %v213
    %1824 = vmatpush.msra.mxu0 %v209
    %1825 = vmatpush.msra.mxu0 %v205
    %1826 = vmatpush.msra.mxu0 %v201
    %1827 = vmatpush.msra.mxu0 %v197
    %1828 = vmatpush.msra.mxu0 %v193
    %1829 = vmatpush.msra.mxu0 %v189
    %1830 = vmatpush.msra.mxu0 %v185
    %1831 = vmatpush.msra.mxu0 %v181
    %1832 = vmatpush.msra.mxu0 %v177
    %1833 = vmatpush.msra.mxu0 %v173
    %1834 = vmatpush.msra.mxu0 %v169
    %1835 = vmatpush.msra.mxu0 %v165
    %1836 = vmatpush.msra.mxu0 %v161
    %1837 = vmatmul.f32.gmra.mxu0 %v1493
    %v1838 = vpop.f32.mrf.mxu0
    %v1839 = vadd.f32 %v1819, %v1838
    %1840 = vdwg.mxu0
    %1841 = vmatpush.msra.mxu0 %v158
    %1842 = vmatpush.msra.mxu0 %v154
    %1843 = vmatpush.msra.mxu0 %v150
    %1844 = vmatpush.msra.mxu0 %v146
    %1845 = vmatpush.msra.mxu0 %v142
    %1846 = vmatpush.msra.mxu0 %v138
    %1847 = vmatpush.msra.mxu0 %v134
    %1848 = vmatpush.msra.mxu0 %v130
    %1849 = vmatpush.msra.mxu0 %v126
    %1850 = vmatpush.msra.mxu0 %v122
    %1851 = vmatpush.msra.mxu0 %v118
    %1852 = vmatpush.msra.mxu0 %v114
    %1853 = vmatpush.msra.mxu0 %v110
    %1854 = vmatpush.msra.mxu0 %v106
    %1855 = vmatpush.msra.mxu0 %v102
    %1856 = vmatpush.msra.mxu0 %v98
    %1857 = vmatmul.f32.gmra.mxu0 %v1720
    %v1858 = vpop.f32.mrf.mxu0
    %v1859 = vadd.f32 %v358, %v1858
    %1860 = vdwg.mxu0
    %1861 = vmatpush.msra.mxu0 %v222
    %1862 = vmatpush.msra.mxu0 %v218
    %1863 = vmatpush.msra.mxu0 %v214
    %1864 = vmatpush.msra.mxu0 %v210
    %1865 = vmatpush.msra.mxu0 %v206
    %1866 = vmatpush.msra.mxu0 %v202
    %1867 = vmatpush.msra.mxu0 %v198
    %1868 = vmatpush.msra.mxu0 %v194
    %1869 = vmatpush.msra.mxu0 %v190
    %1870 = vmatpush.msra.mxu0 %v186
    %1871 = vmatpush.msra.mxu0 %v182
    %1872 = vmatpush.msra.mxu0 %v178
    %1873 = vmatpush.msra.mxu0 %v174
    %1874 = vmatpush.msra.mxu0 %v170
    %1875 = vmatpush.msra.mxu0 %v166
    %1876 = vmatpush.msra.mxu0 %v162
    %1877 = vmatmul.f32.gmra.mxu0 %v1493
    %v1878 = vpop.f32.mrf.mxu0
    %v1879 = vadd.f32 %v1859, %v1878
    %1880 = vdwg.mxu0
    %v1881 = vxor.u32 %v1759, 2147483648
    %v1882 = vmul.f32 %v1881, 1.442695
    %v1883 = vpow.pop %v1882
    %v1884 = vadd.f32 %v1883, 1.0
    %v1885 = vrcp.pop %v1884
    %v1886 = vmul.f32 %v1884, %v1885
    %v1887 = vsub.f32 1.0, %v1886
    %v1888 = vmul.f32 %v1885, %v1887
    %v1889 = vadd.f32 %v1885, %v1888
    %vm1890 = vweird.f32 %v1884
    %vm1891 = vweird.f32 %v1885
    %vm1892 = vmor %vm1890, %vm1891
    %v1893 = vsel %vm1892, %v1885, %v1889
    %v1894 = vand.u32 2147483647, %v1884
    %vm1895 = vcmp.eq.f32.partialorder %v1894, 8.507059e+37
    %v1896 = vand.u32 %v1884, 2147483648
    %v1897 = vor.u32 1.1754944e-38, %v1896
    %v1898 = vsel %vm1895, %v1897, %v1893
    %v1899 = vmul.f32 1.0, %v1898
    %v1900 = vxor.u32 %v1799, 2147483648
    %v1901 = vmul.f32 %v1900, 1.442695
    %v1902 = vpow.pop %v1901
    %v1903 = vadd.f32 %v1902, 1.0
    %v1904 = vrcp.pop %v1903
    %v1905 = vmul.f32 %v1903, %v1904
    %v1906 = vsub.f32 1.0, %v1905
    %v1907 = vmul.f32 %v1904, %v1906
    %v1908 = vadd.f32 %v1904, %v1907
    %vm1909 = vweird.f32 %v1903
    %vm1910 = vweird.f32 %v1904
    %vm1911 = vmor %vm1909, %vm1910
    %v1912 = vsel %vm1911, %v1904, %v1908
    %v1913 = vand.u32 2147483647, %v1903
    %vm1914 = vcmp.eq.f32.partialorder %v1913, 8.507059e+37
    %v1915 = vand.u32 %v1903, 2147483648
    %v1916 = vor.u32 1.1754944e-38, %v1915
    %v1917 = vsel %vm1914, %v1916, %v1912
    %v1918 = vmul.f32 1.0, %v1917
    %v1919 = vtanh.pop %v1839
    %v1920 = vxor.u32 %v1879, 2147483648
    %v1921 = vmul.f32 %v1920, 1.442695
    %v1922 = vpow.pop %v1921
    %v1923 = vadd.f32 %v1922, 1.0
    %v1924 = vrcp.pop %v1923
    %v1925 = vmul.f32 %v1923, %v1924
    %v1926 = vsub.f32 1.0, %v1925
    %v1927 = vmul.f32 %v1924, %v1926
    %v1928 = vadd.f32 %v1924, %v1927
    %vm1929 = vweird.f32 %v1923
    %vm1930 = vweird.f32 %v1924
    %vm1931 = vmor %vm1929, %vm1930
    %v1932 = vsel %vm1931, %v1924, %v1928
    %v1933 = vand.u32 2147483647, %v1923
    %vm1934 = vcmp.eq.f32.partialorder %v1933, 8.507059e+37
    %v1935 = vand.u32 %v1923, 2147483648
    %v1936 = vor.u32 1.1754944e-38, %v1935
    %v1937 = vsel %vm1934, %v1936, %v1932
    %v1938 = vmul.f32 1.0, %v1937
    %v1939 = vmul.f32 %v1918, %v1491
    %v1940 = vmul.f32 %v1899, %v1919
    %v1941 = vadd.f32 %v1939, %v1940
    %v1942 = vtanh.pop %v1941
    %v1943 = vmul.f32 %v1938, %v1942
    %1944 = vmatpush.msra.mxu0 %v284
    %1945 = vmatpush.msra.mxu0 %v280
    %1946 = vmatpush.msra.mxu0 %v276
    %1947 = vmatpush.msra.mxu0 %v272
    %1948 = vmatpush.msra.mxu0 %v268
    %1949 = vmatpush.msra.mxu0 %v264
    %1950 = vmatpush.msra.mxu0 %v260
    %1951 = vmatpush.msra.mxu0 %v256
    %1952 = vmatpush.msra.mxu0 %v252
    %1953 = vmatpush.msra.mxu0 %v248
    %1954 = vmatpush.msra.mxu0 %v244
    %1955 = vmatpush.msra.mxu0 %v240
    %1956 = vmatpush.msra.mxu0 %v236
    %1957 = vmatpush.msra.mxu0 %v232
    %1958 = vmatpush.msra.mxu0 %v228
    %1959 = vmatpush.msra.mxu0 %v224
    %1960 = vmatmul.f32.gmra.mxu0 %v1943
    %v1961 = vpop.f32.mrf.mxu0
    %v1962 = vadd.f32 %v587, %v1961
    %1963 = vdwg.mxu0
    %1964 = vmatpush.msra.mxu0 %v348
    %1965 = vmatpush.msra.mxu0 %v344
    %1966 = vmatpush.msra.mxu0 %v340
    %1967 = vmatpush.msra.mxu0 %v336
    %1968 = vmatpush.msra.mxu0 %v332
    %1969 = vmatpush.msra.mxu0 %v328
    %1970 = vmatpush.msra.mxu0 %v324
    %1971 = vmatpush.msra.mxu0 %v320
    %1972 = vmatpush.msra.mxu0 %v316
    %1973 = vmatpush.msra.mxu0 %v312
    %1974 = vmatpush.msra.mxu0 %v308
    %1975 = vmatpush.msra.mxu0 %v304
    %1976 = vmatpush.msra.mxu0 %v300
    %1977 = vmatpush.msra.mxu0 %v296
    %1978 = vmatpush.msra.mxu0 %v292
    %1979 = vmatpush.msra.mxu0 %v288
    %1980 = vmatmul.f32.gmra.mxu0 %v1716
    %v1981 = vpop.f32.mrf.mxu0
    %v1982 = vadd.f32 %v1962, %v1981
    %1983 = vdwg.mxu0
    %1984 = vmatpush.msra.mxu0 %v285
    %1985 = vmatpush.msra.mxu0 %v281
    %1986 = vmatpush.msra.mxu0 %v277
    %1987 = vmatpush.msra.mxu0 %v273
    %1988 = vmatpush.msra.mxu0 %v269
    %1989 = vmatpush.msra.mxu0 %v265
    %1990 = vmatpush.msra.mxu0 %v261
    %1991 = vmatpush.msra.mxu0 %v257
    %1992 = vmatpush.msra.mxu0 %v253
    %1993 = vmatpush.msra.mxu0 %v249
    %1994 = vmatpush.msra.mxu0 %v245
    %1995 = vmatpush.msra.mxu0 %v241
    %1996 = vmatpush.msra.mxu0 %v237
    %1997 = vmatpush.msra.mxu0 %v233
    %1998 = vmatpush.msra.mxu0 %v229
    %1999 = vmatpush.msra.mxu0 %v225
    %2000 = vmatmul.f32.gmra.mxu0 %v1943
    %v2001 = vpop.f32.mrf.mxu0
    %v2002 = vadd.f32 %v588, %v2001
    %2003 = vdwg.mxu0
    %2004 = vmatpush.msra.mxu0 %v349
    %2005 = vmatpush.msra.mxu0 %v345
    %2006 = vmatpush.msra.mxu0 %v341
    %2007 = vmatpush.msra.mxu0 %v337
    %2008 = vmatpush.msra.mxu0 %v333
    %2009 = vmatpush.msra.mxu0 %v329
    %2010 = vmatpush.msra.mxu0 %v325
    %2011 = vmatpush.msra.mxu0 %v321
    %2012 = vmatpush.msra.mxu0 %v317
    %2013 = vmatpush.msra.mxu0 %v313
    %2014 = vmatpush.msra.mxu0 %v309
    %2015 = vmatpush.msra.mxu0 %v305
    %2016 = vmatpush.msra.mxu0 %v301
    %2017 = vmatpush.msra.mxu0 %v297
    %2018 = vmatpush.msra.mxu0 %v293
    %2019 = vmatpush.msra.mxu0 %v289
    %2020 = vmatmul.f32.gmra.mxu0 %v1716
    %v2021 = vpop.f32.mrf.mxu0
    %v2022 = vadd.f32 %v2002, %v2021
    %2023 = vdwg.mxu0
    %2024 = vmatpush.msra.mxu0 %v286
    %2025 = vmatpush.msra.mxu0 %v282
    %2026 = vmatpush.msra.mxu0 %v278
    %2027 = vmatpush.msra.mxu0 %v274
    %2028 = vmatpush.msra.mxu0 %v270
    %2029 = vmatpush.msra.mxu0 %v266
    %2030 = vmatpush.msra.mxu0 %v262
    %2031 = vmatpush.msra.mxu0 %v258
    %2032 = vmatpush.msra.mxu0 %v254
    %2033 = vmatpush.msra.mxu0 %v250
    %2034 = vmatpush.msra.mxu0 %v246
    %2035 = vmatpush.msra.mxu0 %v242
    %2036 = vmatpush.msra.mxu0 %v238
    %2037 = vmatpush.msra.mxu0 %v234
    %2038 = vmatpush.msra.mxu0 %v230
    %2039 = vmatpush.msra.mxu0 %v226
    %2040 = vmatmul.f32.gmra.mxu0 %v1943
    %v2041 = vpop.f32.mrf.mxu0
    %v2042 = vadd.f32 %v589, %v2041
    %2043 = vdwg.mxu0
    %2044 = vmatpush.msra.mxu0 %v350
    %2045 = vmatpush.msra.mxu0 %v346
    %2046 = vmatpush.msra.mxu0 %v342
    %2047 = vmatpush.msra.mxu0 %v338
    %2048 = vmatpush.msra.mxu0 %v334
    %2049 = vmatpush.msra.mxu0 %v330
    %2050 = vmatpush.msra.mxu0 %v326
    %2051 = vmatpush.msra.mxu0 %v322
    %2052 = vmatpush.msra.mxu0 %v318
    %2053 = vmatpush.msra.mxu0 %v314
    %2054 = vmatpush.msra.mxu0 %v310
    %2055 = vmatpush.msra.mxu0 %v306
    %2056 = vmatpush.msra.mxu0 %v302
    %2057 = vmatpush.msra.mxu0 %v298
    %2058 = vmatpush.msra.mxu0 %v294
    %2059 = vmatpush.msra.mxu0 %v290
    %2060 = vmatmul.f32.gmra.mxu0 %v1716
    %v2061 = vpop.f32.mrf.mxu0
    %v2062 = vadd.f32 %v2042, %v2061
    %2063 = vdwg.mxu0
    %2064 = vmatpush.msra.mxu0 %v287
    %2065 = vmatpush.msra.mxu0 %v283
    %2066 = vmatpush.msra.mxu0 %v279
    %2067 = vmatpush.msra.mxu0 %v275
    %2068 = vmatpush.msra.mxu0 %v271
    %2069 = vmatpush.msra.mxu0 %v267
    %2070 = vmatpush.msra.mxu0 %v263
    %2071 = vmatpush.msra.mxu0 %v259
    %2072 = vmatpush.msra.mxu0 %v255
    %2073 = vmatpush.msra.mxu0 %v251
    %2074 = vmatpush.msra.mxu0 %v247
    %2075 = vmatpush.msra.mxu0 %v243
    %2076 = vmatpush.msra.mxu0 %v239
    %2077 = vmatpush.msra.mxu0 %v235
    %2078 = vmatpush.msra.mxu0 %v231
    %2079 = vmatpush.msra.mxu0 %v227
    %2080 = vmatmul.f32.gmra.mxu0 %v1943
    %v2081 = vpop.f32.mrf.mxu0
    %v2082 = vadd.f32 %v590, %v2081
    %2083 = vdwg.mxu0
    %2084 = vmatpush.msra.mxu0 %v351
    %2085 = vmatpush.msra.mxu0 %v347
    %2086 = vmatpush.msra.mxu0 %v343
    %2087 = vmatpush.msra.mxu0 %v339
    %2088 = vmatpush.msra.mxu0 %v335
    %2089 = vmatpush.msra.mxu0 %v331
    %2090 = vmatpush.msra.mxu0 %v327
    %2091 = vmatpush.msra.mxu0 %v323
    %2092 = vmatpush.msra.mxu0 %v319
    %2093 = vmatpush.msra.mxu0 %v315
    %2094 = vmatpush.msra.mxu0 %v311
    %2095 = vmatpush.msra.mxu0 %v307
    %2096 = vmatpush.msra.mxu0 %v303
    %2097 = vmatpush.msra.mxu0 %v299
    %2098 = vmatpush.msra.mxu0 %v295
    %2099 = vmatpush.msra.mxu0 %v291
    %2100 = vmatmul.f32.gmra.mxu0 %v1716
    %v2101 = vpop.f32.mrf.mxu0
    %v2102 = vadd.f32 %v2082, %v2101
    %2103 = vdwg.mxu0
    %v2104 = vxor.u32 %v1982, 2147483648
    %v2105 = vmul.f32 %v2104, 1.442695
    %v2106 = vpow.pop %v2105
    %v2107 = vadd.f32 %v2106, 1.0
    %v2108 = vrcp.pop %v2107
    %v2109 = vmul.f32 %v2107, %v2108
    %v2110 = vsub.f32 1.0, %v2109
    %v2111 = vmul.f32 %v2108, %v2110
    %v2112 = vadd.f32 %v2108, %v2111
    %vm2113 = vweird.f32 %v2107
    %vm2114 = vweird.f32 %v2108
    %vm2115 = vmor %vm2113, %vm2114
    %v2116 = vsel %vm2115, %v2108, %v2112
    %v2117 = vand.u32 2147483647, %v2107
    %vm2118 = vcmp.eq.f32.partialorder %v2117, 8.507059e+37
    %v2119 = vand.u32 %v2107, 2147483648
    %v2120 = vor.u32 1.1754944e-38, %v2119
    %v2121 = vsel %vm2118, %v2120, %v2116
    %v2122 = vmul.f32 1.0, %v2121
    %v2123 = vxor.u32 %v2022, 2147483648
    %v2124 = vmul.f32 %v2123, 1.442695
    %v2125 = vpow.pop %v2124
    %v2126 = vadd.f32 %v2125, 1.0
    %v2127 = vrcp.pop %v2126
    %v2128 = vmul.f32 %v2126, %v2127
    %v2129 = vsub.f32 1.0, %v2128
    %v2130 = vmul.f32 %v2127, %v2129
    %v2131 = vadd.f32 %v2127, %v2130
    %vm2132 = vweird.f32 %v2126
    %vm2133 = vweird.f32 %v2127
    %vm2134 = vmor %vm2132, %vm2133
    %v2135 = vsel %vm2134, %v2127, %v2131
    %v2136 = vand.u32 2147483647, %v2126
    %vm2137 = vcmp.eq.f32.partialorder %v2136, 8.507059e+37
    %v2138 = vand.u32 %v2126, 2147483648
    %v2139 = vor.u32 1.1754944e-38, %v2138
    %v2140 = vsel %vm2137, %v2139, %v2135
    %v2141 = vmul.f32 1.0, %v2140
    %v2142 = vtanh.pop %v2062
    %v2143 = vxor.u32 %v2102, 2147483648
    %v2144 = vmul.f32 %v2143, 1.442695
    %v2145 = vpow.pop %v2144
    %v2146 = vadd.f32 %v2145, 1.0
    %v2147 = vrcp.pop %v2146
    %v2148 = vmul.f32 %v2146, %v2147
    %v2149 = vsub.f32 1.0, %v2148
    %v2150 = vmul.f32 %v2147, %v2149
    %v2151 = vadd.f32 %v2147, %v2150
    %vm2152 = vweird.f32 %v2146
    %vm2153 = vweird.f32 %v2147
    %vm2154 = vmor %vm2152, %vm2153
    %v2155 = vsel %vm2154, %v2147, %v2151
    %v2156 = vand.u32 2147483647, %v2146
    %vm2157 = vcmp.eq.f32.partialorder %v2156, 8.507059e+37
    %v2158 = vand.u32 %v2146, 2147483648
    %v2159 = vor.u32 1.1754944e-38, %v2158
    %v2160 = vsel %vm2157, %v2159, %v2155
    %v2161 = vmul.f32 1.0, %v2160
    %v2162 = vmul.f32 %v2141, %v1714
    %v2163 = vmul.f32 %v2122, %v2142
    %v2164 = vadd.f32 %v2162, %v2163
    %v2165 = vtanh.pop %v2164
    %v2166 = vmul.f32 %v2161, %v2165
    %s2167 = scalar_lea.vmem [#allocation11], 24
    %2168 = vst [vmem:[%s2167] sm:$0xff] %v2166
    %s2169 = scalar_lea.vmem [#allocation2], 32
    %v2170 = vld [vmem:[%s2169] sm:$0xff]
    %2171 = vmatpush.msra.mxu0 %v155
    %2172 = vmatpush.msra.mxu0 %v151
    %2173 = vmatpush.msra.mxu0 %v147
    %2174 = vmatpush.msra.mxu0 %v143
    %2175 = vmatpush.msra.mxu0 %v139
    %2176 = vmatpush.msra.mxu0 %v135
    %2177 = vmatpush.msra.mxu0 %v131
    %2178 = vmatpush.msra.mxu0 %v127
    %2179 = vmatpush.msra.mxu0 %v123
    %2180 = vmatpush.msra.mxu0 %v119
    %2181 = vmatpush.msra.mxu0 %v115
    %2182 = vmatpush.msra.mxu0 %v111
    %2183 = vmatpush.msra.mxu0 %v107
    %2184 = vmatpush.msra.mxu0 %v103
    %2185 = vmatpush.msra.mxu0 %v99
    %2186 = vmatpush.msra.mxu0 %v95
    %2187 = vmatmul.f32.gmra.mxu0 %v2170
    %v2188 = vpop.f32.mrf.mxu0
    %v2189 = vadd.f32 %v355, %v2188
    %2190 = vdwg.mxu0
    %2191 = vmatpush.msra.mxu0 %v219
    %2192 = vmatpush.msra.mxu0 %v215
    %2193 = vmatpush.msra.mxu0 %v211
    %2194 = vmatpush.msra.mxu0 %v207
    %2195 = vmatpush.msra.mxu0 %v203
    %2196 = vmatpush.msra.mxu0 %v199
    %2197 = vmatpush.msra.mxu0 %v195
    %2198 = vmatpush.msra.mxu0 %v191
    %2199 = vmatpush.msra.mxu0 %v187
    %2200 = vmatpush.msra.mxu0 %v183
    %2201 = vmatpush.msra.mxu0 %v179
    %2202 = vmatpush.msra.mxu0 %v175
    %2203 = vmatpush.msra.mxu0 %v171
    %2204 = vmatpush.msra.mxu0 %v167
    %2205 = vmatpush.msra.mxu0 %v163
    %2206 = vmatpush.msra.mxu0 %v159
    %2207 = vmatmul.f32.gmra.mxu0 %v1943
    %v2208 = vpop.f32.mrf.mxu0
    %v2209 = vadd.f32 %v2189, %v2208
    %2210 = vdwg.mxu0
    %2211 = vmatpush.msra.mxu0 %v156
    %2212 = vmatpush.msra.mxu0 %v152
    %2213 = vmatpush.msra.mxu0 %v148
    %2214 = vmatpush.msra.mxu0 %v144
    %2215 = vmatpush.msra.mxu0 %v140
    %2216 = vmatpush.msra.mxu0 %v136
    %2217 = vmatpush.msra.mxu0 %v132
    %2218 = vmatpush.msra.mxu0 %v128
    %2219 = vmatpush.msra.mxu0 %v124
    %2220 = vmatpush.msra.mxu0 %v120
    %2221 = vmatpush.msra.mxu0 %v116
    %2222 = vmatpush.msra.mxu0 %v112
    %2223 = vmatpush.msra.mxu0 %v108
    %2224 = vmatpush.msra.mxu0 %v104
    %2225 = vmatpush.msra.mxu0 %v100
    %2226 = vmatpush.msra.mxu0 %v96
    %2227 = vmatmul.f32.gmra.mxu0 %v2170
    %v2228 = vpop.f32.mrf.mxu0
    %v2229 = vadd.f32 %v356, %v2228
    %2230 = vdwg.mxu0
    %2231 = vmatpush.msra.mxu0 %v220
    %2232 = vmatpush.msra.mxu0 %v216
    %2233 = vmatpush.msra.mxu0 %v212
    %2234 = vmatpush.msra.mxu0 %v208
    %2235 = vmatpush.msra.mxu0 %v204
    %2236 = vmatpush.msra.mxu0 %v200
    %2237 = vmatpush.msra.mxu0 %v196
    %2238 = vmatpush.msra.mxu0 %v192
    %2239 = vmatpush.msra.mxu0 %v188
    %2240 = vmatpush.msra.mxu0 %v184
    %2241 = vmatpush.msra.mxu0 %v180
    %2242 = vmatpush.msra.mxu0 %v176
    %2243 = vmatpush.msra.mxu0 %v172
    %2244 = vmatpush.msra.mxu0 %v168
    %2245 = vmatpush.msra.mxu0 %v164
    %2246 = vmatpush.msra.mxu0 %v160
    %2247 = vmatmul.f32.gmra.mxu0 %v1943
    %v2248 = vpop.f32.mrf.mxu0
    %v2249 = vadd.f32 %v2229, %v2248
    %2250 = vdwg.mxu0
    %2251 = vmatpush.msra.mxu0 %v157
    %2252 = vmatpush.msra.mxu0 %v153
    %2253 = vmatpush.msra.mxu0 %v149
    %2254 = vmatpush.msra.mxu0 %v145
    %2255 = vmatpush.msra.mxu0 %v141
    %2256 = vmatpush.msra.mxu0 %v137
    %2257 = vmatpush.msra.mxu0 %v133
    %2258 = vmatpush.msra.mxu0 %v129
    %2259 = vmatpush.msra.mxu0 %v125
    %2260 = vmatpush.msra.mxu0 %v121
    %2261 = vmatpush.msra.mxu0 %v117
    %2262 = vmatpush.msra.mxu0 %v113
    %2263 = vmatpush.msra.mxu0 %v109
    %2264 = vmatpush.msra.mxu0 %v105
    %2265 = vmatpush.msra.mxu0 %v101
    %2266 = vmatpush.msra.mxu0 %v97
    %2267 = vmatmul.f32.gmra.mxu0 %v2170
    %v2268 = vpop.f32.mrf.mxu0
    %v2269 = vadd.f32 %v357, %v2268
    %2270 = vdwg.mxu0
    %2271 = vmatpush.msra.mxu0 %v221
    %2272 = vmatpush.msra.mxu0 %v217
    %2273 = vmatpush.msra.mxu0 %v213
    %2274 = vmatpush.msra.mxu0 %v209
    %2275 = vmatpush.msra.mxu0 %v205
    %2276 = vmatpush.msra.mxu0 %v201
    %2277 = vmatpush.msra.mxu0 %v197
    %2278 = vmatpush.msra.mxu0 %v193
    %2279 = vmatpush.msra.mxu0 %v189
    %2280 = vmatpush.msra.mxu0 %v185
    %2281 = vmatpush.msra.mxu0 %v181
    %2282 = vmatpush.msra.mxu0 %v177
    %2283 = vmatpush.msra.mxu0 %v173
    %2284 = vmatpush.msra.mxu0 %v169
    %2285 = vmatpush.msra.mxu0 %v165
    %2286 = vmatpush.msra.mxu0 %v161
    %2287 = vmatmul.f32.gmra.mxu0 %v1943
    %v2288 = vpop.f32.mrf.mxu0
    %v2289 = vadd.f32 %v2269, %v2288
    %2290 = vdwg.mxu0
    %2291 = vmatpush.msra.mxu0 %v158
    %2292 = vmatpush.msra.mxu0 %v154
    %2293 = vmatpush.msra.mxu0 %v150
    %2294 = vmatpush.msra.mxu0 %v146
    %2295 = vmatpush.msra.mxu0 %v142
    %2296 = vmatpush.msra.mxu0 %v138
    %2297 = vmatpush.msra.mxu0 %v134
    %2298 = vmatpush.msra.mxu0 %v130
    %2299 = vmatpush.msra.mxu0 %v126
    %2300 = vmatpush.msra.mxu0 %v122
    %2301 = vmatpush.msra.mxu0 %v118
    %2302 = vmatpush.msra.mxu0 %v114
    %2303 = vmatpush.msra.mxu0 %v110
    %2304 = vmatpush.msra.mxu0 %v106
    %2305 = vmatpush.msra.mxu0 %v102
    %2306 = vmatpush.msra.mxu0 %v98
    %2307 = vmatmul.f32.gmra.mxu0 %v2170
    %v2308 = vpop.f32.mrf.mxu0
    %v2309 = vadd.f32 %v358, %v2308
    %2310 = vdwg.mxu0
    %2311 = vmatpush.msra.mxu0 %v222
    %2312 = vmatpush.msra.mxu0 %v218
    %2313 = vmatpush.msra.mxu0 %v214
    %2314 = vmatpush.msra.mxu0 %v210
    %2315 = vmatpush.msra.mxu0 %v206
    %2316 = vmatpush.msra.mxu0 %v202
    %2317 = vmatpush.msra.mxu0 %v198
    %2318 = vmatpush.msra.mxu0 %v194
    %2319 = vmatpush.msra.mxu0 %v190
    %2320 = vmatpush.msra.mxu0 %v186
    %2321 = vmatpush.msra.mxu0 %v182
    %2322 = vmatpush.msra.mxu0 %v178
    %2323 = vmatpush.msra.mxu0 %v174
    %2324 = vmatpush.msra.mxu0 %v170
    %2325 = vmatpush.msra.mxu0 %v166
    %2326 = vmatpush.msra.mxu0 %v162
    %2327 = vmatmul.f32.gmra.mxu0 %v1943
    %v2328 = vpop.f32.mrf.mxu0
    %v2329 = vadd.f32 %v2309, %v2328
    %2330 = vdwg.mxu0
    %v2331 = vxor.u32 %v2209, 2147483648
    %v2332 = vmul.f32 %v2331, 1.442695
    %v2333 = vpow.pop %v2332
    %v2334 = vadd.f32 %v2333, 1.0
    %v2335 = vrcp.pop %v2334
    %v2336 = vmul.f32 %v2334, %v2335
    %v2337 = vsub.f32 1.0, %v2336
    %v2338 = vmul.f32 %v2335, %v2337
    %v2339 = vadd.f32 %v2335, %v2338
    %vm2340 = vweird.f32 %v2334
    %vm2341 = vweird.f32 %v2335
    %vm2342 = vmor %vm2340, %vm2341
    %v2343 = vsel %vm2342, %v2335, %v2339
    %v2344 = vand.u32 2147483647, %v2334
    %vm2345 = vcmp.eq.f32.partialorder %v2344, 8.507059e+37
    %v2346 = vand.u32 %v2334, 2147483648
    %v2347 = vor.u32 1.1754944e-38, %v2346
    %v2348 = vsel %vm2345, %v2347, %v2343
    %v2349 = vmul.f32 1.0, %v2348
    %v2350 = vxor.u32 %v2249, 2147483648
    %v2351 = vmul.f32 %v2350, 1.442695
    %v2352 = vpow.pop %v2351
    %v2353 = vadd.f32 %v2352, 1.0
    %v2354 = vrcp.pop %v2353
    %v2355 = vmul.f32 %v2353, %v2354
    %v2356 = vsub.f32 1.0, %v2355
    %v2357 = vmul.f32 %v2354, %v2356
    %v2358 = vadd.f32 %v2354, %v2357
    %vm2359 = vweird.f32 %v2353
    %vm2360 = vweird.f32 %v2354
    %vm2361 = vmor %vm2359, %vm2360
    %v2362 = vsel %vm2361, %v2354, %v2358
    %v2363 = vand.u32 2147483647, %v2353
    %vm2364 = vcmp.eq.f32.partialorder %v2363, 8.507059e+37
    %v2365 = vand.u32 %v2353, 2147483648
    %v2366 = vor.u32 1.1754944e-38, %v2365
    %v2367 = vsel %vm2364, %v2366, %v2362
    %v2368 = vmul.f32 1.0, %v2367
    %v2369 = vtanh.pop %v2289
    %v2370 = vxor.u32 %v2329, 2147483648
    %v2371 = vmul.f32 %v2370, 1.442695
    %v2372 = vpow.pop %v2371
    %v2373 = vadd.f32 %v2372, 1.0
    %v2374 = vrcp.pop %v2373
    %v2375 = vmul.f32 %v2373, %v2374
    %v2376 = vsub.f32 1.0, %v2375
    %v2377 = vmul.f32 %v2374, %v2376
    %v2378 = vadd.f32 %v2374, %v2377
    %vm2379 = vweird.f32 %v2373
    %vm2380 = vweird.f32 %v2374
    %vm2381 = vmor %vm2379, %vm2380
    %v2382 = vsel %vm2381, %v2374, %v2378
    %v2383 = vand.u32 2147483647, %v2373
    %vm2384 = vcmp.eq.f32.partialorder %v2383, 8.507059e+37
    %v2385 = vand.u32 %v2373, 2147483648
    %v2386 = vor.u32 1.1754944e-38, %v2385
    %v2387 = vsel %vm2384, %v2386, %v2382
    %v2388 = vmul.f32 1.0, %v2387
    %v2389 = vmul.f32 %v2368, %v1941
    %v2390 = vmul.f32 %v2349, %v2369
    %v2391 = vadd.f32 %v2389, %v2390
    %v2392 = vtanh.pop %v2391
    %v2393 = vmul.f32 %v2388, %v2392
    %2394 = vmatpush.msra.mxu0 %v284
    %2395 = vmatpush.msra.mxu0 %v280
    %2396 = vmatpush.msra.mxu0 %v276
    %2397 = vmatpush.msra.mxu0 %v272
    %2398 = vmatpush.msra.mxu0 %v268
    %2399 = vmatpush.msra.mxu0 %v264
    %2400 = vmatpush.msra.mxu0 %v260
    %2401 = vmatpush.msra.mxu0 %v256
    %2402 = vmatpush.msra.mxu0 %v252
    %2403 = vmatpush.msra.mxu0 %v248
    %2404 = vmatpush.msra.mxu0 %v244
    %2405 = vmatpush.msra.mxu0 %v240
    %2406 = vmatpush.msra.mxu0 %v236
    %2407 = vmatpush.msra.mxu0 %v232
    %2408 = vmatpush.msra.mxu0 %v228
    %2409 = vmatpush.msra.mxu0 %v224
    %2410 = vmatmul.f32.gmra.mxu0 %v2393
    %v2411 = vpop.f32.mrf.mxu0
    %v2412 = vadd.f32 %v587, %v2411
    %2413 = vdwg.mxu0
    %2414 = vmatpush.msra.mxu0 %v348
    %2415 = vmatpush.msra.mxu0 %v344
    %2416 = vmatpush.msra.mxu0 %v340
    %2417 = vmatpush.msra.mxu0 %v336
    %2418 = vmatpush.msra.mxu0 %v332
    %2419 = vmatpush.msra.mxu0 %v328
    %2420 = vmatpush.msra.mxu0 %v324
    %2421 = vmatpush.msra.mxu0 %v320
    %2422 = vmatpush.msra.mxu0 %v316
    %2423 = vmatpush.msra.mxu0 %v312
    %2424 = vmatpush.msra.mxu0 %v308
    %2425 = vmatpush.msra.mxu0 %v304
    %2426 = vmatpush.msra.mxu0 %v300
    %2427 = vmatpush.msra.mxu0 %v296
    %2428 = vmatpush.msra.mxu0 %v292
    %2429 = vmatpush.msra.mxu0 %v288
    %2430 = vmatmul.f32.gmra.mxu0 %v2166
    %v2431 = vpop.f32.mrf.mxu0
    %v2432 = vadd.f32 %v2412, %v2431
    %2433 = vdwg.mxu0
    %2434 = vmatpush.msra.mxu0 %v285
    %2435 = vmatpush.msra.mxu0 %v281
    %2436 = vmatpush.msra.mxu0 %v277
    %2437 = vmatpush.msra.mxu0 %v273
    %2438 = vmatpush.msra.mxu0 %v269
    %2439 = vmatpush.msra.mxu0 %v265
    %2440 = vmatpush.msra.mxu0 %v261
    %2441 = vmatpush.msra.mxu0 %v257
    %2442 = vmatpush.msra.mxu0 %v253
    %2443 = vmatpush.msra.mxu0 %v249
    %2444 = vmatpush.msra.mxu0 %v245
    %2445 = vmatpush.msra.mxu0 %v241
    %2446 = vmatpush.msra.mxu0 %v237
    %2447 = vmatpush.msra.mxu0 %v233
    %2448 = vmatpush.msra.mxu0 %v229
    %2449 = vmatpush.msra.mxu0 %v225
    %2450 = vmatmul.f32.gmra.mxu0 %v2393
    %v2451 = vpop.f32.mrf.mxu0
    %v2452 = vadd.f32 %v588, %v2451
    %2453 = vdwg.mxu0
    %2454 = vmatpush.msra.mxu0 %v349
    %2455 = vmatpush.msra.mxu0 %v345
    %2456 = vmatpush.msra.mxu0 %v341
    %2457 = vmatpush.msra.mxu0 %v337
    %2458 = vmatpush.msra.mxu0 %v333
    %2459 = vmatpush.msra.mxu0 %v329
    %2460 = vmatpush.msra.mxu0 %v325
    %2461 = vmatpush.msra.mxu0 %v321
    %2462 = vmatpush.msra.mxu0 %v317
    %2463 = vmatpush.msra.mxu0 %v313
    %2464 = vmatpush.msra.mxu0 %v309
    %2465 = vmatpush.msra.mxu0 %v305
    %2466 = vmatpush.msra.mxu0 %v301
    %2467 = vmatpush.msra.mxu0 %v297
    %2468 = vmatpush.msra.mxu0 %v293
    %2469 = vmatpush.msra.mxu0 %v289
    %2470 = vmatmul.f32.gmra.mxu0 %v2166
    %v2471 = vpop.f32.mrf.mxu0
    %v2472 = vadd.f32 %v2452, %v2471
    %2473 = vdwg.mxu0
    %2474 = vmatpush.msra.mxu0 %v286
    %2475 = vmatpush.msra.mxu0 %v282
    %2476 = vmatpush.msra.mxu0 %v278
    %2477 = vmatpush.msra.mxu0 %v274
    %2478 = vmatpush.msra.mxu0 %v270
    %2479 = vmatpush.msra.mxu0 %v266
    %2480 = vmatpush.msra.mxu0 %v262
    %2481 = vmatpush.msra.mxu0 %v258
    %2482 = vmatpush.msra.mxu0 %v254
    %2483 = vmatpush.msra.mxu0 %v250
    %2484 = vmatpush.msra.mxu0 %v246
    %2485 = vmatpush.msra.mxu0 %v242
    %2486 = vmatpush.msra.mxu0 %v238
    %2487 = vmatpush.msra.mxu0 %v234
    %2488 = vmatpush.msra.mxu0 %v230
    %2489 = vmatpush.msra.mxu0 %v226
    %2490 = vmatmul.f32.gmra.mxu0 %v2393
    %v2491 = vpop.f32.mrf.mxu0
    %v2492 = vadd.f32 %v589, %v2491
    %2493 = vdwg.mxu0
    %2494 = vmatpush.msra.mxu0 %v350
    %2495 = vmatpush.msra.mxu0 %v346
    %2496 = vmatpush.msra.mxu0 %v342
    %2497 = vmatpush.msra.mxu0 %v338
    %2498 = vmatpush.msra.mxu0 %v334
    %2499 = vmatpush.msra.mxu0 %v330
    %2500 = vmatpush.msra.mxu0 %v326
    %2501 = vmatpush.msra.mxu0 %v322
    %2502 = vmatpush.msra.mxu0 %v318
    %2503 = vmatpush.msra.mxu0 %v314
    %2504 = vmatpush.msra.mxu0 %v310
    %2505 = vmatpush.msra.mxu0 %v306
    %2506 = vmatpush.msra.mxu0 %v302
    %2507 = vmatpush.msra.mxu0 %v298
    %2508 = vmatpush.msra.mxu0 %v294
    %2509 = vmatpush.msra.mxu0 %v290
    %2510 = vmatmul.f32.gmra.mxu0 %v2166
    %v2511 = vpop.f32.mrf.mxu0
    %v2512 = vadd.f32 %v2492, %v2511
    %2513 = vdwg.mxu0
    %2514 = vmatpush.msra.mxu0 %v287
    %2515 = vmatpush.msra.mxu0 %v283
    %2516 = vmatpush.msra.mxu0 %v279
    %2517 = vmatpush.msra.mxu0 %v275
    %2518 = vmatpush.msra.mxu0 %v271
    %2519 = vmatpush.msra.mxu0 %v267
    %2520 = vmatpush.msra.mxu0 %v263
    %2521 = vmatpush.msra.mxu0 %v259
    %2522 = vmatpush.msra.mxu0 %v255
    %2523 = vmatpush.msra.mxu0 %v251
    %2524 = vmatpush.msra.mxu0 %v247
    %2525 = vmatpush.msra.mxu0 %v243
    %2526 = vmatpush.msra.mxu0 %v239
    %2527 = vmatpush.msra.mxu0 %v235
    %2528 = vmatpush.msra.mxu0 %v231
    %2529 = vmatpush.msra.mxu0 %v227
    %2530 = vmatmul.f32.gmra.mxu0 %v2393
    %v2531 = vpop.f32.mrf.mxu0
    %v2532 = vadd.f32 %v590, %v2531
    %2533 = vdwg.mxu0
    %2534 = vmatpush.msra.mxu0 %v351
    %2535 = vmatpush.msra.mxu0 %v347
    %2536 = vmatpush.msra.mxu0 %v343
    %2537 = vmatpush.msra.mxu0 %v339
    %2538 = vmatpush.msra.mxu0 %v335
    %2539 = vmatpush.msra.mxu0 %v331
    %2540 = vmatpush.msra.mxu0 %v327
    %2541 = vmatpush.msra.mxu0 %v323
    %2542 = vmatpush.msra.mxu0 %v319
    %2543 = vmatpush.msra.mxu0 %v315
    %2544 = vmatpush.msra.mxu0 %v311
    %2545 = vmatpush.msra.mxu0 %v307
    %2546 = vmatpush.msra.mxu0 %v303
    %2547 = vmatpush.msra.mxu0 %v299
    %2548 = vmatpush.msra.mxu0 %v295
    %2549 = vmatpush.msra.mxu0 %v291
    %2550 = vmatmul.f32.gmra.mxu0 %v2166
    %v2551 = vpop.f32.mrf.mxu0
    %v2552 = vadd.f32 %v2532, %v2551
    %2553 = vdwg.mxu0
    %v2554 = vxor.u32 %v2432, 2147483648
    %v2555 = vmul.f32 %v2554, 1.442695
    %v2556 = vpow.pop %v2555
    %v2557 = vadd.f32 %v2556, 1.0
    %v2558 = vrcp.pop %v2557
    %v2559 = vmul.f32 %v2557, %v2558
    %v2560 = vsub.f32 1.0, %v2559
    %v2561 = vmul.f32 %v2558, %v2560
    %v2562 = vadd.f32 %v2558, %v2561
    %vm2563 = vweird.f32 %v2557
    %vm2564 = vweird.f32 %v2558
    %vm2565 = vmor %vm2563, %vm2564
    %v2566 = vsel %vm2565, %v2558, %v2562
    %v2567 = vand.u32 2147483647, %v2557
    %vm2568 = vcmp.eq.f32.partialorder %v2567, 8.507059e+37
    %v2569 = vand.u32 %v2557, 2147483648
    %v2570 = vor.u32 1.1754944e-38, %v2569
    %v2571 = vsel %vm2568, %v2570, %v2566
    %v2572 = vmul.f32 1.0, %v2571
    %v2573 = vxor.u32 %v2472, 2147483648
    %v2574 = vmul.f32 %v2573, 1.442695
    %v2575 = vpow.pop %v2574
    %v2576 = vadd.f32 %v2575, 1.0
    %v2577 = vrcp.pop %v2576
    %v2578 = vmul.f32 %v2576, %v2577
    %v2579 = vsub.f32 1.0, %v2578
    %v2580 = vmul.f32 %v2577, %v2579
    %v2581 = vadd.f32 %v2577, %v2580
    %vm2582 = vweird.f32 %v2576
    %vm2583 = vweird.f32 %v2577
    %vm2584 = vmor %vm2582, %vm2583
    %v2585 = vsel %vm2584, %v2577, %v2581
    %v2586 = vand.u32 2147483647, %v2576
    %vm2587 = vcmp.eq.f32.partialorder %v2586, 8.507059e+37
    %v2588 = vand.u32 %v2576, 2147483648
    %v2589 = vor.u32 1.1754944e-38, %v2588
    %v2590 = vsel %vm2587, %v2589, %v2585
    %v2591 = vmul.f32 1.0, %v2590
    %v2592 = vtanh.pop %v2512
    %v2593 = vxor.u32 %v2552, 2147483648
    %v2594 = vmul.f32 %v2593, 1.442695
    %v2595 = vpow.pop %v2594
    %v2596 = vadd.f32 %v2595, 1.0
    %v2597 = vrcp.pop %v2596
    %v2598 = vmul.f32 %v2596, %v2597
    %v2599 = vsub.f32 1.0, %v2598
    %v2600 = vmul.f32 %v2597, %v2599
    %v2601 = vadd.f32 %v2597, %v2600
    %vm2602 = vweird.f32 %v2596
    %vm2603 = vweird.f32 %v2597
    %vm2604 = vmor %vm2602, %vm2603
    %v2605 = vsel %vm2604, %v2597, %v2601
    %v2606 = vand.u32 2147483647, %v2596
    %vm2607 = vcmp.eq.f32.partialorder %v2606, 8.507059e+37
    %v2608 = vand.u32 %v2596, 2147483648
    %v2609 = vor.u32 1.1754944e-38, %v2608
    %v2610 = vsel %vm2607, %v2609, %v2605
    %v2611 = vmul.f32 1.0, %v2610
    %v2612 = vmul.f32 %v2591, %v2164
    %v2613 = vmul.f32 %v2572, %v2592
    %v2614 = vadd.f32 %v2612, %v2613
    %v2615 = vtanh.pop %v2614
    %v2616 = vmul.f32 %v2611, %v2615
    %s2617 = scalar_lea.vmem [#allocation11], 32
    %2618 = vst [vmem:[%s2617] sm:$0xff] %v2616
    %s2619 = scalar_lea.vmem [#allocation2], 40
    %v2620 = vld [vmem:[%s2619] sm:$0xff]
    %2621 = vmatpush.msra.mxu0 %v155
    %2622 = vmatpush.msra.mxu0 %v151
    %2623 = vmatpush.msra.mxu0 %v147
    %2624 = vmatpush.msra.mxu0 %v143
    %2625 = vmatpush.msra.mxu0 %v139
    %2626 = vmatpush.msra.mxu0 %v135
    %2627 = vmatpush.msra.mxu0 %v131
    %2628 = vmatpush.msra.mxu0 %v127
    %2629 = vmatpush.msra.mxu0 %v123
    %2630 = vmatpush.msra.mxu0 %v119
    %2631 = vmatpush.msra.mxu0 %v115
    %2632 = vmatpush.msra.mxu0 %v111
    %2633 = vmatpush.msra.mxu0 %v107
    %2634 = vmatpush.msra.mxu0 %v103
    %2635 = vmatpush.msra.mxu0 %v99
    %2636 = vmatpush.msra.mxu0 %v95
    %2637 = vmatmul.f32.gmra.mxu0 %v2620
    %v2638 = vpop.f32.mrf.mxu0
    %v2639 = vadd.f32 %v355, %v2638
    %2640 = vdwg.mxu0
    %2641 = vmatpush.msra.mxu0 %v219
    %2642 = vmatpush.msra.mxu0 %v215
    %2643 = vmatpush.msra.mxu0 %v211
    %2644 = vmatpush.msra.mxu0 %v207
    %2645 = vmatpush.msra.mxu0 %v203
    %2646 = vmatpush.msra.mxu0 %v199
    %2647 = vmatpush.msra.mxu0 %v195
    %2648 = vmatpush.msra.mxu0 %v191
    %2649 = vmatpush.msra.mxu0 %v187
    %2650 = vmatpush.msra.mxu0 %v183
    %2651 = vmatpush.msra.mxu0 %v179
    %2652 = vmatpush.msra.mxu0 %v175
    %2653 = vmatpush.msra.mxu0 %v171
    %2654 = vmatpush.msra.mxu0 %v167
    %2655 = vmatpush.msra.mxu0 %v163
    %2656 = vmatpush.msra.mxu0 %v159
    %2657 = vmatmul.f32.gmra.mxu0 %v2393
    %v2658 = vpop.f32.mrf.mxu0
    %v2659 = vadd.f32 %v2639, %v2658
    %2660 = vdwg.mxu0
    %2661 = vmatpush.msra.mxu0 %v156
    %2662 = vmatpush.msra.mxu0 %v152
    %2663 = vmatpush.msra.mxu0 %v148
    %2664 = vmatpush.msra.mxu0 %v144
    %2665 = vmatpush.msra.mxu0 %v140
    %2666 = vmatpush.msra.mxu0 %v136
    %2667 = vmatpush.msra.mxu0 %v132
    %2668 = vmatpush.msra.mxu0 %v128
    %2669 = vmatpush.msra.mxu0 %v124
    %2670 = vmatpush.msra.mxu0 %v120
    %2671 = vmatpush.msra.mxu0 %v116
    %2672 = vmatpush.msra.mxu0 %v112
    %2673 = vmatpush.msra.mxu0 %v108
    %2674 = vmatpush.msra.mxu0 %v104
    %2675 = vmatpush.msra.mxu0 %v100
    %2676 = vmatpush.msra.mxu0 %v96
    %2677 = vmatmul.f32.gmra.mxu0 %v2620
    %v2678 = vpop.f32.mrf.mxu0
    %v2679 = vadd.f32 %v356, %v2678
    %2680 = vdwg.mxu0
    %2681 = vmatpush.msra.mxu0 %v220
    %2682 = vmatpush.msra.mxu0 %v216
    %2683 = vmatpush.msra.mxu0 %v212
    %2684 = vmatpush.msra.mxu0 %v208
    %2685 = vmatpush.msra.mxu0 %v204
    %2686 = vmatpush.msra.mxu0 %v200
    %2687 = vmatpush.msra.mxu0 %v196
    %2688 = vmatpush.msra.mxu0 %v192
    %2689 = vmatpush.msra.mxu0 %v188
    %2690 = vmatpush.msra.mxu0 %v184
    %2691 = vmatpush.msra.mxu0 %v180
    %2692 = vmatpush.msra.mxu0 %v176
    %2693 = vmatpush.msra.mxu0 %v172
    %2694 = vmatpush.msra.mxu0 %v168
    %2695 = vmatpush.msra.mxu0 %v164
    %2696 = vmatpush.msra.mxu0 %v160
    %2697 = vmatmul.f32.gmra.mxu0 %v2393
    %v2698 = vpop.f32.mrf.mxu0
    %v2699 = vadd.f32 %v2679, %v2698
    %2700 = vdwg.mxu0
    %2701 = vmatpush.msra.mxu0 %v157
    %2702 = vmatpush.msra.mxu0 %v153
    %2703 = vmatpush.msra.mxu0 %v149
    %2704 = vmatpush.msra.mxu0 %v145
    %2705 = vmatpush.msra.mxu0 %v141
    %2706 = vmatpush.msra.mxu0 %v137
    %2707 = vmatpush.msra.mxu0 %v133
    %2708 = vmatpush.msra.mxu0 %v129
    %2709 = vmatpush.msra.mxu0 %v125
    %2710 = vmatpush.msra.mxu0 %v121
    %2711 = vmatpush.msra.mxu0 %v117
    %2712 = vmatpush.msra.mxu0 %v113
    %2713 = vmatpush.msra.mxu0 %v109
    %2714 = vmatpush.msra.mxu0 %v105
    %2715 = vmatpush.msra.mxu0 %v101
    %2716 = vmatpush.msra.mxu0 %v97
    %2717 = vmatmul.f32.gmra.mxu0 %v2620
    %v2718 = vpop.f32.mrf.mxu0
    %v2719 = vadd.f32 %v357, %v2718
    %2720 = vdwg.mxu0
    %2721 = vmatpush.msra.mxu0 %v221
    %2722 = vmatpush.msra.mxu0 %v217
    %2723 = vmatpush.msra.mxu0 %v213
    %2724 = vmatpush.msra.mxu0 %v209
    %2725 = vmatpush.msra.mxu0 %v205
    %2726 = vmatpush.msra.mxu0 %v201
    %2727 = vmatpush.msra.mxu0 %v197
    %2728 = vmatpush.msra.mxu0 %v193
    %2729 = vmatpush.msra.mxu0 %v189
    %2730 = vmatpush.msra.mxu0 %v185
    %2731 = vmatpush.msra.mxu0 %v181
    %2732 = vmatpush.msra.mxu0 %v177
    %2733 = vmatpush.msra.mxu0 %v173
    %2734 = vmatpush.msra.mxu0 %v169
    %2735 = vmatpush.msra.mxu0 %v165
    %2736 = vmatpush.msra.mxu0 %v161
    %2737 = vmatmul.f32.gmra.mxu0 %v2393
    %v2738 = vpop.f32.mrf.mxu0
    %v2739 = vadd.f32 %v2719, %v2738
    %2740 = vdwg.mxu0
    %2741 = vmatpush.msra.mxu0 %v158
    %2742 = vmatpush.msra.mxu0 %v154
    %2743 = vmatpush.msra.mxu0 %v150
    %2744 = vmatpush.msra.mxu0 %v146
    %2745 = vmatpush.msra.mxu0 %v142
    %2746 = vmatpush.msra.mxu0 %v138
    %2747 = vmatpush.msra.mxu0 %v134
    %2748 = vmatpush.msra.mxu0 %v130
    %2749 = vmatpush.msra.mxu0 %v126
    %2750 = vmatpush.msra.mxu0 %v122
    %2751 = vmatpush.msra.mxu0 %v118
    %2752 = vmatpush.msra.mxu0 %v114
    %2753 = vmatpush.msra.mxu0 %v110
    %2754 = vmatpush.msra.mxu0 %v106
    %2755 = vmatpush.msra.mxu0 %v102
    %2756 = vmatpush.msra.mxu0 %v98
    %2757 = vmatmul.f32.gmra.mxu0 %v2620
    %v2758 = vpop.f32.mrf.mxu0
    %v2759 = vadd.f32 %v358, %v2758
    %2760 = vdwg.mxu0
    %2761 = vmatpush.msra.mxu0 %v222
    %2762 = vmatpush.msra.mxu0 %v218
    %2763 = vmatpush.msra.mxu0 %v214
    %2764 = vmatpush.msra.mxu0 %v210
    %2765 = vmatpush.msra.mxu0 %v206
    %2766 = vmatpush.msra.mxu0 %v202
    %2767 = vmatpush.msra.mxu0 %v198
    %2768 = vmatpush.msra.mxu0 %v194
    %2769 = vmatpush.msra.mxu0 %v190
    %2770 = vmatpush.msra.mxu0 %v186
    %2771 = vmatpush.msra.mxu0 %v182
    %2772 = vmatpush.msra.mxu0 %v178
    %2773 = vmatpush.msra.mxu0 %v174
    %2774 = vmatpush.msra.mxu0 %v170
    %2775 = vmatpush.msra.mxu0 %v166
    %2776 = vmatpush.msra.mxu0 %v162
    %2777 = vmatmul.f32.gmra.mxu0 %v2393
    %v2778 = vpop.f32.mrf.mxu0
    %v2779 = vadd.f32 %v2759, %v2778
    %2780 = vdwg.mxu0
    %v2781 = vxor.u32 %v2659, 2147483648
    %v2782 = vmul.f32 %v2781, 1.442695
    %v2783 = vpow.pop %v2782
    %v2784 = vadd.f32 %v2783, 1.0
    %v2785 = vrcp.pop %v2784
    %v2786 = vmul.f32 %v2784, %v2785
    %v2787 = vsub.f32 1.0, %v2786
    %v2788 = vmul.f32 %v2785, %v2787
    %v2789 = vadd.f32 %v2785, %v2788
    %vm2790 = vweird.f32 %v2784
    %vm2791 = vweird.f32 %v2785
    %vm2792 = vmor %vm2790, %vm2791
    %v2793 = vsel %vm2792, %v2785, %v2789
    %v2794 = vand.u32 2147483647, %v2784
    %vm2795 = vcmp.eq.f32.partialorder %v2794, 8.507059e+37
    %v2796 = vand.u32 %v2784, 2147483648
    %v2797 = vor.u32 1.1754944e-38, %v2796
    %v2798 = vsel %vm2795, %v2797, %v2793
    %v2799 = vmul.f32 1.0, %v2798
    %v2800 = vxor.u32 %v2699, 2147483648
    %v2801 = vmul.f32 %v2800, 1.442695
    %v2802 = vpow.pop %v2801
    %v2803 = vadd.f32 %v2802, 1.0
    %v2804 = vrcp.pop %v2803
    %v2805 = vmul.f32 %v2803, %v2804
    %v2806 = vsub.f32 1.0, %v2805
    %v2807 = vmul.f32 %v2804, %v2806
    %v2808 = vadd.f32 %v2804, %v2807
    %vm2809 = vweird.f32 %v2803
    %vm2810 = vweird.f32 %v2804
    %vm2811 = vmor %vm2809, %vm2810
    %v2812 = vsel %vm2811, %v2804, %v2808
    %v2813 = vand.u32 2147483647, %v2803
    %vm2814 = vcmp.eq.f32.partialorder %v2813, 8.507059e+37
    %v2815 = vand.u32 %v2803, 2147483648
    %v2816 = vor.u32 1.1754944e-38, %v2815
    %v2817 = vsel %vm2814, %v2816, %v2812
    %v2818 = vmul.f32 1.0, %v2817
    %v2819 = vtanh.pop %v2739
    %v2820 = vxor.u32 %v2779, 2147483648
    %v2821 = vmul.f32 %v2820, 1.442695
    %v2822 = vpow.pop %v2821
    %v2823 = vadd.f32 %v2822, 1.0
    %v2824 = vrcp.pop %v2823
    %v2825 = vmul.f32 %v2823, %v2824
    %v2826 = vsub.f32 1.0, %v2825
    %v2827 = vmul.f32 %v2824, %v2826
    %v2828 = vadd.f32 %v2824, %v2827
    %vm2829 = vweird.f32 %v2823
    %vm2830 = vweird.f32 %v2824
    %vm2831 = vmor %vm2829, %vm2830
    %v2832 = vsel %vm2831, %v2824, %v2828
    %v2833 = vand.u32 2147483647, %v2823
    %vm2834 = vcmp.eq.f32.partialorder %v2833, 8.507059e+37
    %v2835 = vand.u32 %v2823, 2147483648
    %v2836 = vor.u32 1.1754944e-38, %v2835
    %v2837 = vsel %vm2834, %v2836, %v2832
    %v2838 = vmul.f32 1.0, %v2837
    %v2839 = vmul.f32 %v2818, %v2391
    %v2840 = vmul.f32 %v2799, %v2819
    %v2841 = vadd.f32 %v2839, %v2840
    %v2842 = vtanh.pop %v2841
    %v2843 = vmul.f32 %v2838, %v2842
    %2844 = vmatpush.msra.mxu0 %v284
    %2845 = vmatpush.msra.mxu0 %v280
    %2846 = vmatpush.msra.mxu0 %v276
    %2847 = vmatpush.msra.mxu0 %v272
    %2848 = vmatpush.msra.mxu0 %v268
    %2849 = vmatpush.msra.mxu0 %v264
    %2850 = vmatpush.msra.mxu0 %v260
    %2851 = vmatpush.msra.mxu0 %v256
    %2852 = vmatpush.msra.mxu0 %v252
    %2853 = vmatpush.msra.mxu0 %v248
    %2854 = vmatpush.msra.mxu0 %v244
    %2855 = vmatpush.msra.mxu0 %v240
    %2856 = vmatpush.msra.mxu0 %v236
    %2857 = vmatpush.msra.mxu0 %v232
    %2858 = vmatpush.msra.mxu0 %v228
    %2859 = vmatpush.msra.mxu0 %v224
    %2860 = vmatmul.f32.gmra.mxu0 %v2843
    %v2861 = vpop.f32.mrf.mxu0
    %v2862 = vadd.f32 %v587, %v2861
    %2863 = vdwg.mxu0
    %2864 = vmatpush.msra.mxu0 %v348
    %2865 = vmatpush.msra.mxu0 %v344
    %2866 = vmatpush.msra.mxu0 %v340
    %2867 = vmatpush.msra.mxu0 %v336
    %2868 = vmatpush.msra.mxu0 %v332
    %2869 = vmatpush.msra.mxu0 %v328
    %2870 = vmatpush.msra.mxu0 %v324
    %2871 = vmatpush.msra.mxu0 %v320
    %2872 = vmatpush.msra.mxu0 %v316
    %2873 = vmatpush.msra.mxu0 %v312
    %2874 = vmatpush.msra.mxu0 %v308
    %2875 = vmatpush.msra.mxu0 %v304
    %2876 = vmatpush.msra.mxu0 %v300
    %2877 = vmatpush.msra.mxu0 %v296
    %2878 = vmatpush.msra.mxu0 %v292
    %2879 = vmatpush.msra.mxu0 %v288
    %2880 = vmatmul.f32.gmra.mxu0 %v2616
    %v2881 = vpop.f32.mrf.mxu0
    %v2882 = vadd.f32 %v2862, %v2881
    %2883 = vdwg.mxu0
    %2884 = vmatpush.msra.mxu0 %v285
    %2885 = vmatpush.msra.mxu0 %v281
    %2886 = vmatpush.msra.mxu0 %v277
    %2887 = vmatpush.msra.mxu0 %v273
    %2888 = vmatpush.msra.mxu0 %v269
    %2889 = vmatpush.msra.mxu0 %v265
    %2890 = vmatpush.msra.mxu0 %v261
    %2891 = vmatpush.msra.mxu0 %v257
    %2892 = vmatpush.msra.mxu0 %v253
    %2893 = vmatpush.msra.mxu0 %v249
    %2894 = vmatpush.msra.mxu0 %v245
    %2895 = vmatpush.msra.mxu0 %v241
    %2896 = vmatpush.msra.mxu0 %v237
    %2897 = vmatpush.msra.mxu0 %v233
    %2898 = vmatpush.msra.mxu0 %v229
    %2899 = vmatpush.msra.mxu0 %v225
    %2900 = vmatmul.f32.gmra.mxu0 %v2843
    %v2901 = vpop.f32.mrf.mxu0
    %v2902 = vadd.f32 %v588, %v2901
    %2903 = vdwg.mxu0
    %2904 = vmatpush.msra.mxu0 %v349
    %2905 = vmatpush.msra.mxu0 %v345
    %2906 = vmatpush.msra.mxu0 %v341
    %2907 = vmatpush.msra.mxu0 %v337
    %2908 = vmatpush.msra.mxu0 %v333
    %2909 = vmatpush.msra.mxu0 %v329
    %2910 = vmatpush.msra.mxu0 %v325
    %2911 = vmatpush.msra.mxu0 %v321
    %2912 = vmatpush.msra.mxu0 %v317
    %2913 = vmatpush.msra.mxu0 %v313
    %2914 = vmatpush.msra.mxu0 %v309
    %2915 = vmatpush.msra.mxu0 %v305
    %2916 = vmatpush.msra.mxu0 %v301
    %2917 = vmatpush.msra.mxu0 %v297
    %2918 = vmatpush.msra.mxu0 %v293
    %2919 = vmatpush.msra.mxu0 %v289
    %2920 = vmatmul.f32.gmra.mxu0 %v2616
    %v2921 = vpop.f32.mrf.mxu0
    %v2922 = vadd.f32 %v2902, %v2921
    %2923 = vdwg.mxu0
    %2924 = vmatpush.msra.mxu0 %v286
    %2925 = vmatpush.msra.mxu0 %v282
    %2926 = vmatpush.msra.mxu0 %v278
    %2927 = vmatpush.msra.mxu0 %v274
    %2928 = vmatpush.msra.mxu0 %v270
    %2929 = vmatpush.msra.mxu0 %v266
    %2930 = vmatpush.msra.mxu0 %v262
    %2931 = vmatpush.msra.mxu0 %v258
    %2932 = vmatpush.msra.mxu0 %v254
    %2933 = vmatpush.msra.mxu0 %v250
    %2934 = vmatpush.msra.mxu0 %v246
    %2935 = vmatpush.msra.mxu0 %v242
    %2936 = vmatpush.msra.mxu0 %v238
    %2937 = vmatpush.msra.mxu0 %v234
    %2938 = vmatpush.msra.mxu0 %v230
    %2939 = vmatpush.msra.mxu0 %v226
    %2940 = vmatmul.f32.gmra.mxu0 %v2843
    %v2941 = vpop.f32.mrf.mxu0
    %v2942 = vadd.f32 %v589, %v2941
    %2943 = vdwg.mxu0
    %2944 = vmatpush.msra.mxu0 %v350
    %2945 = vmatpush.msra.mxu0 %v346
    %2946 = vmatpush.msra.mxu0 %v342
    %2947 = vmatpush.msra.mxu0 %v338
    %2948 = vmatpush.msra.mxu0 %v334
    %2949 = vmatpush.msra.mxu0 %v330
    %2950 = vmatpush.msra.mxu0 %v326
    %2951 = vmatpush.msra.mxu0 %v322
    %2952 = vmatpush.msra.mxu0 %v318
    %2953 = vmatpush.msra.mxu0 %v314
    %2954 = vmatpush.msra.mxu0 %v310
    %2955 = vmatpush.msra.mxu0 %v306
    %2956 = vmatpush.msra.mxu0 %v302
    %2957 = vmatpush.msra.mxu0 %v298
    %2958 = vmatpush.msra.mxu0 %v294
    %2959 = vmatpush.msra.mxu0 %v290
    %2960 = vmatmul.f32.gmra.mxu0 %v2616
    %v2961 = vpop.f32.mrf.mxu0
    %v2962 = vadd.f32 %v2942, %v2961
    %2963 = vdwg.mxu0
    %2964 = vmatpush.msra.mxu0 %v287
    %2965 = vmatpush.msra.mxu0 %v283
    %2966 = vmatpush.msra.mxu0 %v279
    %2967 = vmatpush.msra.mxu0 %v275
    %2968 = vmatpush.msra.mxu0 %v271
    %2969 = vmatpush.msra.mxu0 %v267
    %2970 = vmatpush.msra.mxu0 %v263
    %2971 = vmatpush.msra.mxu0 %v259
    %2972 = vmatpush.msra.mxu0 %v255
    %2973 = vmatpush.msra.mxu0 %v251
    %2974 = vmatpush.msra.mxu0 %v247
    %2975 = vmatpush.msra.mxu0 %v243
    %2976 = vmatpush.msra.mxu0 %v239
    %2977 = vmatpush.msra.mxu0 %v235
    %2978 = vmatpush.msra.mxu0 %v231
    %2979 = vmatpush.msra.mxu0 %v227
    %2980 = vmatmul.f32.gmra.mxu0 %v2843
    %v2981 = vpop.f32.mrf.mxu0
    %v2982 = vadd.f32 %v590, %v2981
    %2983 = vdwg.mxu0
    %2984 = vmatpush.msra.mxu0 %v351
    %2985 = vmatpush.msra.mxu0 %v347
    %2986 = vmatpush.msra.mxu0 %v343
    %2987 = vmatpush.msra.mxu0 %v339
    %2988 = vmatpush.msra.mxu0 %v335
    %2989 = vmatpush.msra.mxu0 %v331
    %2990 = vmatpush.msra.mxu0 %v327
    %2991 = vmatpush.msra.mxu0 %v323
    %2992 = vmatpush.msra.mxu0 %v319
    %2993 = vmatpush.msra.mxu0 %v315
    %2994 = vmatpush.msra.mxu0 %v311
    %2995 = vmatpush.msra.mxu0 %v307
    %2996 = vmatpush.msra.mxu0 %v303
    %2997 = vmatpush.msra.mxu0 %v299
    %2998 = vmatpush.msra.mxu0 %v295
    %2999 = vmatpush.msra.mxu0 %v291
    %3000 = vmatmul.f32.gmra.mxu0 %v2616
    %v3001 = vpop.f32.mrf.mxu0
    %v3002 = vadd.f32 %v2982, %v3001
    %3003 = vdwg.mxu0
    %v3004 = vxor.u32 %v2882, 2147483648
    %v3005 = vmul.f32 %v3004, 1.442695
    %v3006 = vpow.pop %v3005
    %v3007 = vadd.f32 %v3006, 1.0
    %v3008 = vrcp.pop %v3007
    %v3009 = vmul.f32 %v3007, %v3008
    %v3010 = vsub.f32 1.0, %v3009
    %v3011 = vmul.f32 %v3008, %v3010
    %v3012 = vadd.f32 %v3008, %v3011
    %vm3013 = vweird.f32 %v3007
    %vm3014 = vweird.f32 %v3008
    %vm3015 = vmor %vm3013, %vm3014
    %v3016 = vsel %vm3015, %v3008, %v3012
    %v3017 = vand.u32 2147483647, %v3007
    %vm3018 = vcmp.eq.f32.partialorder %v3017, 8.507059e+37
    %v3019 = vand.u32 %v3007, 2147483648
    %v3020 = vor.u32 1.1754944e-38, %v3019
    %v3021 = vsel %vm3018, %v3020, %v3016
    %v3022 = vmul.f32 1.0, %v3021
    %v3023 = vxor.u32 %v2922, 2147483648
    %v3024 = vmul.f32 %v3023, 1.442695
    %v3025 = vpow.pop %v3024
    %v3026 = vadd.f32 %v3025, 1.0
    %v3027 = vrcp.pop %v3026
    %v3028 = vmul.f32 %v3026, %v3027
    %v3029 = vsub.f32 1.0, %v3028
    %v3030 = vmul.f32 %v3027, %v3029
    %v3031 = vadd.f32 %v3027, %v3030
    %vm3032 = vweird.f32 %v3026
    %vm3033 = vweird.f32 %v3027
    %vm3034 = vmor %vm3032, %vm3033
    %v3035 = vsel %vm3034, %v3027, %v3031
    %v3036 = vand.u32 2147483647, %v3026
    %vm3037 = vcmp.eq.f32.partialorder %v3036, 8.507059e+37
    %v3038 = vand.u32 %v3026, 2147483648
    %v3039 = vor.u32 1.1754944e-38, %v3038
    %v3040 = vsel %vm3037, %v3039, %v3035
    %v3041 = vmul.f32 1.0, %v3040
    %v3042 = vtanh.pop %v2962
    %v3043 = vxor.u32 %v3002, 2147483648
    %v3044 = vmul.f32 %v3043, 1.442695
    %v3045 = vpow.pop %v3044
    %v3046 = vadd.f32 %v3045, 1.0
    %v3047 = vrcp.pop %v3046
    %v3048 = vmul.f32 %v3046, %v3047
    %v3049 = vsub.f32 1.0, %v3048
    %v3050 = vmul.f32 %v3047, %v3049
    %v3051 = vadd.f32 %v3047, %v3050
    %vm3052 = vweird.f32 %v3046
    %vm3053 = vweird.f32 %v3047
    %vm3054 = vmor %vm3052, %vm3053
    %v3055 = vsel %vm3054, %v3047, %v3051
    %v3056 = vand.u32 2147483647, %v3046
    %vm3057 = vcmp.eq.f32.partialorder %v3056, 8.507059e+37
    %v3058 = vand.u32 %v3046, 2147483648
    %v3059 = vor.u32 1.1754944e-38, %v3058
    %v3060 = vsel %vm3057, %v3059, %v3055
    %v3061 = vmul.f32 1.0, %v3060
    %v3062 = vmul.f32 %v3041, %v2614
    %v3063 = vmul.f32 %v3022, %v3042
    %v3064 = vadd.f32 %v3062, %v3063
    %v3065 = vtanh.pop %v3064
    %v3066 = vmul.f32 %v3061, %v3065
    %s3067 = scalar_lea.vmem [#allocation11], 40
    %3068 = vst [vmem:[%s3067] sm:$0xff] %v3066
    %s3069 = scalar_lea.vmem [#allocation2], 48
    %v3070 = vld [vmem:[%s3069] sm:$0xff]
    %3071 = vmatpush.msra.mxu0 %v155
    %3072 = vmatpush.msra.mxu0 %v151
    %3073 = vmatpush.msra.mxu0 %v147
    %3074 = vmatpush.msra.mxu0 %v143
    %3075 = vmatpush.msra.mxu0 %v139
    %3076 = vmatpush.msra.mxu0 %v135
    %3077 = vmatpush.msra.mxu0 %v131
    %3078 = vmatpush.msra.mxu0 %v127
    %3079 = vmatpush.msra.mxu0 %v123
    %3080 = vmatpush.msra.mxu0 %v119
    %3081 = vmatpush.msra.mxu0 %v115
    %3082 = vmatpush.msra.mxu0 %v111
    %3083 = vmatpush.msra.mxu0 %v107
    %3084 = vmatpush.msra.mxu0 %v103
    %3085 = vmatpush.msra.mxu0 %v99
    %3086 = vmatpush.msra.mxu0 %v95
    %3087 = vmatmul.f32.gmra.mxu0 %v3070
    %v3088 = vpop.f32.mrf.mxu0
    %v3089 = vadd.f32 %v355, %v3088
    %3090 = vdwg.mxu0
    %3091 = vmatpush.msra.mxu0 %v219
    %3092 = vmatpush.msra.mxu0 %v215
    %3093 = vmatpush.msra.mxu0 %v211
    %3094 = vmatpush.msra.mxu0 %v207
    %3095 = vmatpush.msra.mxu0 %v203
    %3096 = vmatpush.msra.mxu0 %v199
    %3097 = vmatpush.msra.mxu0 %v195
    %3098 = vmatpush.msra.mxu0 %v191
    %3099 = vmatpush.msra.mxu0 %v187
    %3100 = vmatpush.msra.mxu0 %v183
    %3101 = vmatpush.msra.mxu0 %v179
    %3102 = vmatpush.msra.mxu0 %v175
    %3103 = vmatpush.msra.mxu0 %v171
    %3104 = vmatpush.msra.mxu0 %v167
    %3105 = vmatpush.msra.mxu0 %v163
    %3106 = vmatpush.msra.mxu0 %v159
    %3107 = vmatmul.f32.gmra.mxu0 %v2843
    %v3108 = vpop.f32.mrf.mxu0
    %v3109 = vadd.f32 %v3089, %v3108
    %3110 = vdwg.mxu0
    %3111 = vmatpush.msra.mxu0 %v156
    %3112 = vmatpush.msra.mxu0 %v152
    %3113 = vmatpush.msra.mxu0 %v148
    %3114 = vmatpush.msra.mxu0 %v144
    %3115 = vmatpush.msra.mxu0 %v140
    %3116 = vmatpush.msra.mxu0 %v136
    %3117 = vmatpush.msra.mxu0 %v132
    %3118 = vmatpush.msra.mxu0 %v128
    %3119 = vmatpush.msra.mxu0 %v124
    %3120 = vmatpush.msra.mxu0 %v120
    %3121 = vmatpush.msra.mxu0 %v116
    %3122 = vmatpush.msra.mxu0 %v112
    %3123 = vmatpush.msra.mxu0 %v108
    %3124 = vmatpush.msra.mxu0 %v104
    %3125 = vmatpush.msra.mxu0 %v100
    %3126 = vmatpush.msra.mxu0 %v96
    %3127 = vmatmul.f32.gmra.mxu0 %v3070
    %v3128 = vpop.f32.mrf.mxu0
    %v3129 = vadd.f32 %v356, %v3128
    %3130 = vdwg.mxu0
    %3131 = vmatpush.msra.mxu0 %v220
    %3132 = vmatpush.msra.mxu0 %v216
    %3133 = vmatpush.msra.mxu0 %v212
    %3134 = vmatpush.msra.mxu0 %v208
    %3135 = vmatpush.msra.mxu0 %v204
    %3136 = vmatpush.msra.mxu0 %v200
    %3137 = vmatpush.msra.mxu0 %v196
    %3138 = vmatpush.msra.mxu0 %v192
    %3139 = vmatpush.msra.mxu0 %v188
    %3140 = vmatpush.msra.mxu0 %v184
    %3141 = vmatpush.msra.mxu0 %v180
    %3142 = vmatpush.msra.mxu0 %v176
    %3143 = vmatpush.msra.mxu0 %v172
    %3144 = vmatpush.msra.mxu0 %v168
    %3145 = vmatpush.msra.mxu0 %v164
    %3146 = vmatpush.msra.mxu0 %v160
    %3147 = vmatmul.f32.gmra.mxu0 %v2843
    %v3148 = vpop.f32.mrf.mxu0
    %v3149 = vadd.f32 %v3129, %v3148
    %3150 = vdwg.mxu0
    %3151 = vmatpush.msra.mxu0 %v157
    %3152 = vmatpush.msra.mxu0 %v153
    %3153 = vmatpush.msra.mxu0 %v149
    %3154 = vmatpush.msra.mxu0 %v145
    %3155 = vmatpush.msra.mxu0 %v141
    %3156 = vmatpush.msra.mxu0 %v137
    %3157 = vmatpush.msra.mxu0 %v133
    %3158 = vmatpush.msra.mxu0 %v129
    %3159 = vmatpush.msra.mxu0 %v125
    %3160 = vmatpush.msra.mxu0 %v121
    %3161 = vmatpush.msra.mxu0 %v117
    %3162 = vmatpush.msra.mxu0 %v113
    %3163 = vmatpush.msra.mxu0 %v109
    %3164 = vmatpush.msra.mxu0 %v105
    %3165 = vmatpush.msra.mxu0 %v101
    %3166 = vmatpush.msra.mxu0 %v97
    %3167 = vmatmul.f32.gmra.mxu0 %v3070
    %v3168 = vpop.f32.mrf.mxu0
    %v3169 = vadd.f32 %v357, %v3168
    %3170 = vdwg.mxu0
    %3171 = vmatpush.msra.mxu0 %v221
    %3172 = vmatpush.msra.mxu0 %v217
    %3173 = vmatpush.msra.mxu0 %v213
    %3174 = vmatpush.msra.mxu0 %v209
    %3175 = vmatpush.msra.mxu0 %v205
    %3176 = vmatpush.msra.mxu0 %v201
    %3177 = vmatpush.msra.mxu0 %v197
    %3178 = vmatpush.msra.mxu0 %v193
    %3179 = vmatpush.msra.mxu0 %v189
    %3180 = vmatpush.msra.mxu0 %v185
    %3181 = vmatpush.msra.mxu0 %v181
    %3182 = vmatpush.msra.mxu0 %v177
    %3183 = vmatpush.msra.mxu0 %v173
    %3184 = vmatpush.msra.mxu0 %v169
    %3185 = vmatpush.msra.mxu0 %v165
    %3186 = vmatpush.msra.mxu0 %v161
    %3187 = vmatmul.f32.gmra.mxu0 %v2843
    %v3188 = vpop.f32.mrf.mxu0
    %v3189 = vadd.f32 %v3169, %v3188
    %3190 = vdwg.mxu0
    %3191 = vmatpush.msra.mxu0 %v158
    %3192 = vmatpush.msra.mxu0 %v154
    %3193 = vmatpush.msra.mxu0 %v150
    %3194 = vmatpush.msra.mxu0 %v146
    %3195 = vmatpush.msra.mxu0 %v142
    %3196 = vmatpush.msra.mxu0 %v138
    %3197 = vmatpush.msra.mxu0 %v134
    %3198 = vmatpush.msra.mxu0 %v130
    %3199 = vmatpush.msra.mxu0 %v126
    %3200 = vmatpush.msra.mxu0 %v122
    %3201 = vmatpush.msra.mxu0 %v118
    %3202 = vmatpush.msra.mxu0 %v114
    %3203 = vmatpush.msra.mxu0 %v110
    %3204 = vmatpush.msra.mxu0 %v106
    %3205 = vmatpush.msra.mxu0 %v102
    %3206 = vmatpush.msra.mxu0 %v98
    %3207 = vmatmul.f32.gmra.mxu0 %v3070
    %v3208 = vpop.f32.mrf.mxu0
    %v3209 = vadd.f32 %v358, %v3208
    %3210 = vdwg.mxu0
    %3211 = vmatpush.msra.mxu0 %v222
    %3212 = vmatpush.msra.mxu0 %v218
    %3213 = vmatpush.msra.mxu0 %v214
    %3214 = vmatpush.msra.mxu0 %v210
    %3215 = vmatpush.msra.mxu0 %v206
    %3216 = vmatpush.msra.mxu0 %v202
    %3217 = vmatpush.msra.mxu0 %v198
    %3218 = vmatpush.msra.mxu0 %v194
    %3219 = vmatpush.msra.mxu0 %v190
    %3220 = vmatpush.msra.mxu0 %v186
    %3221 = vmatpush.msra.mxu0 %v182
    %3222 = vmatpush.msra.mxu0 %v178
    %3223 = vmatpush.msra.mxu0 %v174
    %3224 = vmatpush.msra.mxu0 %v170
    %3225 = vmatpush.msra.mxu0 %v166
    %3226 = vmatpush.msra.mxu0 %v162
    %3227 = vmatmul.f32.gmra.mxu0 %v2843
    %v3228 = vpop.f32.mrf.mxu0
    %v3229 = vadd.f32 %v3209, %v3228
    %3230 = vdwg.mxu0
    %v3231 = vxor.u32 %v3109, 2147483648
    %v3232 = vmul.f32 %v3231, 1.442695
    %v3233 = vpow.pop %v3232
    %v3234 = vadd.f32 %v3233, 1.0
    %v3235 = vrcp.pop %v3234
    %v3236 = vmul.f32 %v3234, %v3235
    %v3237 = vsub.f32 1.0, %v3236
    %v3238 = vmul.f32 %v3235, %v3237
    %v3239 = vadd.f32 %v3235, %v3238
    %vm3240 = vweird.f32 %v3234
    %vm3241 = vweird.f32 %v3235
    %vm3242 = vmor %vm3240, %vm3241
    %v3243 = vsel %vm3242, %v3235, %v3239
    %v3244 = vand.u32 2147483647, %v3234
    %vm3245 = vcmp.eq.f32.partialorder %v3244, 8.507059e+37
    %v3246 = vand.u32 %v3234, 2147483648
    %v3247 = vor.u32 1.1754944e-38, %v3246
    %v3248 = vsel %vm3245, %v3247, %v3243
    %v3249 = vmul.f32 1.0, %v3248
    %v3250 = vxor.u32 %v3149, 2147483648
    %v3251 = vmul.f32 %v3250, 1.442695
    %v3252 = vpow.pop %v3251
    %v3253 = vadd.f32 %v3252, 1.0
    %v3254 = vrcp.pop %v3253
    %v3255 = vmul.f32 %v3253, %v3254
    %v3256 = vsub.f32 1.0, %v3255
    %v3257 = vmul.f32 %v3254, %v3256
    %v3258 = vadd.f32 %v3254, %v3257
    %vm3259 = vweird.f32 %v3253
    %vm3260 = vweird.f32 %v3254
    %vm3261 = vmor %vm3259, %vm3260
    %v3262 = vsel %vm3261, %v3254, %v3258
    %v3263 = vand.u32 2147483647, %v3253
    %vm3264 = vcmp.eq.f32.partialorder %v3263, 8.507059e+37
    %v3265 = vand.u32 %v3253, 2147483648
    %v3266 = vor.u32 1.1754944e-38, %v3265
    %v3267 = vsel %vm3264, %v3266, %v3262
    %v3268 = vmul.f32 1.0, %v3267
    %v3269 = vtanh.pop %v3189
    %v3270 = vxor.u32 %v3229, 2147483648
    %v3271 = vmul.f32 %v3270, 1.442695
    %v3272 = vpow.pop %v3271
    %v3273 = vadd.f32 %v3272, 1.0
    %v3274 = vrcp.pop %v3273
    %v3275 = vmul.f32 %v3273, %v3274
    %v3276 = vsub.f32 1.0, %v3275
    %v3277 = vmul.f32 %v3274, %v3276
    %v3278 = vadd.f32 %v3274, %v3277
    %vm3279 = vweird.f32 %v3273
    %vm3280 = vweird.f32 %v3274
    %vm3281 = vmor %vm3279, %vm3280
    %v3282 = vsel %vm3281, %v3274, %v3278
    %v3283 = vand.u32 2147483647, %v3273
    %vm3284 = vcmp.eq.f32.partialorder %v3283, 8.507059e+37
    %v3285 = vand.u32 %v3273, 2147483648
    %v3286 = vor.u32 1.1754944e-38, %v3285
    %v3287 = vsel %vm3284, %v3286, %v3282
    %v3288 = vmul.f32 1.0, %v3287
    %v3289 = vmul.f32 %v3268, %v2841
    %v3290 = vmul.f32 %v3249, %v3269
    %v3291 = vadd.f32 %v3289, %v3290
    %v3292 = vtanh.pop %v3291
    %v3293 = vmul.f32 %v3288, %v3292
    %3294 = vmatpush.msra.mxu0 %v284
    %3295 = vmatpush.msra.mxu0 %v280
    %3296 = vmatpush.msra.mxu0 %v276
    %3297 = vmatpush.msra.mxu0 %v272
    %3298 = vmatpush.msra.mxu0 %v268
    %3299 = vmatpush.msra.mxu0 %v264
    %3300 = vmatpush.msra.mxu0 %v260
    %3301 = vmatpush.msra.mxu0 %v256
    %3302 = vmatpush.msra.mxu0 %v252
    %3303 = vmatpush.msra.mxu0 %v248
    %3304 = vmatpush.msra.mxu0 %v244
    %3305 = vmatpush.msra.mxu0 %v240
    %3306 = vmatpush.msra.mxu0 %v236
    %3307 = vmatpush.msra.mxu0 %v232
    %3308 = vmatpush.msra.mxu0 %v228
    %3309 = vmatpush.msra.mxu0 %v224
    %3310 = vmatmul.f32.gmra.mxu0 %v3293
    %v3311 = vpop.f32.mrf.mxu0
    %v3312 = vadd.f32 %v587, %v3311
    %3313 = vdwg.mxu0
    %3314 = vmatpush.msra.mxu0 %v348
    %3315 = vmatpush.msra.mxu0 %v344
    %3316 = vmatpush.msra.mxu0 %v340
    %3317 = vmatpush.msra.mxu0 %v336
    %3318 = vmatpush.msra.mxu0 %v332
    %3319 = vmatpush.msra.mxu0 %v328
    %3320 = vmatpush.msra.mxu0 %v324
    %3321 = vmatpush.msra.mxu0 %v320
    %3322 = vmatpush.msra.mxu0 %v316
    %3323 = vmatpush.msra.mxu0 %v312
    %3324 = vmatpush.msra.mxu0 %v308
    %3325 = vmatpush.msra.mxu0 %v304
    %3326 = vmatpush.msra.mxu0 %v300
    %3327 = vmatpush.msra.mxu0 %v296
    %3328 = vmatpush.msra.mxu0 %v292
    %3329 = vmatpush.msra.mxu0 %v288
    %3330 = vmatmul.f32.gmra.mxu0 %v3066
    %v3331 = vpop.f32.mrf.mxu0
    %v3332 = vadd.f32 %v3312, %v3331
    %3333 = vdwg.mxu0
    %3334 = vmatpush.msra.mxu0 %v285
    %3335 = vmatpush.msra.mxu0 %v281
    %3336 = vmatpush.msra.mxu0 %v277
    %3337 = vmatpush.msra.mxu0 %v273
    %3338 = vmatpush.msra.mxu0 %v269
    %3339 = vmatpush.msra.mxu0 %v265
    %3340 = vmatpush.msra.mxu0 %v261
    %3341 = vmatpush.msra.mxu0 %v257
    %3342 = vmatpush.msra.mxu0 %v253
    %3343 = vmatpush.msra.mxu0 %v249
    %3344 = vmatpush.msra.mxu0 %v245
    %3345 = vmatpush.msra.mxu0 %v241
    %3346 = vmatpush.msra.mxu0 %v237
    %3347 = vmatpush.msra.mxu0 %v233
    %3348 = vmatpush.msra.mxu0 %v229
    %3349 = vmatpush.msra.mxu0 %v225
    %3350 = vmatmul.f32.gmra.mxu0 %v3293
    %v3351 = vpop.f32.mrf.mxu0
    %v3352 = vadd.f32 %v588, %v3351
    %3353 = vdwg.mxu0
    %3354 = vmatpush.msra.mxu0 %v349
    %3355 = vmatpush.msra.mxu0 %v345
    %3356 = vmatpush.msra.mxu0 %v341
    %3357 = vmatpush.msra.mxu0 %v337
    %3358 = vmatpush.msra.mxu0 %v333
    %3359 = vmatpush.msra.mxu0 %v329
    %3360 = vmatpush.msra.mxu0 %v325
    %3361 = vmatpush.msra.mxu0 %v321
    %3362 = vmatpush.msra.mxu0 %v317
    %3363 = vmatpush.msra.mxu0 %v313
    %3364 = vmatpush.msra.mxu0 %v309
    %3365 = vmatpush.msra.mxu0 %v305
    %3366 = vmatpush.msra.mxu0 %v301
    %3367 = vmatpush.msra.mxu0 %v297
    %3368 = vmatpush.msra.mxu0 %v293
    %3369 = vmatpush.msra.mxu0 %v289
    %3370 = vmatmul.f32.gmra.mxu0 %v3066
    %v3371 = vpop.f32.mrf.mxu0
    %v3372 = vadd.f32 %v3352, %v3371
    %3373 = vdwg.mxu0
    %3374 = vmatpush.msra.mxu0 %v286
    %3375 = vmatpush.msra.mxu0 %v282
    %3376 = vmatpush.msra.mxu0 %v278
    %3377 = vmatpush.msra.mxu0 %v274
    %3378 = vmatpush.msra.mxu0 %v270
    %3379 = vmatpush.msra.mxu0 %v266
    %3380 = vmatpush.msra.mxu0 %v262
    %3381 = vmatpush.msra.mxu0 %v258
    %3382 = vmatpush.msra.mxu0 %v254
    %3383 = vmatpush.msra.mxu0 %v250
    %3384 = vmatpush.msra.mxu0 %v246
    %3385 = vmatpush.msra.mxu0 %v242
    %3386 = vmatpush.msra.mxu0 %v238
    %3387 = vmatpush.msra.mxu0 %v234
    %3388 = vmatpush.msra.mxu0 %v230
    %3389 = vmatpush.msra.mxu0 %v226
    %3390 = vmatmul.f32.gmra.mxu0 %v3293
    %v3391 = vpop.f32.mrf.mxu0
    %v3392 = vadd.f32 %v589, %v3391
    %3393 = vdwg.mxu0
    %3394 = vmatpush.msra.mxu0 %v350
    %3395 = vmatpush.msra.mxu0 %v346
    %3396 = vmatpush.msra.mxu0 %v342
    %3397 = vmatpush.msra.mxu0 %v338
    %3398 = vmatpush.msra.mxu0 %v334
    %3399 = vmatpush.msra.mxu0 %v330
    %3400 = vmatpush.msra.mxu0 %v326
    %3401 = vmatpush.msra.mxu0 %v322
    %3402 = vmatpush.msra.mxu0 %v318
    %3403 = vmatpush.msra.mxu0 %v314
    %3404 = vmatpush.msra.mxu0 %v310
    %3405 = vmatpush.msra.mxu0 %v306
    %3406 = vmatpush.msra.mxu0 %v302
    %3407 = vmatpush.msra.mxu0 %v298
    %3408 = vmatpush.msra.mxu0 %v294
    %3409 = vmatpush.msra.mxu0 %v290
    %3410 = vmatmul.f32.gmra.mxu0 %v3066
    %v3411 = vpop.f32.mrf.mxu0
    %v3412 = vadd.f32 %v3392, %v3411
    %3413 = vdwg.mxu0
    %3414 = vmatpush.msra.mxu0 %v287
    %3415 = vmatpush.msra.mxu0 %v283
    %3416 = vmatpush.msra.mxu0 %v279
    %3417 = vmatpush.msra.mxu0 %v275
    %3418 = vmatpush.msra.mxu0 %v271
    %3419 = vmatpush.msra.mxu0 %v267
    %3420 = vmatpush.msra.mxu0 %v263
    %3421 = vmatpush.msra.mxu0 %v259
    %3422 = vmatpush.msra.mxu0 %v255
    %3423 = vmatpush.msra.mxu0 %v251
    %3424 = vmatpush.msra.mxu0 %v247
    %3425 = vmatpush.msra.mxu0 %v243
    %3426 = vmatpush.msra.mxu0 %v239
    %3427 = vmatpush.msra.mxu0 %v235
    %3428 = vmatpush.msra.mxu0 %v231
    %3429 = vmatpush.msra.mxu0 %v227
    %3430 = vmatmul.f32.gmra.mxu0 %v3293
    %v3431 = vpop.f32.mrf.mxu0
    %v3432 = vadd.f32 %v590, %v3431
    %3433 = vdwg.mxu0
    %3434 = vmatpush.msra.mxu0 %v351
    %3435 = vmatpush.msra.mxu0 %v347
    %3436 = vmatpush.msra.mxu0 %v343
    %3437 = vmatpush.msra.mxu0 %v339
    %3438 = vmatpush.msra.mxu0 %v335
    %3439 = vmatpush.msra.mxu0 %v331
    %3440 = vmatpush.msra.mxu0 %v327
    %3441 = vmatpush.msra.mxu0 %v323
    %3442 = vmatpush.msra.mxu0 %v319
    %3443 = vmatpush.msra.mxu0 %v315
    %3444 = vmatpush.msra.mxu0 %v311
    %3445 = vmatpush.msra.mxu0 %v307
    %3446 = vmatpush.msra.mxu0 %v303
    %3447 = vmatpush.msra.mxu0 %v299
    %3448 = vmatpush.msra.mxu0 %v295
    %3449 = vmatpush.msra.mxu0 %v291
    %3450 = vmatmul.f32.gmra.mxu0 %v3066
    %v3451 = vpop.f32.mrf.mxu0
    %v3452 = vadd.f32 %v3432, %v3451
    %3453 = vdwg.mxu0
    %v3454 = vxor.u32 %v3332, 2147483648
    %v3455 = vmul.f32 %v3454, 1.442695
    %v3456 = vpow.pop %v3455
    %v3457 = vadd.f32 %v3456, 1.0
    %v3458 = vrcp.pop %v3457
    %v3459 = vmul.f32 %v3457, %v3458
    %v3460 = vsub.f32 1.0, %v3459
    %v3461 = vmul.f32 %v3458, %v3460
    %v3462 = vadd.f32 %v3458, %v3461
    %vm3463 = vweird.f32 %v3457
    %vm3464 = vweird.f32 %v3458
    %vm3465 = vmor %vm3463, %vm3464
    %v3466 = vsel %vm3465, %v3458, %v3462
    %v3467 = vand.u32 2147483647, %v3457
    %vm3468 = vcmp.eq.f32.partialorder %v3467, 8.507059e+37
    %v3469 = vand.u32 %v3457, 2147483648
    %v3470 = vor.u32 1.1754944e-38, %v3469
    %v3471 = vsel %vm3468, %v3470, %v3466
    %v3472 = vmul.f32 1.0, %v3471
    %v3473 = vxor.u32 %v3372, 2147483648
    %v3474 = vmul.f32 %v3473, 1.442695
    %v3475 = vpow.pop %v3474
    %v3476 = vadd.f32 %v3475, 1.0
    %v3477 = vrcp.pop %v3476
    %v3478 = vmul.f32 %v3476, %v3477
    %v3479 = vsub.f32 1.0, %v3478
    %v3480 = vmul.f32 %v3477, %v3479
    %v3481 = vadd.f32 %v3477, %v3480
    %vm3482 = vweird.f32 %v3476
    %vm3483 = vweird.f32 %v3477
    %vm3484 = vmor %vm3482, %vm3483
    %v3485 = vsel %vm3484, %v3477, %v3481
    %v3486 = vand.u32 2147483647, %v3476
    %vm3487 = vcmp.eq.f32.partialorder %v3486, 8.507059e+37
    %v3488 = vand.u32 %v3476, 2147483648
    %v3489 = vor.u32 1.1754944e-38, %v3488
    %v3490 = vsel %vm3487, %v3489, %v3485
    %v3491 = vmul.f32 1.0, %v3490
    %v3492 = vtanh.pop %v3412
    %v3493 = vxor.u32 %v3452, 2147483648
    %v3494 = vmul.f32 %v3493, 1.442695
    %v3495 = vpow.pop %v3494
    %v3496 = vadd.f32 %v3495, 1.0
    %v3497 = vrcp.pop %v3496
    %v3498 = vmul.f32 %v3496, %v3497
    %v3499 = vsub.f32 1.0, %v3498
    %v3500 = vmul.f32 %v3497, %v3499
    %v3501 = vadd.f32 %v3497, %v3500
    %vm3502 = vweird.f32 %v3496
    %vm3503 = vweird.f32 %v3497
    %vm3504 = vmor %vm3502, %vm3503
    %v3505 = vsel %vm3504, %v3497, %v3501
    %v3506 = vand.u32 2147483647, %v3496
    %vm3507 = vcmp.eq.f32.partialorder %v3506, 8.507059e+37
    %v3508 = vand.u32 %v3496, 2147483648
    %v3509 = vor.u32 1.1754944e-38, %v3508
    %v3510 = vsel %vm3507, %v3509, %v3505
    %v3511 = vmul.f32 1.0, %v3510
    %v3512 = vmul.f32 %v3491, %v3064
    %v3513 = vmul.f32 %v3472, %v3492
    %v3514 = vadd.f32 %v3512, %v3513
    %v3515 = vtanh.pop %v3514
    %v3516 = vmul.f32 %v3511, %v3515
    %s3517 = scalar_lea.vmem [#allocation11], 48
    %3518 = vst [vmem:[%s3517] sm:$0xff] %v3516
    %s3519 = scalar_lea.vmem [#allocation2], 56
    %v3520 = vld [vmem:[%s3519] sm:$0xff]
    %3521 = vmatpush.msra.mxu0 %v155
    %3522 = vmatpush.msra.mxu0 %v151
    %3523 = vmatpush.msra.mxu0 %v147
    %3524 = vmatpush.msra.mxu0 %v143
    %3525 = vmatpush.msra.mxu0 %v139
    %3526 = vmatpush.msra.mxu0 %v135
    %3527 = vmatpush.msra.mxu0 %v131
    %3528 = vmatpush.msra.mxu0 %v127
    %3529 = vmatpush.msra.mxu0 %v123
    %3530 = vmatpush.msra.mxu0 %v119
    %3531 = vmatpush.msra.mxu0 %v115
    %3532 = vmatpush.msra.mxu0 %v111
    %3533 = vmatpush.msra.mxu0 %v107
    %3534 = vmatpush.msra.mxu0 %v103
    %3535 = vmatpush.msra.mxu0 %v99
    %3536 = vmatpush.msra.mxu0 %v95
    %3537 = vmatmul.f32.gmra.mxu0 %v3520
    %v3538 = vpop.f32.mrf.mxu0
    %v3539 = vadd.f32 %v355, %v3538
    %3540 = vdwg.mxu0
    %3541 = vmatpush.msra.mxu0 %v219
    %3542 = vmatpush.msra.mxu0 %v215
    %3543 = vmatpush.msra.mxu0 %v211
    %3544 = vmatpush.msra.mxu0 %v207
    %3545 = vmatpush.msra.mxu0 %v203
    %3546 = vmatpush.msra.mxu0 %v199
    %3547 = vmatpush.msra.mxu0 %v195
    %3548 = vmatpush.msra.mxu0 %v191
    %3549 = vmatpush.msra.mxu0 %v187
    %3550 = vmatpush.msra.mxu0 %v183
    %3551 = vmatpush.msra.mxu0 %v179
    %3552 = vmatpush.msra.mxu0 %v175
    %3553 = vmatpush.msra.mxu0 %v171
    %3554 = vmatpush.msra.mxu0 %v167
    %3555 = vmatpush.msra.mxu0 %v163
    %3556 = vmatpush.msra.mxu0 %v159
    %3557 = vmatmul.f32.gmra.mxu0 %v3293
    %v3558 = vpop.f32.mrf.mxu0
    %v3559 = vadd.f32 %v3539, %v3558
    %3560 = vdwg.mxu0
    %3561 = vmatpush.msra.mxu0 %v156
    %3562 = vmatpush.msra.mxu0 %v152
    %3563 = vmatpush.msra.mxu0 %v148
    %3564 = vmatpush.msra.mxu0 %v144
    %3565 = vmatpush.msra.mxu0 %v140
    %3566 = vmatpush.msra.mxu0 %v136
    %3567 = vmatpush.msra.mxu0 %v132
    %3568 = vmatpush.msra.mxu0 %v128
    %3569 = vmatpush.msra.mxu0 %v124
    %3570 = vmatpush.msra.mxu0 %v120
    %3571 = vmatpush.msra.mxu0 %v116
    %3572 = vmatpush.msra.mxu0 %v112
    %3573 = vmatpush.msra.mxu0 %v108
    %3574 = vmatpush.msra.mxu0 %v104
    %3575 = vmatpush.msra.mxu0 %v100
    %3576 = vmatpush.msra.mxu0 %v96
    %3577 = vmatmul.f32.gmra.mxu0 %v3520
    %v3578 = vpop.f32.mrf.mxu0
    %v3579 = vadd.f32 %v356, %v3578
    %3580 = vdwg.mxu0
    %3581 = vmatpush.msra.mxu0 %v220
    %3582 = vmatpush.msra.mxu0 %v216
    %3583 = vmatpush.msra.mxu0 %v212
    %3584 = vmatpush.msra.mxu0 %v208
    %3585 = vmatpush.msra.mxu0 %v204
    %3586 = vmatpush.msra.mxu0 %v200
    %3587 = vmatpush.msra.mxu0 %v196
    %3588 = vmatpush.msra.mxu0 %v192
    %3589 = vmatpush.msra.mxu0 %v188
    %3590 = vmatpush.msra.mxu0 %v184
    %3591 = vmatpush.msra.mxu0 %v180
    %3592 = vmatpush.msra.mxu0 %v176
    %3593 = vmatpush.msra.mxu0 %v172
    %3594 = vmatpush.msra.mxu0 %v168
    %3595 = vmatpush.msra.mxu0 %v164
    %3596 = vmatpush.msra.mxu0 %v160
    %3597 = vmatmul.f32.gmra.mxu0 %v3293
    %v3598 = vpop.f32.mrf.mxu0
    %v3599 = vadd.f32 %v3579, %v3598
    %3600 = vdwg.mxu0
    %3601 = vmatpush.msra.mxu0 %v157
    %3602 = vmatpush.msra.mxu0 %v153
    %3603 = vmatpush.msra.mxu0 %v149
    %3604 = vmatpush.msra.mxu0 %v145
    %3605 = vmatpush.msra.mxu0 %v141
    %3606 = vmatpush.msra.mxu0 %v137
    %3607 = vmatpush.msra.mxu0 %v133
    %3608 = vmatpush.msra.mxu0 %v129
    %3609 = vmatpush.msra.mxu0 %v125
    %3610 = vmatpush.msra.mxu0 %v121
    %3611 = vmatpush.msra.mxu0 %v117
    %3612 = vmatpush.msra.mxu0 %v113
    %3613 = vmatpush.msra.mxu0 %v109
    %3614 = vmatpush.msra.mxu0 %v105
    %3615 = vmatpush.msra.mxu0 %v101
    %3616 = vmatpush.msra.mxu0 %v97
    %3617 = vmatmul.f32.gmra.mxu0 %v3520
    %v3618 = vpop.f32.mrf.mxu0
    %v3619 = vadd.f32 %v357, %v3618
    %3620 = vdwg.mxu0
    %3621 = vmatpush.msra.mxu0 %v221
    %3622 = vmatpush.msra.mxu0 %v217
    %3623 = vmatpush.msra.mxu0 %v213
    %3624 = vmatpush.msra.mxu0 %v209
    %3625 = vmatpush.msra.mxu0 %v205
    %3626 = vmatpush.msra.mxu0 %v201
    %3627 = vmatpush.msra.mxu0 %v197
    %3628 = vmatpush.msra.mxu0 %v193
    %3629 = vmatpush.msra.mxu0 %v189
    %3630 = vmatpush.msra.mxu0 %v185
    %3631 = vmatpush.msra.mxu0 %v181
    %3632 = vmatpush.msra.mxu0 %v177
    %3633 = vmatpush.msra.mxu0 %v173
    %3634 = vmatpush.msra.mxu0 %v169
    %3635 = vmatpush.msra.mxu0 %v165
    %3636 = vmatpush.msra.mxu0 %v161
    %3637 = vmatmul.f32.gmra.mxu0 %v3293
    %v3638 = vpop.f32.mrf.mxu0
    %v3639 = vadd.f32 %v3619, %v3638
    %3640 = vdwg.mxu0
    %3641 = vmatpush.msra.mxu0 %v158
    %3642 = vmatpush.msra.mxu0 %v154
    %3643 = vmatpush.msra.mxu0 %v150
    %3644 = vmatpush.msra.mxu0 %v146
    %3645 = vmatpush.msra.mxu0 %v142
    %3646 = vmatpush.msra.mxu0 %v138
    %3647 = vmatpush.msra.mxu0 %v134
    %3648 = vmatpush.msra.mxu0 %v130
    %3649 = vmatpush.msra.mxu0 %v126
    %3650 = vmatpush.msra.mxu0 %v122
    %3651 = vmatpush.msra.mxu0 %v118
    %3652 = vmatpush.msra.mxu0 %v114
    %3653 = vmatpush.msra.mxu0 %v110
    %3654 = vmatpush.msra.mxu0 %v106
    %3655 = vmatpush.msra.mxu0 %v102
    %3656 = vmatpush.msra.mxu0 %v98
    %3657 = vmatmul.f32.gmra.mxu0 %v3520
    %v3658 = vpop.f32.mrf.mxu0
    %v3659 = vadd.f32 %v358, %v3658
    %3660 = vdwg.mxu0
    %3661 = vmatpush.msra.mxu0 %v222
    %3662 = vmatpush.msra.mxu0 %v218
    %3663 = vmatpush.msra.mxu0 %v214
    %3664 = vmatpush.msra.mxu0 %v210
    %3665 = vmatpush.msra.mxu0 %v206
    %3666 = vmatpush.msra.mxu0 %v202
    %3667 = vmatpush.msra.mxu0 %v198
    %3668 = vmatpush.msra.mxu0 %v194
    %3669 = vmatpush.msra.mxu0 %v190
    %3670 = vmatpush.msra.mxu0 %v186
    %3671 = vmatpush.msra.mxu0 %v182
    %3672 = vmatpush.msra.mxu0 %v178
    %3673 = vmatpush.msra.mxu0 %v174
    %3674 = vmatpush.msra.mxu0 %v170
    %3675 = vmatpush.msra.mxu0 %v166
    %3676 = vmatpush.msra.mxu0 %v162
    %3677 = vmatmul.f32.gmra.mxu0 %v3293
    %v3678 = vpop.f32.mrf.mxu0
    %v3679 = vadd.f32 %v3659, %v3678
    %3680 = vdwg.mxu0
    %v3681 = vxor.u32 %v3559, 2147483648
    %v3682 = vmul.f32 %v3681, 1.442695
    %v3683 = vpow.pop %v3682
    %v3684 = vadd.f32 %v3683, 1.0
    %v3685 = vrcp.pop %v3684
    %v3686 = vmul.f32 %v3684, %v3685
    %v3687 = vsub.f32 1.0, %v3686
    %v3688 = vmul.f32 %v3685, %v3687
    %v3689 = vadd.f32 %v3685, %v3688
    %vm3690 = vweird.f32 %v3684
    %vm3691 = vweird.f32 %v3685
    %vm3692 = vmor %vm3690, %vm3691
    %v3693 = vsel %vm3692, %v3685, %v3689
    %v3694 = vand.u32 2147483647, %v3684
    %vm3695 = vcmp.eq.f32.partialorder %v3694, 8.507059e+37
    %v3696 = vand.u32 %v3684, 2147483648
    %v3697 = vor.u32 1.1754944e-38, %v3696
    %v3698 = vsel %vm3695, %v3697, %v3693
    %v3699 = vmul.f32 1.0, %v3698
    %v3700 = vxor.u32 %v3599, 2147483648
    %v3701 = vmul.f32 %v3700, 1.442695
    %v3702 = vpow.pop %v3701
    %v3703 = vadd.f32 %v3702, 1.0
    %v3704 = vrcp.pop %v3703
    %v3705 = vmul.f32 %v3703, %v3704
    %v3706 = vsub.f32 1.0, %v3705
    %v3707 = vmul.f32 %v3704, %v3706
    %v3708 = vadd.f32 %v3704, %v3707
    %vm3709 = vweird.f32 %v3703
    %vm3710 = vweird.f32 %v3704
    %vm3711 = vmor %vm3709, %vm3710
    %v3712 = vsel %vm3711, %v3704, %v3708
    %v3713 = vand.u32 2147483647, %v3703
    %vm3714 = vcmp.eq.f32.partialorder %v3713, 8.507059e+37
    %v3715 = vand.u32 %v3703, 2147483648
    %v3716 = vor.u32 1.1754944e-38, %v3715
    %v3717 = vsel %vm3714, %v3716, %v3712
    %v3718 = vmul.f32 1.0, %v3717
    %v3719 = vtanh.pop %v3639
    %v3720 = vxor.u32 %v3679, 2147483648
    %v3721 = vmul.f32 %v3720, 1.442695
    %v3722 = vpow.pop %v3721
    %v3723 = vadd.f32 %v3722, 1.0
    %v3724 = vrcp.pop %v3723
    %v3725 = vmul.f32 %v3723, %v3724
    %v3726 = vsub.f32 1.0, %v3725
    %v3727 = vmul.f32 %v3724, %v3726
    %v3728 = vadd.f32 %v3724, %v3727
    %vm3729 = vweird.f32 %v3723
    %vm3730 = vweird.f32 %v3724
    %vm3731 = vmor %vm3729, %vm3730
    %v3732 = vsel %vm3731, %v3724, %v3728
    %v3733 = vand.u32 2147483647, %v3723
    %vm3734 = vcmp.eq.f32.partialorder %v3733, 8.507059e+37
    %v3735 = vand.u32 %v3723, 2147483648
    %v3736 = vor.u32 1.1754944e-38, %v3735
    %v3737 = vsel %vm3734, %v3736, %v3732
    %v3738 = vmul.f32 1.0, %v3737
    %v3739 = vmul.f32 %v3718, %v3291
    %v3740 = vmul.f32 %v3699, %v3719
    %v3741 = vadd.f32 %v3739, %v3740
    %v3742 = vtanh.pop %v3741
    %v3743 = vmul.f32 %v3738, %v3742
    %3744 = vmatpush.msra.mxu0 %v284
    %3745 = vmatpush.msra.mxu0 %v280
    %3746 = vmatpush.msra.mxu0 %v276
    %3747 = vmatpush.msra.mxu0 %v272
    %3748 = vmatpush.msra.mxu0 %v268
    %3749 = vmatpush.msra.mxu0 %v264
    %3750 = vmatpush.msra.mxu0 %v260
    %3751 = vmatpush.msra.mxu0 %v256
    %3752 = vmatpush.msra.mxu0 %v252
    %3753 = vmatpush.msra.mxu0 %v248
    %3754 = vmatpush.msra.mxu0 %v244
    %3755 = vmatpush.msra.mxu0 %v240
    %3756 = vmatpush.msra.mxu0 %v236
    %3757 = vmatpush.msra.mxu0 %v232
    %3758 = vmatpush.msra.mxu0 %v228
    %3759 = vmatpush.msra.mxu0 %v224
    %3760 = vmatmul.f32.gmra.mxu0 %v3743
    %v3761 = vpop.f32.mrf.mxu0
    %v3762 = vadd.f32 %v587, %v3761
    %3763 = vdwg.mxu0
    %3764 = vmatpush.msra.mxu0 %v348
    %3765 = vmatpush.msra.mxu0 %v344
    %3766 = vmatpush.msra.mxu0 %v340
    %3767 = vmatpush.msra.mxu0 %v336
    %3768 = vmatpush.msra.mxu0 %v332
    %3769 = vmatpush.msra.mxu0 %v328
    %3770 = vmatpush.msra.mxu0 %v324
    %3771 = vmatpush.msra.mxu0 %v320
    %3772 = vmatpush.msra.mxu0 %v316
    %3773 = vmatpush.msra.mxu0 %v312
    %3774 = vmatpush.msra.mxu0 %v308
    %3775 = vmatpush.msra.mxu0 %v304
    %3776 = vmatpush.msra.mxu0 %v300
    %3777 = vmatpush.msra.mxu0 %v296
    %3778 = vmatpush.msra.mxu0 %v292
    %3779 = vmatpush.msra.mxu0 %v288
    %3780 = vmatmul.f32.gmra.mxu0 %v3516
    %v3781 = vpop.f32.mrf.mxu0
    %v3782 = vadd.f32 %v3762, %v3781
    %3783 = vdwg.mxu0
    %3784 = vmatpush.msra.mxu0 %v285
    %3785 = vmatpush.msra.mxu0 %v281
    %3786 = vmatpush.msra.mxu0 %v277
    %3787 = vmatpush.msra.mxu0 %v273
    %3788 = vmatpush.msra.mxu0 %v269
    %3789 = vmatpush.msra.mxu0 %v265
    %3790 = vmatpush.msra.mxu0 %v261
    %3791 = vmatpush.msra.mxu0 %v257
    %3792 = vmatpush.msra.mxu0 %v253
    %3793 = vmatpush.msra.mxu0 %v249
    %3794 = vmatpush.msra.mxu0 %v245
    %3795 = vmatpush.msra.mxu0 %v241
    %3796 = vmatpush.msra.mxu0 %v237
    %3797 = vmatpush.msra.mxu0 %v233
    %3798 = vmatpush.msra.mxu0 %v229
    %3799 = vmatpush.msra.mxu0 %v225
    %3800 = vmatmul.f32.gmra.mxu0 %v3743
    %v3801 = vpop.f32.mrf.mxu0
    %v3802 = vadd.f32 %v588, %v3801
    %3803 = vdwg.mxu0
    %3804 = vmatpush.msra.mxu0 %v349
    %3805 = vmatpush.msra.mxu0 %v345
    %3806 = vmatpush.msra.mxu0 %v341
    %3807 = vmatpush.msra.mxu0 %v337
    %3808 = vmatpush.msra.mxu0 %v333
    %3809 = vmatpush.msra.mxu0 %v329
    %3810 = vmatpush.msra.mxu0 %v325
    %3811 = vmatpush.msra.mxu0 %v321
    %3812 = vmatpush.msra.mxu0 %v317
    %3813 = vmatpush.msra.mxu0 %v313
    %3814 = vmatpush.msra.mxu0 %v309
    %3815 = vmatpush.msra.mxu0 %v305
    %3816 = vmatpush.msra.mxu0 %v301
    %3817 = vmatpush.msra.mxu0 %v297
    %3818 = vmatpush.msra.mxu0 %v293
    %3819 = vmatpush.msra.mxu0 %v289
    %3820 = vmatmul.f32.gmra.mxu0 %v3516
    %v3821 = vpop.f32.mrf.mxu0
    %v3822 = vadd.f32 %v3802, %v3821
    %3823 = vdwg.mxu0
    %3824 = vmatpush.msra.mxu0 %v286
    %3825 = vmatpush.msra.mxu0 %v282
    %3826 = vmatpush.msra.mxu0 %v278
    %3827 = vmatpush.msra.mxu0 %v274
    %3828 = vmatpush.msra.mxu0 %v270
    %3829 = vmatpush.msra.mxu0 %v266
    %3830 = vmatpush.msra.mxu0 %v262
    %3831 = vmatpush.msra.mxu0 %v258
    %3832 = vmatpush.msra.mxu0 %v254
    %3833 = vmatpush.msra.mxu0 %v250
    %3834 = vmatpush.msra.mxu0 %v246
    %3835 = vmatpush.msra.mxu0 %v242
    %3836 = vmatpush.msra.mxu0 %v238
    %3837 = vmatpush.msra.mxu0 %v234
    %3838 = vmatpush.msra.mxu0 %v230
    %3839 = vmatpush.msra.mxu0 %v226
    %3840 = vmatmul.f32.gmra.mxu0 %v3743
    %v3841 = vpop.f32.mrf.mxu0
    %v3842 = vadd.f32 %v589, %v3841
    %3843 = vdwg.mxu0
    %3844 = vmatpush.msra.mxu0 %v350
    %3845 = vmatpush.msra.mxu0 %v346
    %3846 = vmatpush.msra.mxu0 %v342
    %3847 = vmatpush.msra.mxu0 %v338
    %3848 = vmatpush.msra.mxu0 %v334
    %3849 = vmatpush.msra.mxu0 %v330
    %3850 = vmatpush.msra.mxu0 %v326
    %3851 = vmatpush.msra.mxu0 %v322
    %3852 = vmatpush.msra.mxu0 %v318
    %3853 = vmatpush.msra.mxu0 %v314
    %3854 = vmatpush.msra.mxu0 %v310
    %3855 = vmatpush.msra.mxu0 %v306
    %3856 = vmatpush.msra.mxu0 %v302
    %3857 = vmatpush.msra.mxu0 %v298
    %3858 = vmatpush.msra.mxu0 %v294
    %3859 = vmatpush.msra.mxu0 %v290
    %3860 = vmatmul.f32.gmra.mxu0 %v3516
    %v3861 = vpop.f32.mrf.mxu0
    %v3862 = vadd.f32 %v3842, %v3861
    %3863 = vdwg.mxu0
    %3864 = vmatpush.msra.mxu0 %v287
    %3865 = vmatpush.msra.mxu0 %v283
    %3866 = vmatpush.msra.mxu0 %v279
    %3867 = vmatpush.msra.mxu0 %v275
    %3868 = vmatpush.msra.mxu0 %v271
    %3869 = vmatpush.msra.mxu0 %v267
    %3870 = vmatpush.msra.mxu0 %v263
    %3871 = vmatpush.msra.mxu0 %v259
    %3872 = vmatpush.msra.mxu0 %v255
    %3873 = vmatpush.msra.mxu0 %v251
    %3874 = vmatpush.msra.mxu0 %v247
    %3875 = vmatpush.msra.mxu0 %v243
    %3876 = vmatpush.msra.mxu0 %v239
    %3877 = vmatpush.msra.mxu0 %v235
    %3878 = vmatpush.msra.mxu0 %v231
    %3879 = vmatpush.msra.mxu0 %v227
    %3880 = vmatmul.f32.gmra.mxu0 %v3743
    %v3881 = vpop.f32.mrf.mxu0
    %v3882 = vadd.f32 %v590, %v3881
    %3883 = vdwg.mxu0
    %3884 = vmatpush.msra.mxu0 %v351
    %3885 = vmatpush.msra.mxu0 %v347
    %3886 = vmatpush.msra.mxu0 %v343
    %3887 = vmatpush.msra.mxu0 %v339
    %3888 = vmatpush.msra.mxu0 %v335
    %3889 = vmatpush.msra.mxu0 %v331
    %3890 = vmatpush.msra.mxu0 %v327
    %3891 = vmatpush.msra.mxu0 %v323
    %3892 = vmatpush.msra.mxu0 %v319
    %3893 = vmatpush.msra.mxu0 %v315
    %3894 = vmatpush.msra.mxu0 %v311
    %3895 = vmatpush.msra.mxu0 %v307
    %3896 = vmatpush.msra.mxu0 %v303
    %3897 = vmatpush.msra.mxu0 %v299
    %3898 = vmatpush.msra.mxu0 %v295
    %3899 = vmatpush.msra.mxu0 %v291
    %3900 = vmatmul.f32.gmra.mxu0 %v3516
    %v3901 = vpop.f32.mrf.mxu0
    %v3902 = vadd.f32 %v3882, %v3901
    %3903 = vdwg.mxu0
    %v3904 = vxor.u32 %v3782, 2147483648
    %v3905 = vmul.f32 %v3904, 1.442695
    %v3906 = vpow.pop %v3905
    %v3907 = vadd.f32 %v3906, 1.0
    %v3908 = vrcp.pop %v3907
    %v3909 = vmul.f32 %v3907, %v3908
    %v3910 = vsub.f32 1.0, %v3909
    %v3911 = vmul.f32 %v3908, %v3910
    %v3912 = vadd.f32 %v3908, %v3911
    %vm3913 = vweird.f32 %v3907
    %vm3914 = vweird.f32 %v3908
    %vm3915 = vmor %vm3913, %vm3914
    %v3916 = vsel %vm3915, %v3908, %v3912
    %v3917 = vand.u32 2147483647, %v3907
    %vm3918 = vcmp.eq.f32.partialorder %v3917, 8.507059e+37
    %v3919 = vand.u32 %v3907, 2147483648
    %v3920 = vor.u32 1.1754944e-38, %v3919
    %v3921 = vsel %vm3918, %v3920, %v3916
    %v3922 = vmul.f32 1.0, %v3921
    %v3923 = vxor.u32 %v3822, 2147483648
    %v3924 = vmul.f32 %v3923, 1.442695
    %v3925 = vpow.pop %v3924
    %v3926 = vadd.f32 %v3925, 1.0
    %v3927 = vrcp.pop %v3926
    %v3928 = vmul.f32 %v3926, %v3927
    %v3929 = vsub.f32 1.0, %v3928
    %v3930 = vmul.f32 %v3927, %v3929
    %v3931 = vadd.f32 %v3927, %v3930
    %vm3932 = vweird.f32 %v3926
    %vm3933 = vweird.f32 %v3927
    %vm3934 = vmor %vm3932, %vm3933
    %v3935 = vsel %vm3934, %v3927, %v3931
    %v3936 = vand.u32 2147483647, %v3926
    %vm3937 = vcmp.eq.f32.partialorder %v3936, 8.507059e+37
    %v3938 = vand.u32 %v3926, 2147483648
    %v3939 = vor.u32 1.1754944e-38, %v3938
    %v3940 = vsel %vm3937, %v3939, %v3935
    %v3941 = vmul.f32 1.0, %v3940
    %v3942 = vtanh.pop %v3862
    %v3943 = vxor.u32 %v3902, 2147483648
    %v3944 = vmul.f32 %v3943, 1.442695
    %v3945 = vpow.pop %v3944
    %v3946 = vadd.f32 %v3945, 1.0
    %v3947 = vrcp.pop %v3946
    %v3948 = vmul.f32 %v3946, %v3947
    %v3949 = vsub.f32 1.0, %v3948
    %v3950 = vmul.f32 %v3947, %v3949
    %v3951 = vadd.f32 %v3947, %v3950
    %vm3952 = vweird.f32 %v3946
    %vm3953 = vweird.f32 %v3947
    %vm3954 = vmor %vm3952, %vm3953
    %v3955 = vsel %vm3954, %v3947, %v3951
    %v3956 = vand.u32 2147483647, %v3946
    %vm3957 = vcmp.eq.f32.partialorder %v3956, 8.507059e+37
    %v3958 = vand.u32 %v3946, 2147483648
    %v3959 = vor.u32 1.1754944e-38, %v3958
    %v3960 = vsel %vm3957, %v3959, %v3955
    %v3961 = vmul.f32 1.0, %v3960
    %v3962 = vmul.f32 %v3941, %v3514
    %v3963 = vmul.f32 %v3922, %v3942
    %v3964 = vadd.f32 %v3962, %v3963
    %v3965 = vtanh.pop %v3964
    %v3966 = vmul.f32 %v3961, %v3965
    %s3967 = scalar_lea.vmem [#allocation11], 56
    %3968 = vst [vmem:[%s3967] sm:$0xff] %v3966
    // Predicated region
    $region42: #{tpu_custom_call.1} parent=1 // pred_check
      _
    $region43: #{tpu_custom_call.1} parent=1 // pred_check_branch
      %3970 = sbr.rel (0) target = $region45
    $region44: #{tpu_custom_call.1} parent=1 // pred_region
      %3972 = vsyncadd [#allocation4], 0
      %s3973 = sshll.u32 [#allocation11], 4
      %s3974 = int_to_ptr.vmem [resolvable:$true] %s3973
      %s3975 = sshll.u32 %s5, 4
      %s3976 = int_to_ptr.hbm [resolvable:$true] %s3975
      %3981 = dma.vmem_to_hbm [thread:$0]  %s3974, 1024, %s3976, [#allocation4], 128, 128, 8
    $region45: #{tpu_custom_call.1} parent=1 // pred_fallthru
      _
    // Predicated region
    $region46: #{tpu_custom_call.1} parent=1 // pred_check
      _
    $region47: #{tpu_custom_call.1} parent=1 // pred_check_branch
      %3983 = sbr.rel (0) target = $region49
    $region48: #{tpu_custom_call.1} parent=1 // pred_region
      %3985 = dma.done [#allocation4], 1024
    $region49: #{tpu_custom_call.1} parent=1 // pred_fallthru
      _
    %3986 = vsyncpa [#allocation3], 1
    %3987 = vsyncpa [#allocation6], 1
    %3988 = vsyncpa [#allocation9], 1
    %3989 = vsyncpa [#allocation4], 1

</llo_original>
